<compile_context>
chip_gen: v7x
topology: tpu7x:2x2x1
jax: 0.10.0
libtpu: 0.0.40
codegen_flags: <defaults>
</compile_context>

<pallas_src>
import numpy as np
import jax
import jax.numpy as jnp
from jax.experimental import pallas as pl
from jax.experimental.pallas import tpu as pltpu

# ---------------- config (small synthetic "bert") ----------------
VOCAB = 100
MAX_POS = 64
HIDDEN = 32          # embedding_dim returned by the module
NUM_HEADS = 2
HEAD_DIM = HIDDEN // NUM_HEADS
FFN = 64
NUM_LAYERS = 2
EPS = 1e-12

N_LAYER_TENSORS = 12  # wqkv, bqkv, wo, bo, ln1_g, ln1_b, w1, b1, w2, b2, ln2_g, ln2_b


def _layernorm(x, g, b):
    mean = jnp.mean(x, axis=-1, keepdims=True)
    var = jnp.mean((x - mean) ** 2, axis=-1, keepdims=True)
    return (x - mean) * jax.lax.rsqrt(var + EPS) * g + b


# ---------------- fused Pallas kernel ----------------
def make_encoder_kernel(B, S):
    n_in = 4 + N_LAYER_TENSORS * NUM_LAYERS

    def encoder_kernel(*refs):
        # inputs: x_flat (B*S, H), add_mask (B, S), emb LN gamma/beta,
        #         then 12 tensors per layer; output: (B, H) CLS embeddings;
        #         scratch: (B*S, H) per-head context buffer.
        x_ref, mask_ref, emb_g_ref, emb_b_ref = refs[:4]
        layer_refs = refs[4:n_in]
        o_ref = refs[n_in]
        ctx_ref = refs[n_in + 1]

        # embedding LayerNorm over the whole flattened batch (B*S rows)
        x = _layernorm(x_ref[...], emb_g_ref[...], emb_b_ref[...])

        for li in range(NUM_LAYERS):                     # static unroll (NUM_LAYERS=2)
            lw = layer_refs[li * N_LAYER_TENSORS:(li + 1) * N_LAYER_TENSORS]
            (wqkv, bqkv, wo, bo, g1, b1, w1, bb1, w2, bb2, g2, b2) = lw

            # fused QKV projection: one (B*S, H) x (H, 3H) MXU push
            qkv = jnp.dot(x, wqkv[...], preferred_element_type=jnp.float32) + bqkv[...]

            # per-batch, per-head attention (static unroll; B=2, heads=2)
            for bb in range(B):
                base = bb * S
                add_mask_b = mask_ref[bb:bb + 1, :]      # (1, S) additive mask
                for h in range(NUM_HEADS):
                    c0 = h * HEAD_DIM
                    qh = qkv[base:base + S, c0:c0 + HEAD_DIM]
                    kh = qkv[base:base + S, HIDDEN + c0:HIDDEN + c0 + HEAD_DIM]
                    vh = qkv[base:base + S, 2 * HIDDEN + c0:2 * HIDDEN + c0 + HEAD_DIM]
                    # 1/sqrt(HEAD_DIM) is folded into wq/bq at parameter-prep time
                    s = jnp.dot(qh, kh.T, preferred_element_type=jnp.float32) + add_mask_b
                    s = s - jnp.max(s, axis=-1, keepdims=True)
                    p = jnp.exp(s)
                    p = p * pl.reciprocal(jnp.sum(p, axis=-1, keepdims=True), approx=True)
                    # write head context at static column offsets (no concatenate)
                    ctx_ref[base:base + S, c0:c0 + HEAD_DIM] = jnp.dot(
                        p, vh, preferred_element_type=jnp.float32)

            attn = jnp.dot(ctx_ref[...], wo[...], preferred_element_type=jnp.float32) + bo[...]
            h1 = _layernorm(x + attn, g1[...], b1[...])

            f = jnp.dot(h1, w1[...], preferred_element_type=jnp.float32) + bb1[...]
            # TODO(synk): HF BERT uses exact erf GELU; tanh approximation kept
            # here (matches the reference below) for guaranteed Mosaic lowering.
            f = jax.nn.gelu(f)
            f = jnp.dot(f, w2[...], preferred_element_type=jnp.float32) + bb2[...]

            x = _layernorm(h1 + f, g2[...], b2[...])

        # CLS extraction: only row 0 of each batch element leaves the kernel.
        for bb in range(B):
            o_ref[bb:bb + 1, :] = x[bb * S:bb * S + 1, :]

    return encoder_kernel


def pallas_encoder(x_flat, add_mask, flat_weights, B, S):
    return pl.pallas_call(
        make_encoder_kernel(B, S),
        out_shape=jax.ShapeDtypeStruct((B, HIDDEN), jnp.float32),
        scratch_shapes=[pltpu.VMEM((B * S, HIDDEN), jnp.float32)],  # head context
    )(x_flat, add_mask, *flat_weights)


# ---------------- parameter init (deterministic, synthetic) ----------------
def init_params(key):
    def nrm(k, shape, scale=0.02):
        return scale * jax.random.normal(k, shape, dtype=jnp.float32)

    keys = jax.random.split(key, 4 + NUM_LAYERS)
    params = {
        "word_emb": nrm(keys[0], (VOCAB, HIDDEN)),
        "pos_emb": nrm(keys[1], (MAX_POS, HIDDEN)),
        "type_emb": nrm(keys[2], (2, HIDDEN)),
        "emb_ln_g": jnp.ones((1, HIDDEN), jnp.float32),
        "emb_ln_b": jnp.zeros((1, HIDDEN), jnp.float32),
        "layers": [],
    }
    for li in range(NUM_LAYERS):
        lk = jax.random.split(keys[4 + li], 6)
        params["layers"].append({
            "wq": nrm(lk[0], (HIDDEN, HIDDEN)), "bq": jnp.zeros((1, HIDDEN), jnp.float32),
            "wk": nrm(lk[1], (HIDDEN, HIDDEN)), "bk": jnp.zeros((1, HIDDEN), jnp.float32),
            "wv": nrm(lk[2], (HIDDEN, HIDDEN)), "bv": jnp.zeros((1, HIDDEN), jnp.float32),
            "wo": nrm(lk[3], (HIDDEN, HIDDEN)), "bo": jnp.zeros((1, HIDDEN), jnp.float32),
            "ln1_g": jnp.ones((1, HIDDEN), jnp.float32), "ln1_b": jnp.zeros((1, HIDDEN), jnp.float32),
            "w1": nrm(lk[4], (HIDDEN, FFN)), "b1": jnp.zeros((1, FFN), jnp.float32),
            "w2": nrm(lk[5], (FFN, HIDDEN)), "b2": jnp.zeros((1, HIDDEN), jnp.float32),
            "ln2_g": jnp.ones((1, HIDDEN), jnp.float32), "ln2_b": jnp.zeros((1, HIDDEN), jnp.float32),
        })
    return params


def prepare_pallas_params(params):
    """One-time parameter prep: fuse QKV and fold the attention scale into wq/bq."""
    scale = 1.0 / np.sqrt(HEAD_DIM)
    flat = [params["emb_ln_g"], params["emb_ln_b"]]
    for lp in params["layers"]:
        wqkv = jnp.concatenate([lp["wq"] * scale, lp["wk"], lp["wv"]], axis=1)   # (H, 3H)
        bqkv = jnp.concatenate([lp["bq"] * scale, lp["bk"], lp["bv"]], axis=1)   # (1, 3H)
        flat += [wqkv, bqkv, lp["wo"], lp["bo"], lp["ln1_g"], lp["ln1_b"],
                 lp["w1"], lp["b1"], lp["w2"], lp["b2"], lp["ln2_g"], lp["ln2_b"]]
    return {
        "word_emb": params["word_emb"],
        "pos_emb": params["pos_emb"],
        "type_emb": params["type_emb"],
        "flat_weights": flat,
    }


# ---------------- forward (glue in JAX, encoder fused in one Pallas call) ----------------
def llm_based_embedding_forward(pparams, text_inputs):
    input_ids = text_inputs["input_ids"]            # (B, S) int32
    attention_mask = text_inputs["attention_mask"]  # (B, S) int32 {0,1}
    token_type_ids = text_inputs["token_type_ids"]  # (B, S) int32 {0,1}
    B, S = input_ids.shape

    # TODO(synk): embedding table gather stays in XLA glue (data-dependent row
    # gather); everything downstream runs inside the fused Pallas kernel.
    emb = (jnp.take(pparams["word_emb"], input_ids, axis=0)
           + pparams["pos_emb"][None, :S, :]
           + jnp.take(pparams["type_emb"], token_type_ids, axis=0)).astype(jnp.float32)

    add_mask = (1.0 - attention_mask.astype(jnp.float32)) * -1e9   # (B, S) additive

    cls = pallas_encoder(emb.reshape(B * S, HIDDEN), add_mask,
                         pparams["flat_weights"], B, S)
    return cls                                      # last_hidden_state[:, 0, :]


# ---------------- pure-JAX reference for verification ----------------
def reference_forward(params, text_inputs):
    def ln(x, g, b):
        m = jnp.mean(x, -1, keepdims=True)
        v = jnp.mean((x - m) ** 2, -1, keepdims=True)
        return (x - m) * jax.lax.rsqrt(v + EPS) * g + b

    input_ids = text_inputs["input_ids"]
    attention_mask = text_inputs["attention_mask"]
    token_type_ids = text_inputs["token_type_ids"]
    B, S = input_ids.shape
    x = (jnp.take(params["word_emb"], input_ids, axis=0)
         + params["pos_emb"][None, :S, :]
         + jnp.take(params["type_emb"], token_type_ids, axis=0))
    x = ln(x, params["emb_ln_g"], params["emb_ln_b"])
    add_mask = (1.0 - attention_mask.astype(jnp.float32))[:, None, None, :] * -1e9
    for lp in params["layers"]:
        q = x @ lp["wq"] + lp["bq"]
        k = x @ lp["wk"] + lp["bk"]
        v = x @ lp["wv"] + lp["bv"]
        q = q.reshape(B, S, NUM_HEADS, HEAD_DIM).transpose(0, 2, 1, 3)
        k = k.reshape(B, S, NUM_HEADS, HEAD_DIM).transpose(0, 2, 1, 3)
        v = v.reshape(B, S, NUM_HEADS, HEAD_DIM).transpose(0, 2, 1, 3)
        s = jnp.einsum("bhqd,bhkd->bhqk", q, k) / np.sqrt(HEAD_DIM) + add_mask
        p = jax.nn.softmax(s, axis=-1)
        ctx = jnp.einsum("bhqk,bhkd->bhqd", p, v).transpose(0, 2, 1, 3).reshape(B, S, HIDDEN)
        attn_out = ctx @ lp["wo"] + lp["bo"]
        h1 = ln(x + attn_out, lp["ln1_g"], lp["ln1_b"])
        f = jax.nn.gelu(h1 @ lp["w1"] + lp["b1"]) @ lp["w2"] + lp["b2"]
        x = ln(h1 + f, lp["ln2_g"], lp["ln2_b"])
    return x[:, 0, :]


if __name__ == "__main__":
    key = jax.random.PRNGKey(0)
    kp, ki, km = jax.random.split(key, 3)

    B, S = 2, 8
    params = init_params(kp)
    pallas_params = prepare_pallas_params(params)   # one-time prep (QKV fuse, scale fold)

    input_ids = jax.random.randint(ki, (B, S), 0, VOCAB, dtype=jnp.int32)
    attention_mask = jnp.ones((B, S), dtype=jnp.int32).at[1, 6:].set(0)  # some padding
    token_type_ids = jnp.zeros((B, S), dtype=jnp.int32)
    text_inputs = {"input_ids": input_ids,
                   "attention_mask": attention_mask,
                   "token_type_ids": token_type_ids}

    out = llm_based_embedding_forward(pallas_params, text_inputs)
    out = jax.block_until_ready(out)
    assert out.shape == (B, HIDDEN), out.shape

    ref = jax.block_until_ready(reference_forward(params, text_inputs))
    # approx-reciprocal softmax normalization => slightly looser tolerance than exact divide
    np.testing.assert_allclose(np.asarray(out), np.asarray(ref), rtol=2e-3, atol=2e-3)

    print("KERNEL_OK")
</pallas_src>

<mosaic_0001>
module attributes {stable_mosaic.version = 11 : i64} {
  func.func @encoder_kernel(%arg0: memref<16x32xf32, #tpu.memory_space<vmem>>, %arg1: memref<2x8xf32, #tpu.memory_space<vmem>>, %arg2: memref<1x32xf32, #tpu.memory_space<vmem>>, %arg3: memref<1x32xf32, #tpu.memory_space<vmem>>, %arg4: memref<32x96xf32, #tpu.memory_space<vmem>>, %arg5: memref<1x96xf32, #tpu.memory_space<vmem>>, %arg6: memref<32x32xf32, #tpu.memory_space<vmem>>, %arg7: memref<1x32xf32, #tpu.memory_space<vmem>>, %arg8: memref<1x32xf32, #tpu.memory_space<vmem>>, %arg9: memref<1x32xf32, #tpu.memory_space<vmem>>, %arg10: memref<32x64xf32, #tpu.memory_space<vmem>>, %arg11: memref<1x64xf32, #tpu.memory_space<vmem>>, %arg12: memref<64x32xf32, #tpu.memory_space<vmem>>, %arg13: memref<1x32xf32, #tpu.memory_space<vmem>>, %arg14: memref<1x32xf32, #tpu.memory_space<vmem>>, %arg15: memref<1x32xf32, #tpu.memory_space<vmem>>, %arg16: memref<32x96xf32, #tpu.memory_space<vmem>>, %arg17: memref<1x96xf32, #tpu.memory_space<vmem>>, %arg18: memref<32x32xf32, #tpu.memory_space<vmem>>, %arg19: memref<1x32xf32, #tpu.memory_space<vmem>>, %arg20: memref<1x32xf32, #tpu.memory_space<vmem>>, %arg21: memref<1x32xf32, #tpu.memory_space<vmem>>, %arg22: memref<32x64xf32, #tpu.memory_space<vmem>>, %arg23: memref<1x64xf32, #tpu.memory_space<vmem>>, %arg24: memref<64x32xf32, #tpu.memory_space<vmem>>, %arg25: memref<1x32xf32, #tpu.memory_space<vmem>>, %arg26: memref<1x32xf32, #tpu.memory_space<vmem>>, %arg27: memref<1x32xf32, #tpu.memory_space<vmem>>, %arg28: memref<2x32xf32, #tpu.memory_space<vmem>>, %arg29: memref<16x32xf32, #tpu.memory_space<vmem>>) attributes {dimension_semantics = [], scalar_prefetch = 0 : i64, scratch_operands = 1 : i64, tpu.core_type = #tpu.core_type<tc>} {
    %c0 = arith.constant 0 : index
    %c0_0 = arith.constant 0 : index
    %0 = vector.load %arg0[%c0, %c0_0] : memref<16x32xf32, #tpu.memory_space<vmem>>, vector<16x32xf32>
    %c0_1 = arith.constant 0 : index
    %c0_2 = arith.constant 0 : index
    %1 = vector.load %arg2[%c0_1, %c0_2] : memref<1x32xf32, #tpu.memory_space<vmem>>, vector<1x32xf32>
    %c0_3 = arith.constant 0 : index
    %c0_4 = arith.constant 0 : index
    %2 = vector.load %arg3[%c0_3, %c0_4] : memref<1x32xf32, #tpu.memory_space<vmem>>, vector<1x32xf32>
    %cst = arith.constant dense<0.000000e+00> : vector<16xf32>
    %3 = vector.multi_reduction <add>, %0, %cst [1] : vector<16x32xf32> to vector<16xf32>
    %4 = vector.shape_cast %3 : vector<16xf32> to vector<16x1xf32>
    %cst_5 = arith.constant 3.200000e+01 : f32
    %5 = vector.broadcast %cst_5 : f32 to vector<16x1xf32>
    %6 = arith.divf %4, %5 : vector<16x1xf32>
    %7 = vector.broadcast %6 : vector<16x1xf32> to vector<16x32xf32>
    %8 = arith.subf %0, %7 : vector<16x32xf32>
    %9 = arith.mulf %8, %8 : vector<16x32xf32>
    %cst_6 = arith.constant dense<0.000000e+00> : vector<16xf32>
    %10 = vector.multi_reduction <add>, %9, %cst_6 [1] : vector<16x32xf32> to vector<16xf32>
    %11 = vector.shape_cast %10 : vector<16xf32> to vector<16x1xf32>
    %cst_7 = arith.constant 3.200000e+01 : f32
    %12 = vector.broadcast %cst_7 : f32 to vector<16x1xf32>
    %13 = arith.divf %11, %12 : vector<16x1xf32>
    %14 = vector.broadcast %6 : vector<16x1xf32> to vector<16x32xf32>
    %15 = arith.subf %0, %14 : vector<16x32xf32>
    %cst_8 = arith.constant 9.99999996E-13 : f32
    %16 = vector.broadcast %cst_8 : f32 to vector<16x1xf32>
    %17 = arith.addf %13, %16 : vector<16x1xf32>
    %18 = math.rsqrt %17 : vector<16x1xf32>
    %19 = vector.broadcast %18 : vector<16x1xf32> to vector<16x32xf32>
    %20 = arith.mulf %15, %19 : vector<16x32xf32>
    %21 = vector.broadcast %1 : vector<1x32xf32> to vector<16x32xf32>
    %22 = arith.mulf %20, %21 : vector<16x32xf32>
    %23 = vector.broadcast %2 : vector<1x32xf32> to vector<16x32xf32>
    %24 = arith.addf %22, %23 : vector<16x32xf32>
    %c0_9 = arith.constant 0 : index
    %c0_10 = arith.constant 0 : index
    %25 = vector.load %arg4[%c0_9, %c0_10] : memref<32x96xf32, #tpu.memory_space<vmem>>, vector<32x96xf32>
    %cst_11 = arith.constant dense<0.000000e+00> : vector<16x96xf32>
    %26 = tpu.matmul %24, %25, %cst_11 {dimension_numbers = #tpu.dot_dimension_numbers<[1], [0], [0], [1], [0, 0, 1, 1], [], []>} : vector<16x32xf32>, vector<32x96xf32>, vector<16x96xf32> -> vector<16x96xf32>
    %c0_12 = arith.constant 0 : index
    %c0_13 = arith.constant 0 : index
    %27 = vector.load %arg5[%c0_12, %c0_13] : memref<1x96xf32, #tpu.memory_space<vmem>>, vector<1x96xf32>
    %28 = vector.broadcast %27 : vector<1x96xf32> to vector<16x96xf32>
    %29 = arith.addf %26, %28 : vector<16x96xf32>
    %c0_14 = arith.constant 0 : index
    %c0_15 = arith.constant 0 : index
    %30 = vector.load %arg1[%c0_14, %c0_15] : memref<2x8xf32, #tpu.memory_space<vmem>>, vector<1x8xf32>
    %31 = vector.extract_strided_slice %29 {offsets = [0, 0], sizes = [8, 16], strides = [1, 1]} : vector<16x96xf32> to vector<8x16xf32>
    %32 = vector.extract_strided_slice %29 {offsets = [0, 32], sizes = [8, 16], strides = [1, 1]} : vector<16x96xf32> to vector<8x16xf32>
    %33 = vector.extract_strided_slice %29 {offsets = [0, 64], sizes = [8, 16], strides = [1, 1]} : vector<16x96xf32> to vector<8x16xf32>
    %34 = tpu.transpose %32, [1, 0] : vector<8x16xf32> -> vector<16x8xf32>
    %cst_16 = arith.constant dense<0.000000e+00> : vector<8x8xf32>
    %35 = tpu.matmul %31, %34, %cst_16 {dimension_numbers = #tpu.dot_dimension_numbers<[1], [0], [0], [1], [0, 0, 1, 1], [], []>} : vector<8x16xf32>, vector<16x8xf32>, vector<8x8xf32> -> vector<8x8xf32>
    %36 = vector.broadcast %30 : vector<1x8xf32> to vector<8x8xf32>
    %37 = arith.addf %35, %36 : vector<8x8xf32>
    %cst_17 = arith.constant dense<0xFF800000> : vector<8xf32>
    %38 = vector.multi_reduction <maximumf>, %37, %cst_17 [1] : vector<8x8xf32> to vector<8xf32>
    %39 = vector.shape_cast %38 : vector<8xf32> to vector<8x1xf32>
    %40 = vector.broadcast %39 : vector<8x1xf32> to vector<8x8xf32>
    %41 = arith.subf %37, %40 : vector<8x8xf32>
    %42 = math.exp %41 : vector<8x8xf32>
    %cst_18 = arith.constant dense<0.000000e+00> : vector<8xf32>
    %43 = vector.multi_reduction <add>, %42, %cst_18 [1] : vector<8x8xf32> to vector<8xf32>
    %44 = vector.shape_cast %43 : vector<8xf32> to vector<8x1xf32>
    %45 = tpu.reciprocal %44 {approx = true} : vector<8x1xf32> -> vector<8x1xf32>
    %46 = vector.broadcast %45 : vector<8x1xf32> to vector<8x8xf32>
    %47 = arith.mulf %42, %46 : vector<8x8xf32>
    %cst_19 = arith.constant dense<0.000000e+00> : vector<8x16xf32>
    %48 = tpu.matmul %47, %33, %cst_19 {dimension_numbers = #tpu.dot_dimension_numbers<[1], [0], [0], [1], [0, 0, 1, 1], [], []>} : vector<8x8xf32>, vector<8x16xf32>, vector<8x16xf32> -> vector<8x16xf32>
    %c0_20 = arith.constant 0 : index
    %c0_21 = arith.constant 0 : index
    %49 = vector.load %arg29[%c0_20, %c0_21] : memref<16x32xf32, #tpu.memory_space<vmem>>, vector<8x16xf32>
    tpu.vector_store %arg29[%c0_20, %c0_21], %48 {strides = array<i32>} : memref<16x32xf32, #tpu.memory_space<vmem>>, vector<8x16xf32>,
    %50 = vector.extract_strided_slice %29 {offsets = [0, 16], sizes = [8, 16], strides = [1, 1]} : vector<16x96xf32> to vector<8x16xf32>
    %51 = vector.extract_strided_slice %29 {offsets = [0, 48], sizes = [8, 16], strides = [1, 1]} : vector<16x96xf32> to vector<8x16xf32>
    %52 = vector.extract_strided_slice %29 {offsets = [0, 80], sizes = [8, 16], strides = [1, 1]} : vector<16x96xf32> to vector<8x16xf32>
    %53 = tpu.transpose %51, [1, 0] : vector<8x16xf32> -> vector<16x8xf32>
    %cst_22 = arith.constant dense<0.000000e+00> : vector<8x8xf32>
    %54 = tpu.matmul %50, %53, %cst_22 {dimension_numbers = #tpu.dot_dimension_numbers<[1], [0], [0], [1], [0, 0, 1, 1], [], []>} : vector<8x16xf32>, vector<16x8xf32>, vector<8x8xf32> -> vector<8x8xf32>
    %55 = vector.broadcast %30 : vector<1x8xf32> to vector<8x8xf32>
    %56 = arith.addf %54, %55 : vector<8x8xf32>
    %cst_23 = arith.constant dense<0xFF800000> : vector<8xf32>
    %57 = vector.multi_reduction <maximumf>, %56, %cst_23 [1] : vector<8x8xf32> to vector<8xf32>
    %58 = vector.shape_cast %57 : vector<8xf32> to vector<8x1xf32>
    %59 = vector.broadcast %58 : vector<8x1xf32> to vector<8x8xf32>
    %60 = arith.subf %56, %59 : vector<8x8xf32>
    %61 = math.exp %60 : vector<8x8xf32>
    %cst_24 = arith.constant dense<0.000000e+00> : vector<8xf32>
    %62 = vector.multi_reduction <add>, %61, %cst_24 [1] : vector<8x8xf32> to vector<8xf32>
    %63 = vector.shape_cast %62 : vector<8xf32> to vector<8x1xf32>
    %64 = tpu.reciprocal %63 {approx = true} : vector<8x1xf32> -> vector<8x1xf32>
    %65 = vector.broadcast %64 : vector<8x1xf32> to vector<8x8xf32>
    %66 = arith.mulf %61, %65 : vector<8x8xf32>
    %cst_25 = arith.constant dense<0.000000e+00> : vector<8x16xf32>
    %67 = tpu.matmul %66, %52, %cst_25 {dimension_numbers = #tpu.dot_dimension_numbers<[1], [0], [0], [1], [0, 0, 1, 1], [], []>} : vector<8x8xf32>, vector<8x16xf32>, vector<8x16xf32> -> vector<8x16xf32>
    %c0_26 = arith.constant 0 : index
    %c16 = arith.constant 16 : index
    %68 = vector.load %arg29[%c0_26, %c16] : memref<16x32xf32, #tpu.memory_space<vmem>>, vector<8x16xf32>
    tpu.vector_store %arg29[%c0_26, %c16], %67 {strides = array<i32>} : memref<16x32xf32, #tpu.memory_space<vmem>>, vector<8x16xf32>,
    %c1 = arith.constant 1 : index
    %c0_27 = arith.constant 0 : index
    %69 = vector.load %arg1[%c1, %c0_27] : memref<2x8xf32, #tpu.memory_space<vmem>>, vector<1x8xf32>
    %70 = vector.extract_strided_slice %29 {offsets = [8, 0], sizes = [8, 16], strides = [1, 1]} : vector<16x96xf32> to vector<8x16xf32>
    %71 = vector.extract_strided_slice %29 {offsets = [8, 32], sizes = [8, 16], strides = [1, 1]} : vector<16x96xf32> to vector<8x16xf32>
    %72 = vector.extract_strided_slice %29 {offsets = [8, 64], sizes = [8, 16], strides = [1, 1]} : vector<16x96xf32> to vector<8x16xf32>
    %73 = tpu.transpose %71, [1, 0] : vector<8x16xf32> -> vector<16x8xf32>
    %cst_28 = arith.constant dense<0.000000e+00> : vector<8x8xf32>
    %74 = tpu.matmul %70, %73, %cst_28 {dimension_numbers = #tpu.dot_dimension_numbers<[1], [0], [0], [1], [0, 0, 1, 1], [], []>} : vector<8x16xf32>, vector<16x8xf32>, vector<8x8xf32> -> vector<8x8xf32>
    %75 = vector.broadcast %69 : vector<1x8xf32> to vector<8x8xf32>
    %76 = arith.addf %74, %75 : vector<8x8xf32>
    %cst_29 = arith.constant dense<0xFF800000> : vector<8xf32>
    %77 = vector.multi_reduction <maximumf>, %76, %cst_29 [1] : vector<8x8xf32> to vector<8xf32>
    %78 = vector.shape_cast %77 : vector<8xf32> to vector<8x1xf32>
    %79 = vector.broadcast %78 : vector<8x1xf32> to vector<8x8xf32>
    %80 = arith.subf %76, %79 : vector<8x8xf32>
    %81 = math.exp %80 : vector<8x8xf32>
    %cst_30 = arith.constant dense<0.000000e+00> : vector<8xf32>
    %82 = vector.multi_reduction <add>, %81, %cst_30 [1] : vector<8x8xf32> to vector<8xf32>
    %83 = vector.shape_cast %82 : vector<8xf32> to vector<8x1xf32>
    %84 = tpu.reciprocal %83 {approx = true} : vector<8x1xf32> -> vector<8x1xf32>
    %85 = vector.broadcast %84 : vector<8x1xf32> to vector<8x8xf32>
    %86 = arith.mulf %81, %85 : vector<8x8xf32>
    %cst_31 = arith.constant dense<0.000000e+00> : vector<8x16xf32>
    %87 = tpu.matmul %86, %72, %cst_31 {dimension_numbers = #tpu.dot_dimension_numbers<[1], [0], [0], [1], [0, 0, 1, 1], [], []>} : vector<8x8xf32>, vector<8x16xf32>, vector<8x16xf32> -> vector<8x16xf32>
    %c8 = arith.constant 8 : index
    %c0_32 = arith.constant 0 : index
    %88 = vector.load %arg29[%c8, %c0_32] : memref<16x32xf32, #tpu.memory_space<vmem>>, vector<8x16xf32>
    tpu.vector_store %arg29[%c8, %c0_32], %87 {strides = array<i32>} : memref<16x32xf32, #tpu.memory_space<vmem>>, vector<8x16xf32>,
    %89 = vector.extract_strided_slice %29 {offsets = [8, 16], sizes = [8, 16], strides = [1, 1]} : vector<16x96xf32> to vector<8x16xf32>
    %90 = vector.extract_strided_slice %29 {offsets = [8, 48], sizes = [8, 16], strides = [1, 1]} : vector<16x96xf32> to vector<8x16xf32>
    %91 = vector.extract_strided_slice %29 {offsets = [8, 80], sizes = [8, 16], strides = [1, 1]} : vector<16x96xf32> to vector<8x16xf32>
    %92 = tpu.transpose %90, [1, 0] : vector<8x16xf32> -> vector<16x8xf32>
    %cst_33 = arith.constant dense<0.000000e+00> : vector<8x8xf32>
    %93 = tpu.matmul %89, %92, %cst_33 {dimension_numbers = #tpu.dot_dimension_numbers<[1], [0], [0], [1], [0, 0, 1, 1], [], []>} : vector<8x16xf32>, vector<16x8xf32>, vector<8x8xf32> -> vector<8x8xf32>
    %94 = vector.broadcast %69 : vector<1x8xf32> to vector<8x8xf32>
    %95 = arith.addf %93, %94 : vector<8x8xf32>
    %cst_34 = arith.constant dense<0xFF800000> : vector<8xf32>
    %96 = vector.multi_reduction <maximumf>, %95, %cst_34 [1] : vector<8x8xf32> to vector<8xf32>
    %97 = vector.shape_cast %96 : vector<8xf32> to vector<8x1xf32>
    %98 = vector.broadcast %97 : vector<8x1xf32> to vector<8x8xf32>
    %99 = arith.subf %95, %98 : vector<8x8xf32>
    %100 = math.exp %99 : vector<8x8xf32>
    %cst_35 = arith.constant dense<0.000000e+00> : vector<8xf32>
    %101 = vector.multi_reduction <add>, %100, %cst_35 [1] : vector<8x8xf32> to vector<8xf32>
    %102 = vector.shape_cast %101 : vector<8xf32> to vector<8x1xf32>
    %103 = tpu.reciprocal %102 {approx = true} : vector<8x1xf32> -> vector<8x1xf32>
    %104 = vector.broadcast %103 : vector<8x1xf32> to vector<8x8xf32>
    %105 = arith.mulf %100, %104 : vector<8x8xf32>
    %cst_36 = arith.constant dense<0.000000e+00> : vector<8x16xf32>
    %106 = tpu.matmul %105, %91, %cst_36 {dimension_numbers = #tpu.dot_dimension_numbers<[1], [0], [0], [1], [0, 0, 1, 1], [], []>} : vector<8x8xf32>, vector<8x16xf32>, vector<8x16xf32> -> vector<8x16xf32>
    %c8_37 = arith.constant 8 : index
    %c16_38 = arith.constant 16 : index
    %107 = vector.load %arg29[%c8_37, %c16_38] : memref<16x32xf32, #tpu.memory_space<vmem>>, vector<8x16xf32>
    tpu.vector_store %arg29[%c8_37, %c16_38], %106 {strides = array<i32>} : memref<16x32xf32, #tpu.memory_space<vmem>>, vector<8x16xf32>,
    %c0_39 = arith.constant 0 : index
    %c0_40 = arith.constant 0 : index
    %108 = vector.load %arg29[%c0_39, %c0_40] : memref<16x32xf32, #tpu.memory_space<vmem>>, vector<16x32xf32>
    %c0_41 = arith.constant 0 : index
    %c0_42 = arith.constant 0 : index
    %109 = vector.load %arg6[%c0_41, %c0_42] : memref<32x32xf32, #tpu.memory_space<vmem>>, vector<32x32xf32>
    %cst_43 = arith.constant dense<0.000000e+00> : vector<16x32xf32>
    %110 = tpu.matmul %108, %109, %cst_43 {dimension_numbers = #tpu.dot_dimension_numbers<[1], [0], [0], [1], [0, 0, 1, 1], [], []>} : vector<16x32xf32>, vector<32x32xf32>, vector<16x32xf32> -> vector<16x32xf32>
    %c0_44 = arith.constant 0 : index
    %c0_45 = arith.constant 0 : index
    %111 = vector.load %arg7[%c0_44, %c0_45] : memref<1x32xf32, #tpu.memory_space<vmem>>, vector<1x32xf32>
    %112 = vector.broadcast %111 : vector<1x32xf32> to vector<16x32xf32>
    %113 = arith.addf %110, %112 : vector<16x32xf32>
    %114 = arith.addf %24, %113 : vector<16x32xf32>
    %c0_46 = arith.constant 0 : index
    %c0_47 = arith.constant 0 : index
    %115 = vector.load %arg8[%c0_46, %c0_47] : memref<1x32xf32, #tpu.memory_space<vmem>>, vector<1x32xf32>
    %c0_48 = arith.constant 0 : index
    %c0_49 = arith.constant 0 : index
    %116 = vector.load %arg9[%c0_48, %c0_49] : memref<1x32xf32, #tpu.memory_space<vmem>>, vector<1x32xf32>
    %cst_50 = arith.constant dense<0.000000e+00> : vector<16xf32>
    %117 = vector.multi_reduction <add>, %114, %cst_50 [1] : vector<16x32xf32> to vector<16xf32>
    %118 = vector.shape_cast %117 : vector<16xf32> to vector<16x1xf32>
    %cst_51 = arith.constant 3.200000e+01 : f32
    %119 = vector.broadcast %cst_51 : f32 to vector<16x1xf32>
    %120 = arith.divf %118, %119 : vector<16x1xf32>
    %121 = vector.broadcast %120 : vector<16x1xf32> to vector<16x32xf32>
    %122 = arith.subf %114, %121 : vector<16x32xf32>
    %123 = arith.mulf %122, %122 : vector<16x32xf32>
    %cst_52 = arith.constant dense<0.000000e+00> : vector<16xf32>
    %124 = vector.multi_reduction <add>, %123, %cst_52 [1] : vector<16x32xf32> to vector<16xf32>
    %125 = vector.shape_cast %124 : vector<16xf32> to vector<16x1xf32>
    %cst_53 = arith.constant 3.200000e+01 : f32
    %126 = vector.broadcast %cst_53 : f32 to vector<16x1xf32>
    %127 = arith.divf %125, %126 : vector<16x1xf32>
    %128 = vector.broadcast %120 : vector<16x1xf32> to vector<16x32xf32>
    %129 = arith.subf %114, %128 : vector<16x32xf32>
    %cst_54 = arith.constant 9.99999996E-13 : f32
    %130 = vector.broadcast %cst_54 : f32 to vector<16x1xf32>
    %131 = arith.addf %127, %130 : vector<16x1xf32>
    %132 = math.rsqrt %131 : vector<16x1xf32>
    %133 = vector.broadcast %132 : vector<16x1xf32> to vector<16x32xf32>
    %134 = arith.mulf %129, %133 : vector<16x32xf32>
    %135 = vector.broadcast %115 : vector<1x32xf32> to vector<16x32xf32>
    %136 = arith.mulf %134, %135 : vector<16x32xf32>
    %137 = vector.broadcast %116 : vector<1x32xf32> to vector<16x32xf32>
    %138 = arith.addf %136, %137 : vector<16x32xf32>
    %c0_55 = arith.constant 0 : index
    %c0_56 = arith.constant 0 : index
    %139 = vector.load %arg10[%c0_55, %c0_56] : memref<32x64xf32, #tpu.memory_space<vmem>>, vector<32x64xf32>
    %cst_57 = arith.constant dense<0.000000e+00> : vector<16x64xf32>
    %140 = tpu.matmul %138, %139, %cst_57 {dimension_numbers = #tpu.dot_dimension_numbers<[1], [0], [0], [1], [0, 0, 1, 1], [], []>} : vector<16x32xf32>, vector<32x64xf32>, vector<16x64xf32> -> vector<16x64xf32>
    %c0_58 = arith.constant 0 : index
    %c0_59 = arith.constant 0 : index
    %141 = vector.load %arg11[%c0_58, %c0_59] : memref<1x64xf32, #tpu.memory_space<vmem>>, vector<1x64xf32>
    %142 = vector.broadcast %141 : vector<1x64xf32> to vector<16x64xf32>
    %143 = arith.addf %140, %142 : vector<16x64xf32>
    %144 = arith.mulf %143, %143 : vector<16x64xf32>
    %145 = arith.mulf %143, %144 : vector<16x64xf32>
    %cst_60 = arith.constant 4.471500e-02 : f32
    %146 = vector.broadcast %cst_60 : f32 to vector<16x64xf32>
    %147 = arith.mulf %146, %145 : vector<16x64xf32>
    %148 = arith.addf %143, %147 : vector<16x64xf32>
    %cst_61 = arith.constant 0.797884583 : f32
    %149 = vector.broadcast %cst_61 : f32 to vector<16x64xf32>
    %150 = arith.mulf %149, %148 : vector<16x64xf32>
    %151 = math.tanh %150 : vector<16x64xf32>
    %cst_62 = arith.constant 1.000000e+00 : f32
    %152 = vector.broadcast %cst_62 : f32 to vector<16x64xf32>
    %153 = arith.addf %152, %151 : vector<16x64xf32>
    %cst_63 = arith.constant 5.000000e-01 : f32
    %154 = vector.broadcast %cst_63 : f32 to vector<16x64xf32>
    %155 = arith.mulf %154, %153 : vector<16x64xf32>
    %156 = arith.mulf %143, %155 : vector<16x64xf32>
    %c0_64 = arith.constant 0 : index
    %c0_65 = arith.constant 0 : index
    %157 = vector.load %arg12[%c0_64, %c0_65] : memref<64x32xf32, #tpu.memory_space<vmem>>, vector<64x32xf32>
    %cst_66 = arith.constant dense<0.000000e+00> : vector<16x32xf32>
    %158 = tpu.matmul %156, %157, %cst_66 {dimension_numbers = #tpu.dot_dimension_numbers<[1], [0], [0], [1], [0, 0, 1, 1], [], []>} : vector<16x64xf32>, vector<64x32xf32>, vector<16x32xf32> -> vector<16x32xf32>
    %c0_67 = arith.constant 0 : index
    %c0_68 = arith.constant 0 : index
    %159 = vector.load %arg13[%c0_67, %c0_68] : memref<1x32xf32, #tpu.memory_space<vmem>>, vector<1x32xf32>
    %160 = vector.broadcast %159 : vector<1x32xf32> to vector<16x32xf32>
    %161 = arith.addf %158, %160 : vector<16x32xf32>
    %162 = arith.addf %138, %161 : vector<16x32xf32>
    %c0_69 = arith.constant 0 : index
    %c0_70 = arith.constant 0 : index
    %163 = vector.load %arg14[%c0_69, %c0_70] : memref<1x32xf32, #tpu.memory_space<vmem>>, vector<1x32xf32>
    %c0_71 = arith.constant 0 : index
    %c0_72 = arith.constant 0 : index
    %164 = vector.load %arg15[%c0_71, %c0_72] : memref<1x32xf32, #tpu.memory_space<vmem>>, vector<1x32xf32>
    %cst_73 = arith.constant dense<0.000000e+00> : vector<16xf32>
    %165 = vector.multi_reduction <add>, %162, %cst_73 [1] : vector<16x32xf32> to vector<16xf32>
    %166 = vector.shape_cast %165 : vector<16xf32> to vector<16x1xf32>
    %cst_74 = arith.constant 3.200000e+01 : f32
    %167 = vector.broadcast %cst_74 : f32 to vector<16x1xf32>
    %168 = arith.divf %166, %167 : vector<16x1xf32>
    %169 = vector.broadcast %168 : vector<16x1xf32> to vector<16x32xf32>
    %170 = arith.subf %162, %169 : vector<16x32xf32>
    %171 = arith.mulf %170, %170 : vector<16x32xf32>
    %cst_75 = arith.constant dense<0.000000e+00> : vector<16xf32>
    %172 = vector.multi_reduction <add>, %171, %cst_75 [1] : vector<16x32xf32> to vector<16xf32>
    %173 = vector.shape_cast %172 : vector<16xf32> to vector<16x1xf32>
    %cst_76 = arith.constant 3.200000e+01 : f32
    %174 = vector.broadcast %cst_76 : f32 to vector<16x1xf32>
    %175 = arith.divf %173, %174 : vector<16x1xf32>
    %176 = vector.broadcast %168 : vector<16x1xf32> to vector<16x32xf32>
    %177 = arith.subf %162, %176 : vector<16x32xf32>
    %cst_77 = arith.constant 9.99999996E-13 : f32
    %178 = vector.broadcast %cst_77 : f32 to vector<16x1xf32>
    %179 = arith.addf %175, %178 : vector<16x1xf32>
    %180 = math.rsqrt %179 : vector<16x1xf32>
    %181 = vector.broadcast %180 : vector<16x1xf32> to vector<16x32xf32>
    %182 = arith.mulf %177, %181 : vector<16x32xf32>
    %183 = vector.broadcast %163 : vector<1x32xf32> to vector<16x32xf32>
    %184 = arith.mulf %182, %183 : vector<16x32xf32>
    %185 = vector.broadcast %164 : vector<1x32xf32> to vector<16x32xf32>
    %186 = arith.addf %184, %185 : vector<16x32xf32>
    %c0_78 = arith.constant 0 : index
    %c0_79 = arith.constant 0 : index
    %187 = vector.load %arg16[%c0_78, %c0_79] : memref<32x96xf32, #tpu.memory_space<vmem>>, vector<32x96xf32>
    %cst_80 = arith.constant dense<0.000000e+00> : vector<16x96xf32>
    %188 = tpu.matmul %186, %187, %cst_80 {dimension_numbers = #tpu.dot_dimension_numbers<[1], [0], [0], [1], [0, 0, 1, 1], [], []>} : vector<16x32xf32>, vector<32x96xf32>, vector<16x96xf32> -> vector<16x96xf32>
    %c0_81 = arith.constant 0 : index
    %c0_82 = arith.constant 0 : index
    %189 = vector.load %arg17[%c0_81, %c0_82] : memref<1x96xf32, #tpu.memory_space<vmem>>, vector<1x96xf32>
    %190 = vector.broadcast %189 : vector<1x96xf32> to vector<16x96xf32>
    %191 = arith.addf %188, %190 : vector<16x96xf32>
    %c0_83 = arith.constant 0 : index
    %c0_84 = arith.constant 0 : index
    %192 = vector.load %arg1[%c0_83, %c0_84] : memref<2x8xf32, #tpu.memory_space<vmem>>, vector<1x8xf32>
    %193 = vector.extract_strided_slice %191 {offsets = [0, 0], sizes = [8, 16], strides = [1, 1]} : vector<16x96xf32> to vector<8x16xf32>
    %194 = vector.extract_strided_slice %191 {offsets = [0, 32], sizes = [8, 16], strides = [1, 1]} : vector<16x96xf32> to vector<8x16xf32>
    %195 = vector.extract_strided_slice %191 {offsets = [0, 64], sizes = [8, 16], strides = [1, 1]} : vector<16x96xf32> to vector<8x16xf32>
    %196 = tpu.transpose %194, [1, 0] : vector<8x16xf32> -> vector<16x8xf32>
    %cst_85 = arith.constant dense<0.000000e+00> : vector<8x8xf32>
    %197 = tpu.matmul %193, %196, %cst_85 {dimension_numbers = #tpu.dot_dimension_numbers<[1], [0], [0], [1], [0, 0, 1, 1], [], []>} : vector<8x16xf32>, vector<16x8xf32>, vector<8x8xf32> -> vector<8x8xf32>
    %198 = vector.broadcast %192 : vector<1x8xf32> to vector<8x8xf32>
    %199 = arith.addf %197, %198 : vector<8x8xf32>
    %cst_86 = arith.constant dense<0xFF800000> : vector<8xf32>
    %200 = vector.multi_reduction <maximumf>, %199, %cst_86 [1] : vector<8x8xf32> to vector<8xf32>
    %201 = vector.shape_cast %200 : vector<8xf32> to vector<8x1xf32>
    %202 = vector.broadcast %201 : vector<8x1xf32> to vector<8x8xf32>
    %203 = arith.subf %199, %202 : vector<8x8xf32>
    %204 = math.exp %203 : vector<8x8xf32>
    %cst_87 = arith.constant dense<0.000000e+00> : vector<8xf32>
    %205 = vector.multi_reduction <add>, %204, %cst_87 [1] : vector<8x8xf32> to vector<8xf32>
    %206 = vector.shape_cast %205 : vector<8xf32> to vector<8x1xf32>
    %207 = tpu.reciprocal %206 {approx = true} : vector<8x1xf32> -> vector<8x1xf32>
    %208 = vector.broadcast %207 : vector<8x1xf32> to vector<8x8xf32>
    %209 = arith.mulf %204, %208 : vector<8x8xf32>
    %cst_88 = arith.constant dense<0.000000e+00> : vector<8x16xf32>
    %210 = tpu.matmul %209, %195, %cst_88 {dimension_numbers = #tpu.dot_dimension_numbers<[1], [0], [0], [1], [0, 0, 1, 1], [], []>} : vector<8x8xf32>, vector<8x16xf32>, vector<8x16xf32> -> vector<8x16xf32>
    %c0_89 = arith.constant 0 : index
    %c0_90 = arith.constant 0 : index
    %211 = vector.load %arg29[%c0_89, %c0_90] : memref<16x32xf32, #tpu.memory_space<vmem>>, vector<8x16xf32>
    tpu.vector_store %arg29[%c0_89, %c0_90], %210 {strides = array<i32>} : memref<16x32xf32, #tpu.memory_space<vmem>>, vector<8x16xf32>,
    %212 = vector.extract_strided_slice %191 {offsets = [0, 16], sizes = [8, 16], strides = [1, 1]} : vector<16x96xf32> to vector<8x16xf32>
    %213 = vector.extract_strided_slice %191 {offsets = [0, 48], sizes = [8, 16], strides = [1, 1]} : vector<16x96xf32> to vector<8x16xf32>
    %214 = vector.extract_strided_slice %191 {offsets = [0, 80], sizes = [8, 16], strides = [1, 1]} : vector<16x96xf32> to vector<8x16xf32>
    %215 = tpu.transpose %213, [1, 0] : vector<8x16xf32> -> vector<16x8xf32>
    %cst_91 = arith.constant dense<0.000000e+00> : vector<8x8xf32>
    %216 = tpu.matmul %212, %215, %cst_91 {dimension_numbers = #tpu.dot_dimension_numbers<[1], [0], [0], [1], [0, 0, 1, 1], [], []>} : vector<8x16xf32>, vector<16x8xf32>, vector<8x8xf32> -> vector<8x8xf32>
    %217 = vector.broadcast %192 : vector<1x8xf32> to vector<8x8xf32>
    %218 = arith.addf %216, %217 : vector<8x8xf32>
    %cst_92 = arith.constant dense<0xFF800000> : vector<8xf32>
    %219 = vector.multi_reduction <maximumf>, %218, %cst_92 [1] : vector<8x8xf32> to vector<8xf32>
    %220 = vector.shape_cast %219 : vector<8xf32> to vector<8x1xf32>
    %221 = vector.broadcast %220 : vector<8x1xf32> to vector<8x8xf32>
    %222 = arith.subf %218, %221 : vector<8x8xf32>
    %223 = math.exp %222 : vector<8x8xf32>
    %cst_93 = arith.constant dense<0.000000e+00> : vector<8xf32>
    %224 = vector.multi_reduction <add>, %223, %cst_93 [1] : vector<8x8xf32> to vector<8xf32>
    %225 = vector.shape_cast %224 : vector<8xf32> to vector<8x1xf32>
    %226 = tpu.reciprocal %225 {approx = true} : vector<8x1xf32> -> vector<8x1xf32>
    %227 = vector.broadcast %226 : vector<8x1xf32> to vector<8x8xf32>
    %228 = arith.mulf %223, %227 : vector<8x8xf32>
    %cst_94 = arith.constant dense<0.000000e+00> : vector<8x16xf32>
    %229 = tpu.matmul %228, %214, %cst_94 {dimension_numbers = #tpu.dot_dimension_numbers<[1], [0], [0], [1], [0, 0, 1, 1], [], []>} : vector<8x8xf32>, vector<8x16xf32>, vector<8x16xf32> -> vector<8x16xf32>
    %c0_95 = arith.constant 0 : index
    %c16_96 = arith.constant 16 : index
    %230 = vector.load %arg29[%c0_95, %c16_96] : memref<16x32xf32, #tpu.memory_space<vmem>>, vector<8x16xf32>
    tpu.vector_store %arg29[%c0_95, %c16_96], %229 {strides = array<i32>} : memref<16x32xf32, #tpu.memory_space<vmem>>, vector<8x16xf32>,
    %c1_97 = arith.constant 1 : index
    %c0_98 = arith.constant 0 : index
    %231 = vector.load %arg1[%c1_97, %c0_98] : memref<2x8xf32, #tpu.memory_space<vmem>>, vector<1x8xf32>
    %232 = vector.extract_strided_slice %191 {offsets = [8, 0], sizes = [8, 16], strides = [1, 1]} : vector<16x96xf32> to vector<8x16xf32>
    %233 = vector.extract_strided_slice %191 {offsets = [8, 32], sizes = [8, 16], strides = [1, 1]} : vector<16x96xf32> to vector<8x16xf32>
    %234 = vector.extract_strided_slice %191 {offsets = [8, 64], sizes = [8, 16], strides = [1, 1]} : vector<16x96xf32> to vector<8x16xf32>
    %235 = tpu.transpose %233, [1, 0] : vector<8x16xf32> -> vector<16x8xf32>
    %cst_99 = arith.constant dense<0.000000e+00> : vector<8x8xf32>
    %236 = tpu.matmul %232, %235, %cst_99 {dimension_numbers = #tpu.dot_dimension_numbers<[1], [0], [0], [1], [0, 0, 1, 1], [], []>} : vector<8x16xf32>, vector<16x8xf32>, vector<8x8xf32> -> vector<8x8xf32>
    %237 = vector.broadcast %231 : vector<1x8xf32> to vector<8x8xf32>
    %238 = arith.addf %236, %237 : vector<8x8xf32>
    %cst_100 = arith.constant dense<0xFF800000> : vector<8xf32>
    %239 = vector.multi_reduction <maximumf>, %238, %cst_100 [1] : vector<8x8xf32> to vector<8xf32>
    %240 = vector.shape_cast %239 : vector<8xf32> to vector<8x1xf32>
    %241 = vector.broadcast %240 : vector<8x1xf32> to vector<8x8xf32>
    %242 = arith.subf %238, %241 : vector<8x8xf32>
    %243 = math.exp %242 : vector<8x8xf32>
    %cst_101 = arith.constant dense<0.000000e+00> : vector<8xf32>
    %244 = vector.multi_reduction <add>, %243, %cst_101 [1] : vector<8x8xf32> to vector<8xf32>
    %245 = vector.shape_cast %244 : vector<8xf32> to vector<8x1xf32>
    %246 = tpu.reciprocal %245 {approx = true} : vector<8x1xf32> -> vector<8x1xf32>
    %247 = vector.broadcast %246 : vector<8x1xf32> to vector<8x8xf32>
    %248 = arith.mulf %243, %247 : vector<8x8xf32>
    %cst_102 = arith.constant dense<0.000000e+00> : vector<8x16xf32>
    %249 = tpu.matmul %248, %234, %cst_102 {dimension_numbers = #tpu.dot_dimension_numbers<[1], [0], [0], [1], [0, 0, 1, 1], [], []>} : vector<8x8xf32>, vector<8x16xf32>, vector<8x16xf32> -> vector<8x16xf32>
    %c8_103 = arith.constant 8 : index
    %c0_104 = arith.constant 0 : index
    %250 = vector.load %arg29[%c8_103, %c0_104] : memref<16x32xf32, #tpu.memory_space<vmem>>, vector<8x16xf32>
    tpu.vector_store %arg29[%c8_103, %c0_104], %249 {strides = array<i32>} : memref<16x32xf32, #tpu.memory_space<vmem>>, vector<8x16xf32>,
    %251 = vector.extract_strided_slice %191 {offsets = [8, 16], sizes = [8, 16], strides = [1, 1]} : vector<16x96xf32> to vector<8x16xf32>
    %252 = vector.extract_strided_slice %191 {offsets = [8, 48], sizes = [8, 16], strides = [1, 1]} : vector<16x96xf32> to vector<8x16xf32>
    %253 = vector.extract_strided_slice %191 {offsets = [8, 80], sizes = [8, 16], strides = [1, 1]} : vector<16x96xf32> to vector<8x16xf32>
    %254 = tpu.transpose %252, [1, 0] : vector<8x16xf32> -> vector<16x8xf32>
    %cst_105 = arith.constant dense<0.000000e+00> : vector<8x8xf32>
    %255 = tpu.matmul %251, %254, %cst_105 {dimension_numbers = #tpu.dot_dimension_numbers<[1], [0], [0], [1], [0, 0, 1, 1], [], []>} : vector<8x16xf32>, vector<16x8xf32>, vector<8x8xf32> -> vector<8x8xf32>
    %256 = vector.broadcast %231 : vector<1x8xf32> to vector<8x8xf32>
    %257 = arith.addf %255, %256 : vector<8x8xf32>
    %cst_106 = arith.constant dense<0xFF800000> : vector<8xf32>
    %258 = vector.multi_reduction <maximumf>, %257, %cst_106 [1] : vector<8x8xf32> to vector<8xf32>
    %259 = vector.shape_cast %258 : vector<8xf32> to vector<8x1xf32>
    %260 = vector.broadcast %259 : vector<8x1xf32> to vector<8x8xf32>
    %261 = arith.subf %257, %260 : vector<8x8xf32>
    %262 = math.exp %261 : vector<8x8xf32>
    %cst_107 = arith.constant dense<0.000000e+00> : vector<8xf32>
    %263 = vector.multi_reduction <add>, %262, %cst_107 [1] : vector<8x8xf32> to vector<8xf32>
    %264 = vector.shape_cast %263 : vector<8xf32> to vector<8x1xf32>
    %265 = tpu.reciprocal %264 {approx = true} : vector<8x1xf32> -> vector<8x1xf32>
    %266 = vector.broadcast %265 : vector<8x1xf32> to vector<8x8xf32>
    %267 = arith.mulf %262, %266 : vector<8x8xf32>
    %cst_108 = arith.constant dense<0.000000e+00> : vector<8x16xf32>
    %268 = tpu.matmul %267, %253, %cst_108 {dimension_numbers = #tpu.dot_dimension_numbers<[1], [0], [0], [1], [0, 0, 1, 1], [], []>} : vector<8x8xf32>, vector<8x16xf32>, vector<8x16xf32> -> vector<8x16xf32>
    %c8_109 = arith.constant 8 : index
    %c16_110 = arith.constant 16 : index
    %269 = vector.load %arg29[%c8_109, %c16_110] : memref<16x32xf32, #tpu.memory_space<vmem>>, vector<8x16xf32>
    tpu.vector_store %arg29[%c8_109, %c16_110], %268 {strides = array<i32>} : memref<16x32xf32, #tpu.memory_space<vmem>>, vector<8x16xf32>,
    %c0_111 = arith.constant 0 : index
    %c0_112 = arith.constant 0 : index
    %270 = vector.load %arg29[%c0_111, %c0_112] : memref<16x32xf32, #tpu.memory_space<vmem>>, vector<16x32xf32>
    %c0_113 = arith.constant 0 : index
    %c0_114 = arith.constant 0 : index
    %271 = vector.load %arg18[%c0_113, %c0_114] : memref<32x32xf32, #tpu.memory_space<vmem>>, vector<32x32xf32>
    %cst_115 = arith.constant dense<0.000000e+00> : vector<16x32xf32>
    %272 = tpu.matmul %270, %271, %cst_115 {dimension_numbers = #tpu.dot_dimension_numbers<[1], [0], [0], [1], [0, 0, 1, 1], [], []>} : vector<16x32xf32>, vector<32x32xf32>, vector<16x32xf32> -> vector<16x32xf32>
    %c0_116 = arith.constant 0 : index
    %c0_117 = arith.constant 0 : index
    %273 = vector.load %arg19[%c0_116, %c0_117] : memref<1x32xf32, #tpu.memory_space<vmem>>, vector<1x32xf32>
    %274 = vector.broadcast %273 : vector<1x32xf32> to vector<16x32xf32>
    %275 = arith.addf %272, %274 : vector<16x32xf32>
    %276 = arith.addf %186, %275 : vector<16x32xf32>
    %c0_118 = arith.constant 0 : index
    %c0_119 = arith.constant 0 : index
    %277 = vector.load %arg20[%c0_118, %c0_119] : memref<1x32xf32, #tpu.memory_space<vmem>>, vector<1x32xf32>
    %c0_120 = arith.constant 0 : index
    %c0_121 = arith.constant 0 : index
    %278 = vector.load %arg21[%c0_120, %c0_121] : memref<1x32xf32, #tpu.memory_space<vmem>>, vector<1x32xf32>
    %cst_122 = arith.constant dense<0.000000e+00> : vector<16xf32>
    %279 = vector.multi_reduction <add>, %276, %cst_122 [1] : vector<16x32xf32> to vector<16xf32>
    %280 = vector.shape_cast %279 : vector<16xf32> to vector<16x1xf32>
    %cst_123 = arith.constant 3.200000e+01 : f32
    %281 = vector.broadcast %cst_123 : f32 to vector<16x1xf32>
    %282 = arith.divf %280, %281 : vector<16x1xf32>
    %283 = vector.broadcast %282 : vector<16x1xf32> to vector<16x32xf32>
    %284 = arith.subf %276, %283 : vector<16x32xf32>
    %285 = arith.mulf %284, %284 : vector<16x32xf32>
    %cst_124 = arith.constant dense<0.000000e+00> : vector<16xf32>
    %286 = vector.multi_reduction <add>, %285, %cst_124 [1] : vector<16x32xf32> to vector<16xf32>
    %287 = vector.shape_cast %286 : vector<16xf32> to vector<16x1xf32>
    %cst_125 = arith.constant 3.200000e+01 : f32
    %288 = vector.broadcast %cst_125 : f32 to vector<16x1xf32>
    %289 = arith.divf %287, %288 : vector<16x1xf32>
    %290 = vector.broadcast %282 : vector<16x1xf32> to vector<16x32xf32>
    %291 = arith.subf %276, %290 : vector<16x32xf32>
    %cst_126 = arith.constant 9.99999996E-13 : f32
    %292 = vector.broadcast %cst_126 : f32 to vector<16x1xf32>
    %293 = arith.addf %289, %292 : vector<16x1xf32>
    %294 = math.rsqrt %293 : vector<16x1xf32>
    %295 = vector.broadcast %294 : vector<16x1xf32> to vector<16x32xf32>
    %296 = arith.mulf %291, %295 : vector<16x32xf32>
    %297 = vector.broadcast %277 : vector<1x32xf32> to vector<16x32xf32>
    %298 = arith.mulf %296, %297 : vector<16x32xf32>
    %299 = vector.broadcast %278 : vector<1x32xf32> to vector<16x32xf32>
    %300 = arith.addf %298, %299 : vector<16x32xf32>
    %c0_127 = arith.constant 0 : index
    %c0_128 = arith.constant 0 : index
    %301 = vector.load %arg22[%c0_127, %c0_128] : memref<32x64xf32, #tpu.memory_space<vmem>>, vector<32x64xf32>
    %cst_129 = arith.constant dense<0.000000e+00> : vector<16x64xf32>
    %302 = tpu.matmul %300, %301, %cst_129 {dimension_numbers = #tpu.dot_dimension_numbers<[1], [0], [0], [1], [0, 0, 1, 1], [], []>} : vector<16x32xf32>, vector<32x64xf32>, vector<16x64xf32> -> vector<16x64xf32>
    %c0_130 = arith.constant 0 : index
    %c0_131 = arith.constant 0 : index
    %303 = vector.load %arg23[%c0_130, %c0_131] : memref<1x64xf32, #tpu.memory_space<vmem>>, vector<1x64xf32>
    %304 = vector.broadcast %303 : vector<1x64xf32> to vector<16x64xf32>
    %305 = arith.addf %302, %304 : vector<16x64xf32>
    %306 = arith.mulf %305, %305 : vector<16x64xf32>
    %307 = arith.mulf %305, %306 : vector<16x64xf32>
    %cst_132 = arith.constant 4.471500e-02 : f32
    %308 = vector.broadcast %cst_132 : f32 to vector<16x64xf32>
    %309 = arith.mulf %308, %307 : vector<16x64xf32>
    %310 = arith.addf %305, %309 : vector<16x64xf32>
    %cst_133 = arith.constant 0.797884583 : f32
    %311 = vector.broadcast %cst_133 : f32 to vector<16x64xf32>
    %312 = arith.mulf %311, %310 : vector<16x64xf32>
    %313 = math.tanh %312 : vector<16x64xf32>
    %cst_134 = arith.constant 1.000000e+00 : f32
    %314 = vector.broadcast %cst_134 : f32 to vector<16x64xf32>
    %315 = arith.addf %314, %313 : vector<16x64xf32>
    %cst_135 = arith.constant 5.000000e-01 : f32
    %316 = vector.broadcast %cst_135 : f32 to vector<16x64xf32>
    %317 = arith.mulf %316, %315 : vector<16x64xf32>
    %318 = arith.mulf %305, %317 : vector<16x64xf32>
    %c0_136 = arith.constant 0 : index
    %c0_137 = arith.constant 0 : index
    %319 = vector.load %arg24[%c0_136, %c0_137] : memref<64x32xf32, #tpu.memory_space<vmem>>, vector<64x32xf32>
    %cst_138 = arith.constant dense<0.000000e+00> : vector<16x32xf32>
    %320 = tpu.matmul %318, %319, %cst_138 {dimension_numbers = #tpu.dot_dimension_numbers<[1], [0], [0], [1], [0, 0, 1, 1], [], []>} : vector<16x64xf32>, vector<64x32xf32>, vector<16x32xf32> -> vector<16x32xf32>
    %c0_139 = arith.constant 0 : index
    %c0_140 = arith.constant 0 : index
    %321 = vector.load %arg25[%c0_139, %c0_140] : memref<1x32xf32, #tpu.memory_space<vmem>>, vector<1x32xf32>
    %322 = vector.broadcast %321 : vector<1x32xf32> to vector<16x32xf32>
    %323 = arith.addf %320, %322 : vector<16x32xf32>
    %324 = arith.addf %300, %323 : vector<16x32xf32>
    %c0_141 = arith.constant 0 : index
    %c0_142 = arith.constant 0 : index
    %325 = vector.load %arg26[%c0_141, %c0_142] : memref<1x32xf32, #tpu.memory_space<vmem>>, vector<1x32xf32>
    %c0_143 = arith.constant 0 : index
    %c0_144 = arith.constant 0 : index
    %326 = vector.load %arg27[%c0_143, %c0_144] : memref<1x32xf32, #tpu.memory_space<vmem>>, vector<1x32xf32>
    %cst_145 = arith.constant dense<0.000000e+00> : vector<16xf32>
    %327 = vector.multi_reduction <add>, %324, %cst_145 [1] : vector<16x32xf32> to vector<16xf32>
    %328 = vector.shape_cast %327 : vector<16xf32> to vector<16x1xf32>
    %cst_146 = arith.constant 3.200000e+01 : f32
    %329 = vector.broadcast %cst_146 : f32 to vector<16x1xf32>
    %330 = arith.divf %328, %329 : vector<16x1xf32>
    %331 = vector.broadcast %330 : vector<16x1xf32> to vector<16x32xf32>
    %332 = arith.subf %324, %331 : vector<16x32xf32>
    %333 = arith.mulf %332, %332 : vector<16x32xf32>
    %cst_147 = arith.constant dense<0.000000e+00> : vector<16xf32>
    %334 = vector.multi_reduction <add>, %333, %cst_147 [1] : vector<16x32xf32> to vector<16xf32>
    %335 = vector.shape_cast %334 : vector<16xf32> to vector<16x1xf32>
    %cst_148 = arith.constant 3.200000e+01 : f32
    %336 = vector.broadcast %cst_148 : f32 to vector<16x1xf32>
    %337 = arith.divf %335, %336 : vector<16x1xf32>
    %338 = vector.broadcast %330 : vector<16x1xf32> to vector<16x32xf32>
    %339 = arith.subf %324, %338 : vector<16x32xf32>
    %cst_149 = arith.constant 9.99999996E-13 : f32
    %340 = vector.broadcast %cst_149 : f32 to vector<16x1xf32>
    %341 = arith.addf %337, %340 : vector<16x1xf32>
    %342 = math.rsqrt %341 : vector<16x1xf32>
    %343 = vector.broadcast %342 : vector<16x1xf32> to vector<16x32xf32>
    %344 = arith.mulf %339, %343 : vector<16x32xf32>
    %345 = vector.broadcast %325 : vector<1x32xf32> to vector<16x32xf32>
    %346 = arith.mulf %344, %345 : vector<16x32xf32>
    %347 = vector.broadcast %326 : vector<1x32xf32> to vector<16x32xf32>
    %348 = arith.addf %346, %347 : vector<16x32xf32>
    %349 = vector.extract_strided_slice %348 {offsets = [0, 0], sizes = [1, 32], strides = [1, 1]} : vector<16x32xf32> to vector<1x32xf32>
    %c0_150 = arith.constant 0 : index
    %c0_151 = arith.constant 0 : index
    %350 = vector.load %arg28[%c0_150, %c0_151] : memref<2x32xf32, #tpu.memory_space<vmem>>, vector<1x32xf32>
    tpu.vector_store %arg28[%c0_150, %c0_151], %349 {strides = array<i32>} : memref<2x32xf32, #tpu.memory_space<vmem>>, vector<1x32xf32>,
    %351 = vector.extract_strided_slice %348 {offsets = [8, 0], sizes = [1, 32], strides = [1, 1]} : vector<16x32xf32> to vector<1x32xf32>
    %c1_152 = arith.constant 1 : index
    %c0_153 = arith.constant 0 : index
    %352 = vector.load %arg28[%c1_152, %c0_153] : memref<2x32xf32, #tpu.memory_space<vmem>>, vector<1x32xf32>
    tpu.vector_store %arg28[%c1_152, %c0_153], %351 {strides = array<i32>} : memref<2x32xf32, #tpu.memory_space<vmem>>, vector<1x32xf32>,
    return
  }
}

</mosaic_0001>

<llo_original>
// kernel: tpu_custom_call.1
$region0: #{tpu_custom_call.1}
  #allocation0 [shape = 'u32[]', space=smem, size = 0x4, offset = 0x4, fixed_abs, tag = 'smem constant byte address 0x4 - core index']
  #allocation1 [shape = 'u32[144,128]{1,0:T(1,128)}', space=vmem, size = 0x12000, scoped, tag = 'internal scratch']
  #allocation2 [shape = 'f32[16,32]{1,0:T(8,128)}', space=vmem, size = 0x2000, scoped, tag = 'scratch operand']
  %s0 = inlined_call_operand.hbm [shape: f32[16,32], index: 0, kind: input, shape index: {}]
  %s1 = inlined_call_operand.hbm [shape: f32[2,8], index: 1, kind: input, shape index: {}]
  %s2 = inlined_call_operand.hbm [shape: f32[1,32], index: 2, kind: input, shape index: {}]
  %s3 = inlined_call_operand.hbm [shape: f32[1,32], index: 3, kind: input, shape index: {}]
  %s4 = inlined_call_operand.vmem [shape: f32[32,96], index: 4, kind: input, shape index: {}]
  %s5 = inlined_call_operand.hbm [shape: f32[1,96], index: 5, kind: input, shape index: {}]
  %s6 = inlined_call_operand.vmem [shape: f32[32,32], index: 6, kind: input, shape index: {}]
  %s7 = inlined_call_operand.hbm [shape: f32[1,32], index: 7, kind: input, shape index: {}]
  %s8 = inlined_call_operand.hbm [shape: f32[1,32], index: 8, kind: input, shape index: {}]
  %s9 = inlined_call_operand.hbm [shape: f32[1,32], index: 9, kind: input, shape index: {}]
  %s10 = inlined_call_operand.vmem [shape: f32[32,64], index: 10, kind: input, shape index: {}]
  %s11 = inlined_call_operand.hbm [shape: f32[1,64], index: 11, kind: input, shape index: {}]
  %s12 = inlined_call_operand.vmem [shape: f32[64,32], index: 12, kind: input, shape index: {}]
  %s13 = inlined_call_operand.hbm [shape: f32[1,32], index: 13, kind: input, shape index: {}]
  %s14 = inlined_call_operand.hbm [shape: f32[1,32], index: 14, kind: input, shape index: {}]
  %s15 = inlined_call_operand.hbm [shape: f32[1,32], index: 15, kind: input, shape index: {}]
  %s16 = inlined_call_operand.vmem [shape: f32[32,96], index: 16, kind: input, shape index: {}]
  %s17 = inlined_call_operand.hbm [shape: f32[1,96], index: 17, kind: input, shape index: {}]
  %s18 = inlined_call_operand.vmem [shape: f32[32,32], index: 18, kind: input, shape index: {}]
  %s19 = inlined_call_operand.vmem [shape: f32[1,32], index: 19, kind: input, shape index: {}]
  %s20 = inlined_call_operand.vmem [shape: f32[1,32], index: 20, kind: input, shape index: {}]
  %s21 = inlined_call_operand.vmem [shape: f32[1,32], index: 21, kind: input, shape index: {}]
  %s22 = inlined_call_operand.vmem [shape: f32[32,64], index: 22, kind: input, shape index: {}]
  %s23 = inlined_call_operand.vmem [shape: f32[1,64], index: 23, kind: input, shape index: {}]
  %s24 = inlined_call_operand.vmem [shape: f32[64,32], index: 24, kind: input, shape index: {}]
  %s25 = inlined_call_operand.vmem [shape: f32[1,32], index: 25, kind: input, shape index: {}]
  %s26 = inlined_call_operand.vmem [shape: f32[1,32], index: 26, kind: input, shape index: {}]
  %s27 = inlined_call_operand.vmem [shape: f32[1,32], index: 27, kind: input, shape index: {}]
  %s28 = inlined_call_operand.hbm [shape: f32[2,32], index: 28, kind: output, shape index: {}]
  %s29 = sld [smem:[#allocation0]]
  $region174: #{tpu_custom_call.1} parent=0
    _
  %s31 = ssub.s32 1, %s29
  %s32 = scalar_select 0, %s31, %s29
  $region1: #{tpu_custom_call.1} parent=0
    #allocation3 [shape = 'u8[8192]{0}', space=vmem, size = 0x2000, scoped, tag = 'input window, operand 0, single buffered']
    #allocation4 [shape = 's32[1]{0}', space=sflag, size = 0x4, scoped, tag = 'scoped memory for tpu_custom_call.1']
    #allocation5 [shape = 's32[1]{0}', space=sflag, size = 0x4, scoped, tag = 'scoped memory for tpu_custom_call.1']
    #allocation6 [shape = 'u8[1024]{0}', space=vmem, size = 0x400, scoped, tag = 'input window, operand 1, single buffered']
    #allocation7 [shape = 's32[1]{0}', space=sflag, size = 0x4, scoped, tag = 'scoped memory for tpu_custom_call.1']
    #allocation8 [shape = 'u8[512]{0}', space=vmem, size = 0x400, scoped, tag = 'input window, operand 2, single buffered']
    #allocation9 [shape = 'u8[512]{0}', space=vmem, size = 0x400, scoped, tag = 'input window, operand 3, single buffered']
    #allocation10 [shape = 's32[1]{0}', space=sflag, size = 0x4, scoped, tag = 'scoped memory for tpu_custom_call.1']
    #allocation11 [shape = 'u8[512]{0}', space=vmem, size = 0x400, scoped, tag = 'input window, operand 5, single buffered']
    #allocation12 [shape = 'u8[512]{0}', space=vmem, size = 0x400, scoped, tag = 'input window, operand 7, single buffered']
    #allocation13 [shape = 's32[1]{0}', space=sflag, size = 0x4, scoped, tag = 'scoped memory for tpu_custom_call.1']
    #allocation14 [shape = 'u8[512]{0}', space=vmem, size = 0x400, scoped, tag = 'input window, operand 8, single buffered']
    #allocation15 [shape = 'u8[512]{0}', space=vmem, size = 0x400, scoped, tag = 'input window, operand 9, single buffered']
    #allocation16 [shape = 's32[1]{0}', space=sflag, size = 0x4, scoped, tag = 'scoped memory for tpu_custom_call.1']
    #allocation17 [shape = 'u8[512]{0}', space=vmem, size = 0x400, scoped, tag = 'input window, operand 11, single buffered']
    #allocation18 [shape = 'u8[512]{0}', space=vmem, size = 0x400, scoped, tag = 'input window, operand 13, single buffered']
    #allocation19 [shape = 's32[1]{0}', space=sflag, size = 0x4, scoped, tag = 'scoped memory for tpu_custom_call.1']
    #allocation20 [shape = 'u8[512]{0}', space=vmem, size = 0x400, scoped, tag = 'input window, operand 14, single buffered']
    #allocation21 [shape = 'u8[512]{0}', space=vmem, size = 0x400, scoped, tag = 'input window, operand 15, single buffered']
    #allocation22 [shape = 's32[1]{0}', space=sflag, size = 0x4, scoped, tag = 'scoped memory for tpu_custom_call.1']
    #allocation23 [shape = 'u8[512]{0}', space=vmem, size = 0x400, scoped, tag = 'input window, operand 17, single buffered']
    #allocation24 [shape = 'u8[1024]{0}', space=vmem, size = 0x400, scoped, tag = 'output window, operand 0, single buffered']
    %33 = vsyncpa [#allocation4], 0
    %34 = vsyncpa [#allocation7], 0
    %35 = vsyncpa [#allocation10], 0
    %36 = vsyncpa [#allocation13], 0
    %37 = vsyncpa [#allocation16], 0
    %38 = vsyncpa [#allocation19], 0
    %39 = vsyncpa [#allocation22], 0
    %40 = vsyncpa [#allocation5], 0
    // Predicated region
    $region2: #{tpu_custom_call.1} parent=1 // pred_check
      _
    $region3: #{tpu_custom_call.1} parent=1 // pred_check_branch
      %42 = sbr.rel (0) target = $region5
    $region4: #{tpu_custom_call.1} parent=1 // pred_region
      %s44 = ssub.s32 256, 256
      %45 = vsyncadd [#allocation4], %s44
      %s46 = sshll.u32 [#allocation3], 4
      %s47 = int_to_ptr.vmem [resolvable:$true] %s46
      %52 = dma.hbm_to_vmem [thread:$0]  %s0, 256, %s47, [#allocation4], 128, 128, 8
    $region5: #{tpu_custom_call.1} parent=1 // pred_fallthru
      _
    // Predicated region
    $region6: #{tpu_custom_call.1} parent=1 // pred_check
      _
    $region7: #{tpu_custom_call.1} parent=1 // pred_check_branch
      %54 = sbr.rel (0) target = $region9
    $region8: #{tpu_custom_call.1} parent=1 // pred_region
      %s56 = ssub.s32 32, 32
      %57 = vsyncadd [#allocation7], %s56
      %s59 = sshll.u32 [#allocation6], 4
      %s60 = int_to_ptr.vmem [resolvable:$true] %s59
      %62 = dma.hbm_to_vmem [thread:$0]  %s1, 32, %s60, [#allocation7]
    $region9: #{tpu_custom_call.1} parent=1 // pred_fallthru
      _
    // Predicated region
    $region10: #{tpu_custom_call.1} parent=1 // pred_check
      _
    $region11: #{tpu_custom_call.1} parent=1 // pred_check_branch
      %64 = sbr.rel (0) target = $region13
    $region12: #{tpu_custom_call.1} parent=1 // pred_region
      %s66 = ssub.s32 16, 16
      %67 = vsyncadd [#allocation7], %s66
      %s69 = sshll.u32 [#allocation8], 4
      %s70 = int_to_ptr.vmem [resolvable:$true] %s69
      %72 = dma.hbm_to_vmem [thread:$0]  %s2, 16, %s70, [#allocation7]
    $region13: #{tpu_custom_call.1} parent=1 // pred_fallthru
      _
    // Predicated region
    $region14: #{tpu_custom_call.1} parent=1 // pred_check
      _
    $region15: #{tpu_custom_call.1} parent=1 // pred_check_branch
      %74 = sbr.rel (0) target = $region17
    $region16: #{tpu_custom_call.1} parent=1 // pred_region
      %s76 = ssub.s32 16, 16
      %77 = vsyncadd [#allocation10], %s76
      %s79 = sshll.u32 [#allocation9], 4
      %s80 = int_to_ptr.vmem [resolvable:$true] %s79
      %82 = dma.hbm_to_vmem [thread:$0]  %s3, 16, %s80, [#allocation10]
    $region17: #{tpu_custom_call.1} parent=1 // pred_fallthru
      _
    // Predicated region
    $region18: #{tpu_custom_call.1} parent=1 // pred_check
      _
    $region19: #{tpu_custom_call.1} parent=1 // pred_check_branch
      %84 = sbr.rel (0) target = $region21
    $region20: #{tpu_custom_call.1} parent=1 // pred_region
      _
    $region21: #{tpu_custom_call.1} parent=1 // pred_fallthru
      _
    // Predicated region
    $region22: #{tpu_custom_call.1} parent=1 // pred_check
      _
    $region23: #{tpu_custom_call.1} parent=1 // pred_check_branch
      %86 = sbr.rel (0) target = $region25
    $region24: #{tpu_custom_call.1} parent=1 // pred_region
      %s88 = ssub.s32 16, 16
      %89 = vsyncadd [#allocation10], %s88
      %s91 = sshll.u32 [#allocation11], 4
      %s92 = int_to_ptr.vmem [resolvable:$true] %s91
      %94 = dma.hbm_to_vmem [thread:$0]  %s5, 16, %s92, [#allocation10]
    $region25: #{tpu_custom_call.1} parent=1 // pred_fallthru
      _
    // Predicated region
    $region26: #{tpu_custom_call.1} parent=1 // pred_check
      _
    $region27: #{tpu_custom_call.1} parent=1 // pred_check_branch
      %96 = sbr.rel (0) target = $region29
    $region28: #{tpu_custom_call.1} parent=1 // pred_region
      _
    $region29: #{tpu_custom_call.1} parent=1 // pred_fallthru
      _
    // Predicated region
    $region30: #{tpu_custom_call.1} parent=1 // pred_check
      _
    $region31: #{tpu_custom_call.1} parent=1 // pred_check_branch
      %98 = sbr.rel (0) target = $region33
    $region32: #{tpu_custom_call.1} parent=1 // pred_region
      %s100 = ssub.s32 16, 16
      %101 = vsyncadd [#allocation13], %s100
      %s103 = sshll.u32 [#allocation12], 4
      %s104 = int_to_ptr.vmem [resolvable:$true] %s103
      %106 = dma.hbm_to_vmem [thread:$0]  %s7, 16, %s104, [#allocation13]
    $region33: #{tpu_custom_call.1} parent=1 // pred_fallthru
      _
    // Predicated region
    $region34: #{tpu_custom_call.1} parent=1 // pred_check
      _
    $region35: #{tpu_custom_call.1} parent=1 // pred_check_branch
      %108 = sbr.rel (0) target = $region37
    $region36: #{tpu_custom_call.1} parent=1 // pred_region
      %s110 = ssub.s32 16, 16
      %111 = vsyncadd [#allocation13], %s110
      %s113 = sshll.u32 [#allocation14], 4
      %s114 = int_to_ptr.vmem [resolvable:$true] %s113
      %116 = dma.hbm_to_vmem [thread:$0]  %s8, 16, %s114, [#allocation13]
    $region37: #{tpu_custom_call.1} parent=1 // pred_fallthru
      _
    // Predicated region
    $region38: #{tpu_custom_call.1} parent=1 // pred_check
      _
    $region39: #{tpu_custom_call.1} parent=1 // pred_check_branch
      %118 = sbr.rel (0) target = $region41
    $region40: #{tpu_custom_call.1} parent=1 // pred_region
      %s120 = ssub.s32 16, 16
      %121 = vsyncadd [#allocation16], %s120
      %s123 = sshll.u32 [#allocation15], 4
      %s124 = int_to_ptr.vmem [resolvable:$true] %s123
      %126 = dma.hbm_to_vmem [thread:$0]  %s9, 16, %s124, [#allocation16]
    $region41: #{tpu_custom_call.1} parent=1 // pred_fallthru
      _
    // Predicated region
    $region42: #{tpu_custom_call.1} parent=1 // pred_check
      _
    $region43: #{tpu_custom_call.1} parent=1 // pred_check_branch
      %128 = sbr.rel (0) target = $region45
    $region44: #{tpu_custom_call.1} parent=1 // pred_region
      _
    $region45: #{tpu_custom_call.1} parent=1 // pred_fallthru
      _
    // Predicated region
    $region46: #{tpu_custom_call.1} parent=1 // pred_check
      _
    $region47: #{tpu_custom_call.1} parent=1 // pred_check_branch
      %130 = sbr.rel (0) target = $region49
    $region48: #{tpu_custom_call.1} parent=1 // pred_region
      %s132 = ssub.s32 16, 16
      %133 = vsyncadd [#allocation16], %s132
      %s135 = sshll.u32 [#allocation17], 4
      %s136 = int_to_ptr.vmem [resolvable:$true] %s135
      %138 = dma.hbm_to_vmem [thread:$0]  %s11, 16, %s136, [#allocation16]
    $region49: #{tpu_custom_call.1} parent=1 // pred_fallthru
      _
    // Predicated region
    $region50: #{tpu_custom_call.1} parent=1 // pred_check
      _
    $region51: #{tpu_custom_call.1} parent=1 // pred_check_branch
      %140 = sbr.rel (0) target = $region53
    $region52: #{tpu_custom_call.1} parent=1 // pred_region
      _
    $region53: #{tpu_custom_call.1} parent=1 // pred_fallthru
      _
    // Predicated region
    $region54: #{tpu_custom_call.1} parent=1 // pred_check
      _
    $region55: #{tpu_custom_call.1} parent=1 // pred_check_branch
      %142 = sbr.rel (0) target = $region57
    $region56: #{tpu_custom_call.1} parent=1 // pred_region
      %s144 = ssub.s32 16, 16
      %145 = vsyncadd [#allocation19], %s144
      %s147 = sshll.u32 [#allocation18], 4
      %s148 = int_to_ptr.vmem [resolvable:$true] %s147
      %150 = dma.hbm_to_vmem [thread:$0]  %s13, 16, %s148, [#allocation19]
    $region57: #{tpu_custom_call.1} parent=1 // pred_fallthru
      _
    // Predicated region
    $region58: #{tpu_custom_call.1} parent=1 // pred_check
      _
    $region59: #{tpu_custom_call.1} parent=1 // pred_check_branch
      %152 = sbr.rel (0) target = $region61
    $region60: #{tpu_custom_call.1} parent=1 // pred_region
      %s154 = ssub.s32 16, 16
      %155 = vsyncadd [#allocation19], %s154
      %s157 = sshll.u32 [#allocation20], 4
      %s158 = int_to_ptr.vmem [resolvable:$true] %s157
      %160 = dma.hbm_to_vmem [thread:$0]  %s14, 16, %s158, [#allocation19]
    $region61: #{tpu_custom_call.1} parent=1 // pred_fallthru
      _
    // Predicated region
    $region62: #{tpu_custom_call.1} parent=1 // pred_check
      _
    $region63: #{tpu_custom_call.1} parent=1 // pred_check_branch
      %162 = sbr.rel (0) target = $region65
    $region64: #{tpu_custom_call.1} parent=1 // pred_region
      %s164 = ssub.s32 16, 16
      %165 = vsyncadd [#allocation22], %s164
      %s167 = sshll.u32 [#allocation21], 4
      %s168 = int_to_ptr.vmem [resolvable:$true] %s167
      %170 = dma.hbm_to_vmem [thread:$0]  %s15, 16, %s168, [#allocation22]
    $region65: #{tpu_custom_call.1} parent=1 // pred_fallthru
      _
    // Predicated region
    $region66: #{tpu_custom_call.1} parent=1 // pred_check
      _
    $region67: #{tpu_custom_call.1} parent=1 // pred_check_branch
      %172 = sbr.rel (0) target = $region69
    $region68: #{tpu_custom_call.1} parent=1 // pred_region
      _
    $region69: #{tpu_custom_call.1} parent=1 // pred_fallthru
      _
    // Predicated region
    $region70: #{tpu_custom_call.1} parent=1 // pred_check
      _
    $region71: #{tpu_custom_call.1} parent=1 // pred_check_branch
      %174 = sbr.rel (0) target = $region73
    $region72: #{tpu_custom_call.1} parent=1 // pred_region
      %s176 = ssub.s32 16, 16
      %177 = vsyncadd [#allocation22], %s176
      %s179 = sshll.u32 [#allocation23], 4
      %s180 = int_to_ptr.vmem [resolvable:$true] %s179
      %182 = dma.hbm_to_vmem [thread:$0]  %s17, 16, %s180, [#allocation22]
    $region73: #{tpu_custom_call.1} parent=1 // pred_fallthru
      _
    // Predicated region
    $region74: #{tpu_custom_call.1} parent=1 // pred_check
      _
    $region75: #{tpu_custom_call.1} parent=1 // pred_check_branch
      %184 = sbr.rel (0) target = $region77
    $region76: #{tpu_custom_call.1} parent=1 // pred_region
      _
    $region77: #{tpu_custom_call.1} parent=1 // pred_fallthru
      _
    // Predicated region
    $region78: #{tpu_custom_call.1} parent=1 // pred_check
      _
    $region79: #{tpu_custom_call.1} parent=1 // pred_check_branch
      %186 = sbr.rel (0) target = $region81
    $region80: #{tpu_custom_call.1} parent=1 // pred_region
      _
    $region81: #{tpu_custom_call.1} parent=1 // pred_fallthru
      _
    // Predicated region
    $region82: #{tpu_custom_call.1} parent=1 // pred_check
      _
    $region83: #{tpu_custom_call.1} parent=1 // pred_check_branch
      %188 = sbr.rel (0) target = $region85
    $region84: #{tpu_custom_call.1} parent=1 // pred_region
      _
    $region85: #{tpu_custom_call.1} parent=1 // pred_fallthru
      _
    // Predicated region
    $region86: #{tpu_custom_call.1} parent=1 // pred_check
      _
    $region87: #{tpu_custom_call.1} parent=1 // pred_check_branch
      %190 = sbr.rel (0) target = $region89
    $region88: #{tpu_custom_call.1} parent=1 // pred_region
      _
    $region89: #{tpu_custom_call.1} parent=1 // pred_fallthru
      _
    // Predicated region
    $region90: #{tpu_custom_call.1} parent=1 // pred_check
      _
    $region91: #{tpu_custom_call.1} parent=1 // pred_check_branch
      %192 = sbr.rel (0) target = $region93
    $region92: #{tpu_custom_call.1} parent=1 // pred_region
      _
    $region93: #{tpu_custom_call.1} parent=1 // pred_fallthru
      _
    // Predicated region
    $region94: #{tpu_custom_call.1} parent=1 // pred_check
      _
    $region95: #{tpu_custom_call.1} parent=1 // pred_check_branch
      %194 = sbr.rel (0) target = $region97
    $region96: #{tpu_custom_call.1} parent=1 // pred_region
      _
    $region97: #{tpu_custom_call.1} parent=1 // pred_fallthru
      _
    // Predicated region
    $region98: #{tpu_custom_call.1} parent=1 // pred_check
      _
    $region99: #{tpu_custom_call.1} parent=1 // pred_check_branch
      %196 = sbr.rel (0) target = $region101
    $region100: #{tpu_custom_call.1} parent=1 // pred_region
      _
    $region101: #{tpu_custom_call.1} parent=1 // pred_fallthru
      _
    // Predicated region
    $region102: #{tpu_custom_call.1} parent=1 // pred_check
      _
    $region103: #{tpu_custom_call.1} parent=1 // pred_check_branch
      %198 = sbr.rel (0) target = $region105
    $region104: #{tpu_custom_call.1} parent=1 // pred_region
      _
    $region105: #{tpu_custom_call.1} parent=1 // pred_fallthru
      _
    // Predicated region
    $region106: #{tpu_custom_call.1} parent=1 // pred_check
      _
    $region107: #{tpu_custom_call.1} parent=1 // pred_check_branch
      %200 = sbr.rel (0) target = $region109
    $region108: #{tpu_custom_call.1} parent=1 // pred_region
      _
    $region109: #{tpu_custom_call.1} parent=1 // pred_fallthru
      _
    // Predicated region
    $region110: #{tpu_custom_call.1} parent=1 // pred_check
      _
    $region111: #{tpu_custom_call.1} parent=1 // pred_check_branch
      %202 = sbr.rel (0) target = $region113
    $region112: #{tpu_custom_call.1} parent=1 // pred_region
      _
    $region113: #{tpu_custom_call.1} parent=1 // pred_fallthru
      _
    // Predicated region
    $region114: #{tpu_custom_call.1} parent=1 // pred_check
      _
    $region115: #{tpu_custom_call.1} parent=1 // pred_check_branch
      %204 = sbr.rel (0) target = $region117
    $region116: #{tpu_custom_call.1} parent=1 // pred_region
      %205 = dma.done [#allocation4], 256
    $region117: #{tpu_custom_call.1} parent=1 // pred_fallthru
      _
    // Predicated region
    $region118: #{tpu_custom_call.1} parent=1 // pred_check
      _
    $region119: #{tpu_custom_call.1} parent=1 // pred_check_branch
      %207 = sbr.rel (0) target = $region121
    $region120: #{tpu_custom_call.1} parent=1 // pred_region
      %208 = dma.done [#allocation7], 32
    $region121: #{tpu_custom_call.1} parent=1 // pred_fallthru
      _
    // Predicated region
    $region122: #{tpu_custom_call.1} parent=1 // pred_check
      _
    $region123: #{tpu_custom_call.1} parent=1 // pred_check_branch
      %210 = sbr.rel (0) target = $region125
    $region124: #{tpu_custom_call.1} parent=1 // pred_region
      %211 = dma.done [#allocation7], 16
    $region125: #{tpu_custom_call.1} parent=1 // pred_fallthru
      _
    // Predicated region
    $region126: #{tpu_custom_call.1} parent=1 // pred_check
      _
    $region127: #{tpu_custom_call.1} parent=1 // pred_check_branch
      %213 = sbr.rel (0) target = $region129
    $region128: #{tpu_custom_call.1} parent=1 // pred_region
      %214 = dma.done [#allocation10], 16
    $region129: #{tpu_custom_call.1} parent=1 // pred_fallthru
      _
    // Predicated region
    $region130: #{tpu_custom_call.1} parent=1 // pred_check
      _
    $region131: #{tpu_custom_call.1} parent=1 // pred_check_branch
      %216 = sbr.rel (0) target = $region133
    $region132: #{tpu_custom_call.1} parent=1 // pred_region
      %217 = dma.done [#allocation10], 16
    $region133: #{tpu_custom_call.1} parent=1 // pred_fallthru
      _
    // Predicated region
    $region134: #{tpu_custom_call.1} parent=1 // pred_check
      _
    $region135: #{tpu_custom_call.1} parent=1 // pred_check_branch
      %219 = sbr.rel (0) target = $region137
    $region136: #{tpu_custom_call.1} parent=1 // pred_region
      %220 = dma.done [#allocation13], 16
    $region137: #{tpu_custom_call.1} parent=1 // pred_fallthru
      _
    // Predicated region
    $region138: #{tpu_custom_call.1} parent=1 // pred_check
      _
    $region139: #{tpu_custom_call.1} parent=1 // pred_check_branch
      %222 = sbr.rel (0) target = $region141
    $region140: #{tpu_custom_call.1} parent=1 // pred_region
      %223 = dma.done [#allocation13], 16
    $region141: #{tpu_custom_call.1} parent=1 // pred_fallthru
      _
    // Predicated region
    $region142: #{tpu_custom_call.1} parent=1 // pred_check
      _
    $region143: #{tpu_custom_call.1} parent=1 // pred_check_branch
      %225 = sbr.rel (0) target = $region145
    $region144: #{tpu_custom_call.1} parent=1 // pred_region
      %226 = dma.done [#allocation16], 16
    $region145: #{tpu_custom_call.1} parent=1 // pred_fallthru
      _
    // Predicated region
    $region146: #{tpu_custom_call.1} parent=1 // pred_check
      _
    $region147: #{tpu_custom_call.1} parent=1 // pred_check_branch
      %228 = sbr.rel (0) target = $region149
    $region148: #{tpu_custom_call.1} parent=1 // pred_region
      %229 = dma.done [#allocation16], 16
    $region149: #{tpu_custom_call.1} parent=1 // pred_fallthru
      _
    // Predicated region
    $region150: #{tpu_custom_call.1} parent=1 // pred_check
      _
    $region151: #{tpu_custom_call.1} parent=1 // pred_check_branch
      %231 = sbr.rel (0) target = $region153
    $region152: #{tpu_custom_call.1} parent=1 // pred_region
      %232 = dma.done [#allocation19], 16
    $region153: #{tpu_custom_call.1} parent=1 // pred_fallthru
      _
    // Predicated region
    $region154: #{tpu_custom_call.1} parent=1 // pred_check
      _
    $region155: #{tpu_custom_call.1} parent=1 // pred_check_branch
      %234 = sbr.rel (0) target = $region157
    $region156: #{tpu_custom_call.1} parent=1 // pred_region
      %235 = dma.done [#allocation19], 16
    $region157: #{tpu_custom_call.1} parent=1 // pred_fallthru
      _
    // Predicated region
    $region158: #{tpu_custom_call.1} parent=1 // pred_check
      _
    $region159: #{tpu_custom_call.1} parent=1 // pred_check_branch
      %237 = sbr.rel (0) target = $region161
    $region160: #{tpu_custom_call.1} parent=1 // pred_region
      %238 = dma.done [#allocation22], 16
    $region161: #{tpu_custom_call.1} parent=1 // pred_fallthru
      _
    // Predicated region
    $region162: #{tpu_custom_call.1} parent=1 // pred_check
      _
    $region163: #{tpu_custom_call.1} parent=1 // pred_check_branch
      %240 = sbr.rel (0) target = $region165
    $region164: #{tpu_custom_call.1} parent=1 // pred_region
      %241 = dma.done [#allocation22], 16
    $region165: #{tpu_custom_call.1} parent=1 // pred_fallthru
      _
    %v242 = vld [vmem:[#allocation3] sm:$0xff]
    %v243 = vld [vmem:[#allocation3 + $0x8] sm:$0xff]
    %v244 = vld [vmem:[#allocation8] sm:$0x1]
    %v245 = vld [vmem:[#allocation9] sm:$0x1]
    %vm246 = vcmask 261120
    %v247 = vsel %vm246, %v242, 0.0
    %248 = vadd.xlane.f32.xlu0 %v247
    %v249 = vpop.xlane.xlu0 %248
    %v250 = vsel %vm246, %v243, 0.0
    %251 = vadd.xlane.f32.xlu0 %v250
    %v252 = vpop.xlane.xlu0 %251
    %v253 = vrcp.pop 32.0
    %v254 = vmul.f32 %v249, %v253
    %v255 = vmul.f32 %v252, %v253
    %v256 = vsub.f32 %v242, %v254
    %v257 = vsub.f32 %v243, %v255
    %v258 = vmul.f32 %v256, %v256
    %v259 = vmul.f32 %v257, %v257
    %v260 = vsel %vm246, %v258, 0.0
    %261 = vadd.xlane.f32.xlu0 %v260
    %v262 = vpop.xlane.xlu0 %261
    %v263 = vsel %vm246, %v259, 0.0
    %264 = vadd.xlane.f32.xlu0 %v263
    %v265 = vpop.xlane.xlu0 %264
    %v266 = vmul.f32 %v262, %v253
    %v267 = vmul.f32 %v265, %v253
    %v268 = vadd.f32 %v266, 1e-12
    %v269 = vadd.f32 %v267, 1e-12
    %v270 = vrsqrt.pop %v268
    %v271 = vrsqrt.pop %v269
    %v272 = vmul.f32 %v256, %v270
    %v273 = vmul.f32 %v257, %v271
    %v275 = vlaneseq
    %v276 = vshrl.u32 %v275, 7
    %v277 = vsub.s32 0, %v276
    %v278 = vrot.slane %v244, %v277
    %v280 = vmul.f32 %v272, %v278
    %v281 = vmul.f32 %v273, %v278
    %v283 = vlaneseq
    %v284 = vshrl.u32 %v283, 7
    %v285 = vsub.s32 0, %v284
    %v286 = vrot.slane %v245, %v285
    %v288 = vadd.f32 %v280, %v286
    %v289 = vadd.f32 %v281, %v286
    %v290 = vld [vmem:[%s4] sm:$0xff]
    %v291 = vld [vmem:[%s4 + $0x8] sm:$0xff]
    %v292 = vld [vmem:[%s4 + $0x10] sm:$0xff]
    %v293 = vld [vmem:[%s4 + $0x18] sm:$0xff]
    %v294 = vld [vmem:[#allocation11] sm:$0x1]
    %v296 = vlaneseq
    %v297 = vshrl.u32 %v296, 7
    %v298 = vsub.s32 0, %v297
    %v299 = vrot.slane %v294, %v298
    %v302 = vsel %vm246, %v288, 0
    %v305 = vsel %vm246, %v289, 0
    %307 = vmatprep.subr.mxu0 0.0
    %308 = vmatpush1.msra.mxu0 %v290
    %309 = vmatprep.subr.mxu0 0.0
    %310 = vmatpush1.msra.mxu0 %v291
    %311 = vmatprep.subr.mxu0 0.0
    %312 = vmatpush1.msra.mxu0 %v292
    %313 = vmatprep.subr.mxu0 0.0
    %314 = vmatpush1.msra.mxu0 %v293
    %315 = vmatprep.subr.mxu0 0.0
    %316 = vmatpush1.msra.mxu0 0.0
    %317 = vmatprep.subr.mxu0 0.0
    %318 = vmatpush1.msra.mxu0 0.0
    %319 = vmatprep.subr.mxu0 0.0
    %320 = vmatpush1.msra.mxu0 0.0
    %321 = vmatprep.subr.mxu0 0.0
    %322 = vmatpush1.msra.mxu0 0.0
    %323 = vmatprep.subr.mxu0 0.0
    %324 = vmatpush1.msra.mxu0 0.0
    %325 = vmatprep.subr.mxu0 0.0
    %326 = vmatpush1.msra.mxu0 0.0
    %327 = vmatprep.subr.mxu0 0.0
    %328 = vmatpush1.msra.mxu0 0.0
    %329 = vmatprep.subr.mxu0 0.0
    %330 = vmatpush1.msra.mxu0 0.0
    %331 = vmatprep.subr.mxu0 0.0
    %332 = vmatpush1.msra.mxu0 0.0
    %333 = vmatprep.subr.mxu0 0.0
    %334 = vmatpush1.msra.mxu0 0.0
    %335 = vmatprep.subr.mxu0 0.0
    %336 = vmatpush1.msra.mxu0 0.0
    %337 = vmatprep.subr.mxu0 0.0
    %338 = vmatpush1.msra.mxu0 0.0
    %339 = vmatprep.subr.mxu0 0.0
    %340 = vmatpush1.msra.mxu0 0.0
    %341 = vmatprep.subr.mxu0 0.0
    %342 = vmatpush1.msra.mxu0 0.0
    %343 = vmatprep.subr.mxu0 0.0
    %344 = vmatpush1.msra.mxu0 0.0
    %345 = vmatprep.subr.mxu0 0.0
    %346 = vmatpush1.msra.mxu0 0.0
    %347 = vmatprep.subr.mxu0 0.0
    %348 = vmatpush1.msra.mxu0 0.0
    %349 = vmatprep.subr.mxu0 0.0
    %350 = vmatpush1.msra.mxu0 0.0
    %351 = vmatprep.subr.mxu0 0.0
    %352 = vmatpush1.msra.mxu0 0.0
    %353 = vmatprep.subr.mxu0 0.0
    %354 = vmatpush1.msra.mxu0 0.0
    %355 = vmatprep.subr.mxu0 0.0
    %356 = vmatpush1.msra.mxu0 0.0
    %357 = vmatprep.subr.mxu0 0.0
    %358 = vmatpush1.msra.mxu0 0.0
    %359 = vmatprep.subr.mxu0 0.0
    %360 = vmatpush1.msra.mxu0 0.0
    %361 = vmatprep.subr.mxu0 0.0
    %362 = vmatpush1.msra.mxu0 0.0
    %363 = vmatprep.subr.mxu0 0.0
    %364 = vmatpush1.msra.mxu0 0.0
    %365 = vmatprep.subr.mxu0 0.0
    %366 = vmatpush1.msra.mxu0 0.0
    %367 = vmatprep.subr.mxu0 0.0
    %368 = vmatpush1.msra.mxu0 0.0
    %369 = vmatprep.subr.mxu0 0.0
    %370 = vmatpush1.msra.mxu0 0.0
    %371 = vmatprep.mubr.f32.mxu0 0.0
    %372 = vmatmul.mubr.f32.gmra.mrb[0].mxu0 %v302
    %v373 = vpop.f32.mrb[0].mxu0
    %v374 = vadd.f32 %v299, %v373
    %v375 = vpop.f32.mrb[0].mxu0
    %376 = vmatprep.mubr.f32.mxu0 0.0
    %377 = vmatmul.mubr.f32.gmra.mrb[0].mxu0 %v305
    %v378 = vpop.f32.mrb[0].mxu0
    %v379 = vadd.f32 %v299, %v378
    %v380 = vpop.f32.mrb[0].mxu0
    %381 = vdwg.mxu0
    %v382 = vld [vmem:[#allocation6] sm:$0x1]
    %v383 = vlaneseq
    %v384 = vshrl.u32 %v383, 7
    %v385 = vsub.s32 0, %v384
    %v386 = vrot.slane %v382, %v385
    %388 = vrot.lane.b32.xlu0 %v374, 96
    %v389 = vpop.permute.xlu0 %388
    %vm390 = vcmask 130048
    %v391 = vsel %vm390, %v374, 0
    %v393 = vsel %vm390, %v389, 0
    %395 = vmatprep.subr.mxu0 0.0
    %396 = vmatpush1.xpose.msra.mxu0 %v393
    %397 = vmatprep.subr.mxu0 0.0
    %398 = vmatpush1.xpose.msra.mxu0 0.0
    %399 = vmatprep.subr.mxu0 0.0
    %400 = vmatpush1.xpose.msra.mxu0 0.0
    %401 = vmatprep.subr.mxu0 0.0
    %402 = vmatpush1.xpose.msra.mxu0 0.0
    %403 = vmatprep.subr.mxu0 0.0
    %404 = vmatpush1.xpose.msra.mxu0 0.0
    %405 = vmatprep.subr.mxu0 0.0
    %406 = vmatpush1.xpose.msra.mxu0 0.0
    %407 = vmatprep.subr.mxu0 0.0
    %408 = vmatpush1.xpose.msra.mxu0 0.0
    %409 = vmatprep.subr.mxu0 0.0
    %410 = vmatpush1.xpose.msra.mxu0 0.0
    %411 = vmatprep.subr.mxu0 0.0
    %412 = vmatpush1.xpose.msra.mxu0 0.0
    %413 = vmatprep.subr.mxu0 0.0
    %414 = vmatpush1.xpose.msra.mxu0 0.0
    %415 = vmatprep.subr.mxu0 0.0
    %416 = vmatpush1.xpose.msra.mxu0 0.0
    %417 = vmatprep.subr.mxu0 0.0
    %418 = vmatpush1.xpose.msra.mxu0 0.0
    %419 = vmatprep.subr.mxu0 0.0
    %420 = vmatpush1.xpose.msra.mxu0 0.0
    %421 = vmatprep.subr.mxu0 0.0
    %422 = vmatpush1.xpose.msra.mxu0 0.0
    %423 = vmatprep.subr.mxu0 0.0
    %424 = vmatpush1.xpose.msra.mxu0 0.0
    %425 = vmatprep.subr.mxu0 0.0
    %426 = vmatpush1.xpose.msra.mxu0 0.0
    %427 = vmatprep.subr.mxu0 0.0
    %428 = vmatpush1.xpose.msra.mxu0 0.0
    %429 = vmatprep.subr.mxu0 0.0
    %430 = vmatpush1.xpose.msra.mxu0 0.0
    %431 = vmatprep.subr.mxu0 0.0
    %432 = vmatpush1.xpose.msra.mxu0 0.0
    %433 = vmatprep.subr.mxu0 0.0
    %434 = vmatpush1.xpose.msra.mxu0 0.0
    %435 = vmatprep.subr.mxu0 0.0
    %436 = vmatpush1.xpose.msra.mxu0 0.0
    %437 = vmatprep.subr.mxu0 0.0
    %438 = vmatpush1.xpose.msra.mxu0 0.0
    %439 = vmatprep.subr.mxu0 0.0
    %440 = vmatpush1.xpose.msra.mxu0 0.0
    %441 = vmatprep.subr.mxu0 0.0
    %442 = vmatpush1.xpose.msra.mxu0 0.0
    %443 = vmatprep.subr.mxu0 0.0
    %444 = vmatpush1.xpose.msra.mxu0 0.0
    %445 = vmatprep.subr.mxu0 0.0
    %446 = vmatpush1.xpose.msra.mxu0 0.0
    %447 = vmatprep.subr.mxu0 0.0
    %448 = vmatpush1.xpose.msra.mxu0 0.0
    %449 = vmatprep.subr.mxu0 0.0
    %450 = vmatpush1.xpose.msra.mxu0 0.0
    %451 = vmatprep.subr.mxu0 0.0
    %452 = vmatpush1.xpose.msra.mxu0 0.0
    %453 = vmatprep.subr.mxu0 0.0
    %454 = vmatpush1.xpose.msra.mxu0 0.0
    %455 = vmatprep.subr.mxu0 0.0
    %456 = vmatpush1.xpose.msra.mxu0 0.0
    %457 = vmatprep.subr.mxu0 0.0
    %458 = vmatpush1.xpose.msra.mxu0 0.0
    %459 = vmatprep.mubr.f32.mxu0 0.0
    %460 = vmatmul.mubr.f32.gmra.mrb[0].mxu0 %v391
    %v461 = vpop.f32.mrb[0].mxu0
    %v462 = vadd.f32 %v386, %v461
    %v463 = vpop.f32.mrb[0].mxu0
    %464 = vdwg.mxu0
    %vm465 = vcmask 64512
    %v466 = vsel %vm465, %v462, -inf
    %467 = vmax.xlane.f32.xlu0 %v466
    %v468 = vpop.xlane.xlu0 %467
    %v469 = vsub.f32 %v462, %v468
    %v470 = vmul.f32 %v469, 1.442695
    %v471 = vpow.pop %v470
    %v472 = vsel %vm465, %v471, 0.0
    %473 = vadd.xlane.f32.xlu0 %v472
    %v474 = vpop.xlane.xlu0 %473
    %v475 = vrcp.pop %v474
    %v476 = vmul.f32 %v471, %v475
    %477 = vrot.lane.b32.xlu0 %v374, 64
    %v478 = vpop.permute.xlu0 %477
    %v481 = vsel %vm465, %v476, 0
    %483 = vmatprep.subr.mxu0 0.0
    %484 = vmatpush1.msra.mxu0 %v478
    %485 = vmatprep.subr.mxu0 0.0
    %486 = vmatpush1.msra.mxu0 0.0
    %487 = vmatprep.subr.mxu0 0.0
    %488 = vmatpush1.msra.mxu0 0.0
    %489 = vmatprep.subr.mxu0 0.0
    %490 = vmatpush1.msra.mxu0 0.0
    %491 = vmatprep.subr.mxu0 0.0
    %492 = vmatpush1.msra.mxu0 0.0
    %493 = vmatprep.subr.mxu0 0.0
    %494 = vmatpush1.msra.mxu0 0.0
    %495 = vmatprep.subr.mxu0 0.0
    %496 = vmatpush1.msra.mxu0 0.0
    %497 = vmatprep.subr.mxu0 0.0
    %498 = vmatpush1.msra.mxu0 0.0
    %499 = vmatprep.subr.mxu0 0.0
    %500 = vmatpush1.msra.mxu0 0.0
    %501 = vmatprep.subr.mxu0 0.0
    %502 = vmatpush1.msra.mxu0 0.0
    %503 = vmatprep.subr.mxu0 0.0
    %504 = vmatpush1.msra.mxu0 0.0
    %505 = vmatprep.subr.mxu0 0.0
    %506 = vmatpush1.msra.mxu0 0.0
    %507 = vmatprep.subr.mxu0 0.0
    %508 = vmatpush1.msra.mxu0 0.0
    %509 = vmatprep.subr.mxu0 0.0
    %510 = vmatpush1.msra.mxu0 0.0
    %511 = vmatprep.subr.mxu0 0.0
    %512 = vmatpush1.msra.mxu0 0.0
    %513 = vmatprep.subr.mxu0 0.0
    %514 = vmatpush1.msra.mxu0 0.0
    %515 = vmatprep.subr.mxu0 0.0
    %516 = vmatpush1.msra.mxu0 0.0
    %517 = vmatprep.subr.mxu0 0.0
    %518 = vmatpush1.msra.mxu0 0.0
    %519 = vmatprep.subr.mxu0 0.0
    %520 = vmatpush1.msra.mxu0 0.0
    %521 = vmatprep.subr.mxu0 0.0
    %522 = vmatpush1.msra.mxu0 0.0
    %523 = vmatprep.subr.mxu0 0.0
    %524 = vmatpush1.msra.mxu0 0.0
    %525 = vmatprep.subr.mxu0 0.0
    %526 = vmatpush1.msra.mxu0 0.0
    %527 = vmatprep.subr.mxu0 0.0
    %528 = vmatpush1.msra.mxu0 0.0
    %529 = vmatprep.subr.mxu0 0.0
    %530 = vmatpush1.msra.mxu0 0.0
    %531 = vmatprep.subr.mxu0 0.0
    %532 = vmatpush1.msra.mxu0 0.0
    %533 = vmatprep.subr.mxu0 0.0
    %534 = vmatpush1.msra.mxu0 0.0
    %535 = vmatprep.subr.mxu0 0.0
    %536 = vmatpush1.msra.mxu0 0.0
    %537 = vmatprep.subr.mxu0 0.0
    %538 = vmatpush1.msra.mxu0 0.0
    %539 = vmatprep.subr.mxu0 0.0
    %540 = vmatpush1.msra.mxu0 0.0
    %541 = vmatprep.subr.mxu0 0.0
    %542 = vmatpush1.msra.mxu0 0.0
    %543 = vmatprep.subr.mxu0 0.0
    %544 = vmatpush1.msra.mxu0 0.0
    %545 = vmatprep.subr.mxu0 0.0
    %546 = vmatpush1.msra.mxu0 0.0
    %547 = vmatprep.mubr.f32.mxu0 0.0
    %548 = vmatmul.mubr.f32.gmra.mrb[0].mxu0 %v481
    %v549 = vpop.f32.mrb[0].mxu0
    %v550 = vadd.f32 0.0, %v549
    %v551 = vpop.f32.mrb[0].mxu0
    %552 = vdwg.mxu0
    %553 = vst.msk [vmem:[#allocation2] sm:$0xff] %vm390, %v550
    %554 = vrot.lane.b32.xlu0 %v374, 112
    %v555 = vpop.permute.xlu0 %554
    %556 = vrot.lane.b32.xlu0 %v374, 80
    %v557 = vpop.permute.xlu0 %556
    %v558 = vsel %vm390, %v555, 0
    %v560 = vsel %vm390, %v557, 0
    %562 = vmatprep.subr.mxu0 0.0
    %563 = vmatpush1.xpose.msra.mxu0 %v560
    %564 = vmatprep.subr.mxu0 0.0
    %565 = vmatpush1.xpose.msra.mxu0 0.0
    %566 = vmatprep.subr.mxu0 0.0
    %567 = vmatpush1.xpose.msra.mxu0 0.0
    %568 = vmatprep.subr.mxu0 0.0
    %569 = vmatpush1.xpose.msra.mxu0 0.0
    %570 = vmatprep.subr.mxu0 0.0
    %571 = vmatpush1.xpose.msra.mxu0 0.0
    %572 = vmatprep.subr.mxu0 0.0
    %573 = vmatpush1.xpose.msra.mxu0 0.0
    %574 = vmatprep.subr.mxu0 0.0
    %575 = vmatpush1.xpose.msra.mxu0 0.0
    %576 = vmatprep.subr.mxu0 0.0
    %577 = vmatpush1.xpose.msra.mxu0 0.0
    %578 = vmatprep.subr.mxu0 0.0
    %579 = vmatpush1.xpose.msra.mxu0 0.0
    %580 = vmatprep.subr.mxu0 0.0
    %581 = vmatpush1.xpose.msra.mxu0 0.0
    %582 = vmatprep.subr.mxu0 0.0
    %583 = vmatpush1.xpose.msra.mxu0 0.0
    %584 = vmatprep.subr.mxu0 0.0
    %585 = vmatpush1.xpose.msra.mxu0 0.0
    %586 = vmatprep.subr.mxu0 0.0
    %587 = vmatpush1.xpose.msra.mxu0 0.0
    %588 = vmatprep.subr.mxu0 0.0
    %589 = vmatpush1.xpose.msra.mxu0 0.0
    %590 = vmatprep.subr.mxu0 0.0
    %591 = vmatpush1.xpose.msra.mxu0 0.0
    %592 = vmatprep.subr.mxu0 0.0
    %593 = vmatpush1.xpose.msra.mxu0 0.0
    %594 = vmatprep.subr.mxu0 0.0
    %595 = vmatpush1.xpose.msra.mxu0 0.0
    %596 = vmatprep.subr.mxu0 0.0
    %597 = vmatpush1.xpose.msra.mxu0 0.0
    %598 = vmatprep.subr.mxu0 0.0
    %599 = vmatpush1.xpose.msra.mxu0 0.0
    %600 = vmatprep.subr.mxu0 0.0
    %601 = vmatpush1.xpose.msra.mxu0 0.0
    %602 = vmatprep.subr.mxu0 0.0
    %603 = vmatpush1.xpose.msra.mxu0 0.0
    %604 = vmatprep.subr.mxu0 0.0
    %605 = vmatpush1.xpose.msra.mxu0 0.0
    %606 = vmatprep.subr.mxu0 0.0
    %607 = vmatpush1.xpose.msra.mxu0 0.0
    %608 = vmatprep.subr.mxu0 0.0
    %609 = vmatpush1.xpose.msra.mxu0 0.0
    %610 = vmatprep.subr.mxu0 0.0
    %611 = vmatpush1.xpose.msra.mxu0 0.0
    %612 = vmatprep.subr.mxu0 0.0
    %613 = vmatpush1.xpose.msra.mxu0 0.0
    %614 = vmatprep.subr.mxu0 0.0
    %615 = vmatpush1.xpose.msra.mxu0 0.0
    %616 = vmatprep.subr.mxu0 0.0
    %617 = vmatpush1.xpose.msra.mxu0 0.0
    %618 = vmatprep.subr.mxu0 0.0
    %619 = vmatpush1.xpose.msra.mxu0 0.0
    %620 = vmatprep.subr.mxu0 0.0
    %621 = vmatpush1.xpose.msra.mxu0 0.0
    %622 = vmatprep.subr.mxu0 0.0
    %623 = vmatpush1.xpose.msra.mxu0 0.0
    %624 = vmatprep.subr.mxu0 0.0
    %625 = vmatpush1.xpose.msra.mxu0 0.0
    %626 = vmatprep.mubr.f32.mxu0 0.0
    %627 = vmatmul.mubr.f32.gmra.mrb[0].mxu0 %v558
    %v628 = vpop.f32.mrb[0].mxu0
    %v629 = vadd.f32 %v386, %v628
    %v630 = vpop.f32.mrb[0].mxu0
    %631 = vdwg.mxu0
    %v632 = vsel %vm465, %v629, -inf
    %633 = vmax.xlane.f32.xlu0 %v632
    %v634 = vpop.xlane.xlu0 %633
    %v635 = vsub.f32 %v629, %v634
    %v636 = vmul.f32 %v635, 1.442695
    %v637 = vpow.pop %v636
    %v638 = vsel %vm465, %v637, 0.0
    %639 = vadd.xlane.f32.xlu0 %v638
    %v640 = vpop.xlane.xlu0 %639
    %v641 = vrcp.pop %v640
    %v642 = vmul.f32 %v637, %v641
    %643 = vrot.lane.b32.xlu0 %v374, 48
    %v644 = vpop.permute.xlu0 %643
    %v647 = vsel %vm465, %v642, 0
    %649 = vmatprep.subr.mxu0 0.0
    %650 = vmatpush1.msra.mxu0 %v644
    %651 = vmatprep.subr.mxu0 0.0
    %652 = vmatpush1.msra.mxu0 0.0
    %653 = vmatprep.subr.mxu0 0.0
    %654 = vmatpush1.msra.mxu0 0.0
    %655 = vmatprep.subr.mxu0 0.0
    %656 = vmatpush1.msra.mxu0 0.0
    %657 = vmatprep.subr.mxu0 0.0
    %658 = vmatpush1.msra.mxu0 0.0
    %659 = vmatprep.subr.mxu0 0.0
    %660 = vmatpush1.msra.mxu0 0.0
    %661 = vmatprep.subr.mxu0 0.0
    %662 = vmatpush1.msra.mxu0 0.0
    %663 = vmatprep.subr.mxu0 0.0
    %664 = vmatpush1.msra.mxu0 0.0
    %665 = vmatprep.subr.mxu0 0.0
    %666 = vmatpush1.msra.mxu0 0.0
    %667 = vmatprep.subr.mxu0 0.0
    %668 = vmatpush1.msra.mxu0 0.0
    %669 = vmatprep.subr.mxu0 0.0
    %670 = vmatpush1.msra.mxu0 0.0
    %671 = vmatprep.subr.mxu0 0.0
    %672 = vmatpush1.msra.mxu0 0.0
    %673 = vmatprep.subr.mxu0 0.0
    %674 = vmatpush1.msra.mxu0 0.0
    %675 = vmatprep.subr.mxu0 0.0
    %676 = vmatpush1.msra.mxu0 0.0
    %677 = vmatprep.subr.mxu0 0.0
    %678 = vmatpush1.msra.mxu0 0.0
    %679 = vmatprep.subr.mxu0 0.0
    %680 = vmatpush1.msra.mxu0 0.0
    %681 = vmatprep.subr.mxu0 0.0
    %682 = vmatpush1.msra.mxu0 0.0
    %683 = vmatprep.subr.mxu0 0.0
    %684 = vmatpush1.msra.mxu0 0.0
    %685 = vmatprep.subr.mxu0 0.0
    %686 = vmatpush1.msra.mxu0 0.0
    %687 = vmatprep.subr.mxu0 0.0
    %688 = vmatpush1.msra.mxu0 0.0
    %689 = vmatprep.subr.mxu0 0.0
    %690 = vmatpush1.msra.mxu0 0.0
    %691 = vmatprep.subr.mxu0 0.0
    %692 = vmatpush1.msra.mxu0 0.0
    %693 = vmatprep.subr.mxu0 0.0
    %694 = vmatpush1.msra.mxu0 0.0
    %695 = vmatprep.subr.mxu0 0.0
    %696 = vmatpush1.msra.mxu0 0.0
    %697 = vmatprep.subr.mxu0 0.0
    %698 = vmatpush1.msra.mxu0 0.0
    %699 = vmatprep.subr.mxu0 0.0
    %700 = vmatpush1.msra.mxu0 0.0
    %701 = vmatprep.subr.mxu0 0.0
    %702 = vmatpush1.msra.mxu0 0.0
    %703 = vmatprep.subr.mxu0 0.0
    %704 = vmatpush1.msra.mxu0 0.0
    %705 = vmatprep.subr.mxu0 0.0
    %706 = vmatpush1.msra.mxu0 0.0
    %707 = vmatprep.subr.mxu0 0.0
    %708 = vmatpush1.msra.mxu0 0.0
    %709 = vmatprep.subr.mxu0 0.0
    %710 = vmatpush1.msra.mxu0 0.0
    %711 = vmatprep.subr.mxu0 0.0
    %712 = vmatpush1.msra.mxu0 0.0
    %713 = vmatprep.mubr.f32.mxu0 0.0
    %714 = vmatmul.mubr.f32.gmra.mrb[0].mxu0 %v647
    %v715 = vpop.f32.mrb[0].mxu0
    %v716 = vadd.f32 0.0, %v715
    %v717 = vpop.f32.mrb[0].mxu0
    %718 = vdwg.mxu0
    %720 = vrot.lane.b32.xlu0 %v716, 16
    %v721 = vpop.permute.xlu0 %720
    %vm723 = vcmask 261248
    %724 = vst.msk [vmem:[#allocation2] sm:$0xff] %vm723, %v721
    %v725 = vld [vmem:[#allocation6 + $0x1] sm:$0x1]
    %v726 = vlaneseq
    %v727 = vshrl.u32 %v726, 7
    %v728 = vsub.s32 0, %v727
    %v729 = vrot.slane %v725, %v728
    %731 = vrot.lane.b32.xlu0 %v379, 96
    %v732 = vpop.permute.xlu0 %731
    %v733 = vsel %vm390, %v379, 0
    %v735 = vsel %vm390, %v732, 0
    %737 = vmatprep.subr.mxu0 0.0
    %738 = vmatpush1.xpose.msra.mxu0 %v735
    %739 = vmatprep.subr.mxu0 0.0
    %740 = vmatpush1.xpose.msra.mxu0 0.0
    %741 = vmatprep.subr.mxu0 0.0
    %742 = vmatpush1.xpose.msra.mxu0 0.0
    %743 = vmatprep.subr.mxu0 0.0
    %744 = vmatpush1.xpose.msra.mxu0 0.0
    %745 = vmatprep.subr.mxu0 0.0
    %746 = vmatpush1.xpose.msra.mxu0 0.0
    %747 = vmatprep.subr.mxu0 0.0
    %748 = vmatpush1.xpose.msra.mxu0 0.0
    %749 = vmatprep.subr.mxu0 0.0
    %750 = vmatpush1.xpose.msra.mxu0 0.0
    %751 = vmatprep.subr.mxu0 0.0
    %752 = vmatpush1.xpose.msra.mxu0 0.0
    %753 = vmatprep.subr.mxu0 0.0
    %754 = vmatpush1.xpose.msra.mxu0 0.0
    %755 = vmatprep.subr.mxu0 0.0
    %756 = vmatpush1.xpose.msra.mxu0 0.0
    %757 = vmatprep.subr.mxu0 0.0
    %758 = vmatpush1.xpose.msra.mxu0 0.0
    %759 = vmatprep.subr.mxu0 0.0
    %760 = vmatpush1.xpose.msra.mxu0 0.0
    %761 = vmatprep.subr.mxu0 0.0
    %762 = vmatpush1.xpose.msra.mxu0 0.0
    %763 = vmatprep.subr.mxu0 0.0
    %764 = vmatpush1.xpose.msra.mxu0 0.0
    %765 = vmatprep.subr.mxu0 0.0
    %766 = vmatpush1.xpose.msra.mxu0 0.0
    %767 = vmatprep.subr.mxu0 0.0
    %768 = vmatpush1.xpose.msra.mxu0 0.0
    %769 = vmatprep.subr.mxu0 0.0
    %770 = vmatpush1.xpose.msra.mxu0 0.0
    %771 = vmatprep.subr.mxu0 0.0
    %772 = vmatpush1.xpose.msra.mxu0 0.0
    %773 = vmatprep.subr.mxu0 0.0
    %774 = vmatpush1.xpose.msra.mxu0 0.0
    %775 = vmatprep.subr.mxu0 0.0
    %776 = vmatpush1.xpose.msra.mxu0 0.0
    %777 = vmatprep.subr.mxu0 0.0
    %778 = vmatpush1.xpose.msra.mxu0 0.0
    %779 = vmatprep.subr.mxu0 0.0
    %780 = vmatpush1.xpose.msra.mxu0 0.0
    %781 = vmatprep.subr.mxu0 0.0
    %782 = vmatpush1.xpose.msra.mxu0 0.0
    %783 = vmatprep.subr.mxu0 0.0
    %784 = vmatpush1.xpose.msra.mxu0 0.0
    %785 = vmatprep.subr.mxu0 0.0
    %786 = vmatpush1.xpose.msra.mxu0 0.0
    %787 = vmatprep.subr.mxu0 0.0
    %788 = vmatpush1.xpose.msra.mxu0 0.0
    %789 = vmatprep.subr.mxu0 0.0
    %790 = vmatpush1.xpose.msra.mxu0 0.0
    %791 = vmatprep.subr.mxu0 0.0
    %792 = vmatpush1.xpose.msra.mxu0 0.0
    %793 = vmatprep.subr.mxu0 0.0
    %794 = vmatpush1.xpose.msra.mxu0 0.0
    %795 = vmatprep.subr.mxu0 0.0
    %796 = vmatpush1.xpose.msra.mxu0 0.0
    %797 = vmatprep.subr.mxu0 0.0
    %798 = vmatpush1.xpose.msra.mxu0 0.0
    %799 = vmatprep.subr.mxu0 0.0
    %800 = vmatpush1.xpose.msra.mxu0 0.0
    %801 = vmatprep.mubr.f32.mxu0 0.0
    %802 = vmatmul.mubr.f32.gmra.mrb[0].mxu0 %v733
    %v803 = vpop.f32.mrb[0].mxu0
    %v804 = vadd.f32 %v729, %v803
    %v805 = vpop.f32.mrb[0].mxu0
    %806 = vdwg.mxu0
    %v807 = vsel %vm465, %v804, -inf
    %808 = vmax.xlane.f32.xlu0 %v807
    %v809 = vpop.xlane.xlu0 %808
    %v810 = vsub.f32 %v804, %v809
    %v811 = vmul.f32 %v810, 1.442695
    %v812 = vpow.pop %v811
    %v813 = vsel %vm465, %v812, 0.0
    %814 = vadd.xlane.f32.xlu0 %v813
    %v815 = vpop.xlane.xlu0 %814
    %v816 = vrcp.pop %v815
    %v817 = vmul.f32 %v812, %v816
    %818 = vrot.lane.b32.xlu0 %v379, 64
    %v819 = vpop.permute.xlu0 %818
    %v822 = vsel %vm465, %v817, 0
    %824 = vmatprep.subr.mxu0 0.0
    %825 = vmatpush1.msra.mxu0 %v819
    %826 = vmatprep.subr.mxu0 0.0
    %827 = vmatpush1.msra.mxu0 0.0
    %828 = vmatprep.subr.mxu0 0.0
    %829 = vmatpush1.msra.mxu0 0.0
    %830 = vmatprep.subr.mxu0 0.0
    %831 = vmatpush1.msra.mxu0 0.0
    %832 = vmatprep.subr.mxu0 0.0
    %833 = vmatpush1.msra.mxu0 0.0
    %834 = vmatprep.subr.mxu0 0.0
    %835 = vmatpush1.msra.mxu0 0.0
    %836 = vmatprep.subr.mxu0 0.0
    %837 = vmatpush1.msra.mxu0 0.0
    %838 = vmatprep.subr.mxu0 0.0
    %839 = vmatpush1.msra.mxu0 0.0
    %840 = vmatprep.subr.mxu0 0.0
    %841 = vmatpush1.msra.mxu0 0.0
    %842 = vmatprep.subr.mxu0 0.0
    %843 = vmatpush1.msra.mxu0 0.0
    %844 = vmatprep.subr.mxu0 0.0
    %845 = vmatpush1.msra.mxu0 0.0
    %846 = vmatprep.subr.mxu0 0.0
    %847 = vmatpush1.msra.mxu0 0.0
    %848 = vmatprep.subr.mxu0 0.0
    %849 = vmatpush1.msra.mxu0 0.0
    %850 = vmatprep.subr.mxu0 0.0
    %851 = vmatpush1.msra.mxu0 0.0
    %852 = vmatprep.subr.mxu0 0.0
    %853 = vmatpush1.msra.mxu0 0.0
    %854 = vmatprep.subr.mxu0 0.0
    %855 = vmatpush1.msra.mxu0 0.0
    %856 = vmatprep.subr.mxu0 0.0
    %857 = vmatpush1.msra.mxu0 0.0
    %858 = vmatprep.subr.mxu0 0.0
    %859 = vmatpush1.msra.mxu0 0.0
    %860 = vmatprep.subr.mxu0 0.0
    %861 = vmatpush1.msra.mxu0 0.0
    %862 = vmatprep.subr.mxu0 0.0
    %863 = vmatpush1.msra.mxu0 0.0
    %864 = vmatprep.subr.mxu0 0.0
    %865 = vmatpush1.msra.mxu0 0.0
    %866 = vmatprep.subr.mxu0 0.0
    %867 = vmatpush1.msra.mxu0 0.0
    %868 = vmatprep.subr.mxu0 0.0
    %869 = vmatpush1.msra.mxu0 0.0
    %870 = vmatprep.subr.mxu0 0.0
    %871 = vmatpush1.msra.mxu0 0.0
    %872 = vmatprep.subr.mxu0 0.0
    %873 = vmatpush1.msra.mxu0 0.0
    %874 = vmatprep.subr.mxu0 0.0
    %875 = vmatpush1.msra.mxu0 0.0
    %876 = vmatprep.subr.mxu0 0.0
    %877 = vmatpush1.msra.mxu0 0.0
    %878 = vmatprep.subr.mxu0 0.0
    %879 = vmatpush1.msra.mxu0 0.0
    %880 = vmatprep.subr.mxu0 0.0
    %881 = vmatpush1.msra.mxu0 0.0
    %882 = vmatprep.subr.mxu0 0.0
    %883 = vmatpush1.msra.mxu0 0.0
    %884 = vmatprep.subr.mxu0 0.0
    %885 = vmatpush1.msra.mxu0 0.0
    %886 = vmatprep.subr.mxu0 0.0
    %887 = vmatpush1.msra.mxu0 0.0
    %888 = vmatprep.mubr.f32.mxu0 0.0
    %889 = vmatmul.mubr.f32.gmra.mrb[0].mxu0 %v822
    %v890 = vpop.f32.mrb[0].mxu0
    %v891 = vadd.f32 0.0, %v890
    %v892 = vpop.f32.mrb[0].mxu0
    %893 = vdwg.mxu0
    %894 = vst.msk [vmem:[#allocation2 + $0x8] sm:$0xff] %vm390, %v891
    %895 = vrot.lane.b32.xlu0 %v379, 112
    %v896 = vpop.permute.xlu0 %895
    %897 = vrot.lane.b32.xlu0 %v379, 80
    %v898 = vpop.permute.xlu0 %897
    %v899 = vsel %vm390, %v896, 0
    %v901 = vsel %vm390, %v898, 0
    %903 = vmatprep.subr.mxu0 0.0
    %904 = vmatpush1.xpose.msra.mxu0 %v901
    %905 = vmatprep.subr.mxu0 0.0
    %906 = vmatpush1.xpose.msra.mxu0 0.0
    %907 = vmatprep.subr.mxu0 0.0
    %908 = vmatpush1.xpose.msra.mxu0 0.0
    %909 = vmatprep.subr.mxu0 0.0
    %910 = vmatpush1.xpose.msra.mxu0 0.0
    %911 = vmatprep.subr.mxu0 0.0
    %912 = vmatpush1.xpose.msra.mxu0 0.0
    %913 = vmatprep.subr.mxu0 0.0
    %914 = vmatpush1.xpose.msra.mxu0 0.0
    %915 = vmatprep.subr.mxu0 0.0
    %916 = vmatpush1.xpose.msra.mxu0 0.0
    %917 = vmatprep.subr.mxu0 0.0
    %918 = vmatpush1.xpose.msra.mxu0 0.0
    %919 = vmatprep.subr.mxu0 0.0
    %920 = vmatpush1.xpose.msra.mxu0 0.0
    %921 = vmatprep.subr.mxu0 0.0
    %922 = vmatpush1.xpose.msra.mxu0 0.0
    %923 = vmatprep.subr.mxu0 0.0
    %924 = vmatpush1.xpose.msra.mxu0 0.0
    %925 = vmatprep.subr.mxu0 0.0
    %926 = vmatpush1.xpose.msra.mxu0 0.0
    %927 = vmatprep.subr.mxu0 0.0
    %928 = vmatpush1.xpose.msra.mxu0 0.0
    %929 = vmatprep.subr.mxu0 0.0
    %930 = vmatpush1.xpose.msra.mxu0 0.0
    %931 = vmatprep.subr.mxu0 0.0
    %932 = vmatpush1.xpose.msra.mxu0 0.0
    %933 = vmatprep.subr.mxu0 0.0
    %934 = vmatpush1.xpose.msra.mxu0 0.0
    %935 = vmatprep.subr.mxu0 0.0
    %936 = vmatpush1.xpose.msra.mxu0 0.0
    %937 = vmatprep.subr.mxu0 0.0
    %938 = vmatpush1.xpose.msra.mxu0 0.0
    %939 = vmatprep.subr.mxu0 0.0
    %940 = vmatpush1.xpose.msra.mxu0 0.0
    %941 = vmatprep.subr.mxu0 0.0
    %942 = vmatpush1.xpose.msra.mxu0 0.0
    %943 = vmatprep.subr.mxu0 0.0
    %944 = vmatpush1.xpose.msra.mxu0 0.0
    %945 = vmatprep.subr.mxu0 0.0
    %946 = vmatpush1.xpose.msra.mxu0 0.0
    %947 = vmatprep.subr.mxu0 0.0
    %948 = vmatpush1.xpose.msra.mxu0 0.0
    %949 = vmatprep.subr.mxu0 0.0
    %950 = vmatpush1.xpose.msra.mxu0 0.0
    %951 = vmatprep.subr.mxu0 0.0
    %952 = vmatpush1.xpose.msra.mxu0 0.0
    %953 = vmatprep.subr.mxu0 0.0
    %954 = vmatpush1.xpose.msra.mxu0 0.0
    %955 = vmatprep.subr.mxu0 0.0
    %956 = vmatpush1.xpose.msra.mxu0 0.0
    %957 = vmatprep.subr.mxu0 0.0
    %958 = vmatpush1.xpose.msra.mxu0 0.0
    %959 = vmatprep.subr.mxu0 0.0
    %960 = vmatpush1.xpose.msra.mxu0 0.0
    %961 = vmatprep.subr.mxu0 0.0
    %962 = vmatpush1.xpose.msra.mxu0 0.0
    %963 = vmatprep.subr.mxu0 0.0
    %964 = vmatpush1.xpose.msra.mxu0 0.0
    %965 = vmatprep.subr.mxu0 0.0
    %966 = vmatpush1.xpose.msra.mxu0 0.0
    %967 = vmatprep.mubr.f32.mxu0 0.0
    %968 = vmatmul.mubr.f32.gmra.mrb[0].mxu0 %v899
    %v969 = vpop.f32.mrb[0].mxu0
    %v970 = vadd.f32 %v729, %v969
    %v971 = vpop.f32.mrb[0].mxu0
    %972 = vdwg.mxu0
    %v973 = vsel %vm465, %v970, -inf
    %974 = vmax.xlane.f32.xlu0 %v973
    %v975 = vpop.xlane.xlu0 %974
    %v976 = vsub.f32 %v970, %v975
    %v977 = vmul.f32 %v976, 1.442695
    %v978 = vpow.pop %v977
    %v979 = vsel %vm465, %v978, 0.0
    %980 = vadd.xlane.f32.xlu0 %v979
    %v981 = vpop.xlane.xlu0 %980
    %v982 = vrcp.pop %v981
    %v983 = vmul.f32 %v978, %v982
    %984 = vrot.lane.b32.xlu0 %v379, 48
    %v985 = vpop.permute.xlu0 %984
    %v988 = vsel %vm465, %v983, 0
    %990 = vmatprep.subr.mxu0 0.0
    %991 = vmatpush1.msra.mxu0 %v985
    %992 = vmatprep.subr.mxu0 0.0
    %993 = vmatpush1.msra.mxu0 0.0
    %994 = vmatprep.subr.mxu0 0.0
    %995 = vmatpush1.msra.mxu0 0.0
    %996 = vmatprep.subr.mxu0 0.0
    %997 = vmatpush1.msra.mxu0 0.0
    %998 = vmatprep.subr.mxu0 0.0
    %999 = vmatpush1.msra.mxu0 0.0
    %1000 = vmatprep.subr.mxu0 0.0
    %1001 = vmatpush1.msra.mxu0 0.0
    %1002 = vmatprep.subr.mxu0 0.0
    %1003 = vmatpush1.msra.mxu0 0.0
    %1004 = vmatprep.subr.mxu0 0.0
    %1005 = vmatpush1.msra.mxu0 0.0
    %1006 = vmatprep.subr.mxu0 0.0
    %1007 = vmatpush1.msra.mxu0 0.0
    %1008 = vmatprep.subr.mxu0 0.0
    %1009 = vmatpush1.msra.mxu0 0.0
    %1010 = vmatprep.subr.mxu0 0.0
    %1011 = vmatpush1.msra.mxu0 0.0
    %1012 = vmatprep.subr.mxu0 0.0
    %1013 = vmatpush1.msra.mxu0 0.0
    %1014 = vmatprep.subr.mxu0 0.0
    %1015 = vmatpush1.msra.mxu0 0.0
    %1016 = vmatprep.subr.mxu0 0.0
    %1017 = vmatpush1.msra.mxu0 0.0
    %1018 = vmatprep.subr.mxu0 0.0
    %1019 = vmatpush1.msra.mxu0 0.0
    %1020 = vmatprep.subr.mxu0 0.0
    %1021 = vmatpush1.msra.mxu0 0.0
    %1022 = vmatprep.subr.mxu0 0.0
    %1023 = vmatpush1.msra.mxu0 0.0
    %1024 = vmatprep.subr.mxu0 0.0
    %1025 = vmatpush1.msra.mxu0 0.0
    %1026 = vmatprep.subr.mxu0 0.0
    %1027 = vmatpush1.msra.mxu0 0.0
    %1028 = vmatprep.subr.mxu0 0.0
    %1029 = vmatpush1.msra.mxu0 0.0
    %1030 = vmatprep.subr.mxu0 0.0
    %1031 = vmatpush1.msra.mxu0 0.0
    %1032 = vmatprep.subr.mxu0 0.0
    %1033 = vmatpush1.msra.mxu0 0.0
    %1034 = vmatprep.subr.mxu0 0.0
    %1035 = vmatpush1.msra.mxu0 0.0
    %1036 = vmatprep.subr.mxu0 0.0
    %1037 = vmatpush1.msra.mxu0 0.0
    %1038 = vmatprep.subr.mxu0 0.0
    %1039 = vmatpush1.msra.mxu0 0.0
    %1040 = vmatprep.subr.mxu0 0.0
    %1041 = vmatpush1.msra.mxu0 0.0
    %1042 = vmatprep.subr.mxu0 0.0
    %1043 = vmatpush1.msra.mxu0 0.0
    %1044 = vmatprep.subr.mxu0 0.0
    %1045 = vmatpush1.msra.mxu0 0.0
    %1046 = vmatprep.subr.mxu0 0.0
    %1047 = vmatpush1.msra.mxu0 0.0
    %1048 = vmatprep.subr.mxu0 0.0
    %1049 = vmatpush1.msra.mxu0 0.0
    %1050 = vmatprep.subr.mxu0 0.0
    %1051 = vmatpush1.msra.mxu0 0.0
    %1052 = vmatprep.subr.mxu0 0.0
    %1053 = vmatpush1.msra.mxu0 0.0
    %1054 = vmatprep.mubr.f32.mxu0 0.0
    %1055 = vmatmul.mubr.f32.gmra.mrb[0].mxu0 %v988
    %v1056 = vpop.f32.mrb[0].mxu0
    %v1057 = vadd.f32 0.0, %v1056
    %v1058 = vpop.f32.mrb[0].mxu0
    %1059 = vdwg.mxu0
    %1061 = vrot.lane.b32.xlu0 %v1057, 16
    %v1062 = vpop.permute.xlu0 %1061
    %1064 = vst.msk [vmem:[#allocation2 + $0x8] sm:$0xff] %vm723, %v1062
    %v1065 = vld [vmem:[#allocation2] sm:$0xff]
    %v1066 = vld [vmem:[#allocation2 + $0x8] sm:$0xff]
    %v1067 = vld [vmem:[%s6] sm:$0xff]
    %v1068 = vld [vmem:[%s6 + $0x8] sm:$0xff]
    %v1069 = vld [vmem:[%s6 + $0x10] sm:$0xff]
    %v1070 = vld [vmem:[%s6 + $0x18] sm:$0xff]
    %v1071 = vld [vmem:[#allocation12] sm:$0x1]
    %v1073 = vlaneseq
    %v1074 = vshrl.u32 %v1073, 7
    %v1075 = vsub.s32 0, %v1074
    %v1076 = vrot.slane %v1071, %v1075
    %v1079 = vsel %vm246, %v1065, 0
    %v1082 = vsel %vm246, %v1066, 0
    %1084 = vmatprep.subr.mxu0 0.0
    %1085 = vmatpush1.msra.mxu0 %v1067
    %1086 = vmatprep.subr.mxu0 0.0
    %1087 = vmatpush1.msra.mxu0 %v1068
    %1088 = vmatprep.subr.mxu0 0.0
    %1089 = vmatpush1.msra.mxu0 %v1069
    %1090 = vmatprep.subr.mxu0 0.0
    %1091 = vmatpush1.msra.mxu0 %v1070
    %1092 = vmatprep.subr.mxu0 0.0
    %1093 = vmatpush1.msra.mxu0 0.0
    %1094 = vmatprep.subr.mxu0 0.0
    %1095 = vmatpush1.msra.mxu0 0.0
    %1096 = vmatprep.subr.mxu0 0.0
    %1097 = vmatpush1.msra.mxu0 0.0
    %1098 = vmatprep.subr.mxu0 0.0
    %1099 = vmatpush1.msra.mxu0 0.0
    %1100 = vmatprep.subr.mxu0 0.0
    %1101 = vmatpush1.msra.mxu0 0.0
    %1102 = vmatprep.subr.mxu0 0.0
    %1103 = vmatpush1.msra.mxu0 0.0
    %1104 = vmatprep.subr.mxu0 0.0
    %1105 = vmatpush1.msra.mxu0 0.0
    %1106 = vmatprep.subr.mxu0 0.0
    %1107 = vmatpush1.msra.mxu0 0.0
    %1108 = vmatprep.subr.mxu0 0.0
    %1109 = vmatpush1.msra.mxu0 0.0
    %1110 = vmatprep.subr.mxu0 0.0
    %1111 = vmatpush1.msra.mxu0 0.0
    %1112 = vmatprep.subr.mxu0 0.0
    %1113 = vmatpush1.msra.mxu0 0.0
    %1114 = vmatprep.subr.mxu0 0.0
    %1115 = vmatpush1.msra.mxu0 0.0
    %1116 = vmatprep.subr.mxu0 0.0
    %1117 = vmatpush1.msra.mxu0 0.0
    %1118 = vmatprep.subr.mxu0 0.0
    %1119 = vmatpush1.msra.mxu0 0.0
    %1120 = vmatprep.subr.mxu0 0.0
    %1121 = vmatpush1.msra.mxu0 0.0
    %1122 = vmatprep.subr.mxu0 0.0
    %1123 = vmatpush1.msra.mxu0 0.0
    %1124 = vmatprep.subr.mxu0 0.0
    %1125 = vmatpush1.msra.mxu0 0.0
    %1126 = vmatprep.subr.mxu0 0.0
    %1127 = vmatpush1.msra.mxu0 0.0
    %1128 = vmatprep.subr.mxu0 0.0
    %1129 = vmatpush1.msra.mxu0 0.0
    %1130 = vmatprep.subr.mxu0 0.0
    %1131 = vmatpush1.msra.mxu0 0.0
    %1132 = vmatprep.subr.mxu0 0.0
    %1133 = vmatpush1.msra.mxu0 0.0
    %1134 = vmatprep.subr.mxu0 0.0
    %1135 = vmatpush1.msra.mxu0 0.0
    %1136 = vmatprep.subr.mxu0 0.0
    %1137 = vmatpush1.msra.mxu0 0.0
    %1138 = vmatprep.subr.mxu0 0.0
    %1139 = vmatpush1.msra.mxu0 0.0
    %1140 = vmatprep.subr.mxu0 0.0
    %1141 = vmatpush1.msra.mxu0 0.0
    %1142 = vmatprep.subr.mxu0 0.0
    %1143 = vmatpush1.msra.mxu0 0.0
    %1144 = vmatprep.subr.mxu0 0.0
    %1145 = vmatpush1.msra.mxu0 0.0
    %1146 = vmatprep.subr.mxu0 0.0
    %1147 = vmatpush1.msra.mxu0 0.0
    %1148 = vmatprep.mubr.f32.mxu0 0.0
    %1149 = vmatmul.mubr.f32.gmra.mrb[0].mxu0 %v1079
    %v1150 = vpop.f32.mrb[0].mxu0
    %v1151 = vadd.f32 %v1076, %v1150
    %v1152 = vpop.f32.mrb[0].mxu0
    %1153 = vmatprep.mubr.f32.mxu0 0.0
    %1154 = vmatmul.mubr.f32.gmra.mrb[0].mxu0 %v1082
    %v1155 = vpop.f32.mrb[0].mxu0
    %v1156 = vadd.f32 %v1076, %v1155
    %v1157 = vpop.f32.mrb[0].mxu0
    %1158 = vdwg.mxu0
    %v1159 = vadd.f32 %v288, %v1151
    %v1160 = vadd.f32 %v289, %v1156
    %v1161 = vld [vmem:[#allocation14] sm:$0x1]
    %v1162 = vld [vmem:[#allocation15] sm:$0x1]
    %v1163 = vsel %vm246, %v1159, 0.0
    %1164 = vadd.xlane.f32.xlu0 %v1163
    %v1165 = vpop.xlane.xlu0 %1164
    %v1166 = vsel %vm246, %v1160, 0.0
    %1167 = vadd.xlane.f32.xlu0 %v1166
    %v1168 = vpop.xlane.xlu0 %1167
    %v1169 = vmul.f32 %v1165, %v253
    %v1170 = vmul.f32 %v1168, %v253
    %v1171 = vsub.f32 %v1159, %v1169
    %v1172 = vsub.f32 %v1160, %v1170
    %v1173 = vmul.f32 %v1171, %v1171
    %v1174 = vmul.f32 %v1172, %v1172
    %v1175 = vsel %vm246, %v1173, 0.0
    %1176 = vadd.xlane.f32.xlu0 %v1175
    %v1177 = vpop.xlane.xlu0 %1176
    %v1178 = vsel %vm246, %v1174, 0.0
    %1179 = vadd.xlane.f32.xlu0 %v1178
    %v1180 = vpop.xlane.xlu0 %1179
    %v1181 = vmul.f32 %v1177, %v253
    %v1182 = vmul.f32 %v1180, %v253
    %v1183 = vadd.f32 %v1181, 1e-12
    %v1184 = vadd.f32 %v1182, 1e-12
    %v1185 = vrsqrt.pop %v1183
    %v1186 = vrsqrt.pop %v1184
    %v1187 = vmul.f32 %v1171, %v1185
    %v1188 = vmul.f32 %v1172, %v1186
    %v1190 = vlaneseq
    %v1191 = vshrl.u32 %v1190, 7
    %v1192 = vsub.s32 0, %v1191
    %v1193 = vrot.slane %v1161, %v1192
    %v1195 = vmul.f32 %v1187, %v1193
    %v1196 = vmul.f32 %v1188, %v1193
    %v1198 = vlaneseq
    %v1199 = vshrl.u32 %v1198, 7
    %v1200 = vsub.s32 0, %v1199
    %v1201 = vrot.slane %v1162, %v1200
    %v1203 = vadd.f32 %v1195, %v1201
    %v1204 = vadd.f32 %v1196, %v1201
    %v1205 = vld [vmem:[%s10] sm:$0xff]
    %v1206 = vld [vmem:[%s10 + $0x8] sm:$0xff]
    %v1207 = vld [vmem:[%s10 + $0x10] sm:$0xff]
    %v1208 = vld [vmem:[%s10 + $0x18] sm:$0xff]
    %v1209 = vld [vmem:[#allocation17] sm:$0x1]
    %v1211 = vlaneseq
    %v1212 = vshrl.u32 %v1211, 7
    %v1213 = vsub.s32 0, %v1212
    %v1214 = vrot.slane %v1209, %v1213
    %v1217 = vsel %vm246, %v1203, 0
    %v1220 = vsel %vm246, %v1204, 0
    %1222 = vmatprep.subr.mxu0 0.0
    %1223 = vmatpush1.msra.mxu0 %v1205
    %1224 = vmatprep.subr.mxu0 0.0
    %1225 = vmatpush1.msra.mxu0 %v1206
    %1226 = vmatprep.subr.mxu0 0.0
    %1227 = vmatpush1.msra.mxu0 %v1207
    %1228 = vmatprep.subr.mxu0 0.0
    %1229 = vmatpush1.msra.mxu0 %v1208
    %1230 = vmatprep.subr.mxu0 0.0
    %1231 = vmatpush1.msra.mxu0 0.0
    %1232 = vmatprep.subr.mxu0 0.0
    %1233 = vmatpush1.msra.mxu0 0.0
    %1234 = vmatprep.subr.mxu0 0.0
    %1235 = vmatpush1.msra.mxu0 0.0
    %1236 = vmatprep.subr.mxu0 0.0
    %1237 = vmatpush1.msra.mxu0 0.0
    %1238 = vmatprep.subr.mxu0 0.0
    %1239 = vmatpush1.msra.mxu0 0.0
    %1240 = vmatprep.subr.mxu0 0.0
    %1241 = vmatpush1.msra.mxu0 0.0
    %1242 = vmatprep.subr.mxu0 0.0
    %1243 = vmatpush1.msra.mxu0 0.0
    %1244 = vmatprep.subr.mxu0 0.0
    %1245 = vmatpush1.msra.mxu0 0.0
    %1246 = vmatprep.subr.mxu0 0.0
    %1247 = vmatpush1.msra.mxu0 0.0
    %1248 = vmatprep.subr.mxu0 0.0
    %1249 = vmatpush1.msra.mxu0 0.0
    %1250 = vmatprep.subr.mxu0 0.0
    %1251 = vmatpush1.msra.mxu0 0.0
    %1252 = vmatprep.subr.mxu0 0.0
    %1253 = vmatpush1.msra.mxu0 0.0
    %1254 = vmatprep.subr.mxu0 0.0
    %1255 = vmatpush1.msra.mxu0 0.0
    %1256 = vmatprep.subr.mxu0 0.0
    %1257 = vmatpush1.msra.mxu0 0.0
    %1258 = vmatprep.subr.mxu0 0.0
    %1259 = vmatpush1.msra.mxu0 0.0
    %1260 = vmatprep.subr.mxu0 0.0
    %1261 = vmatpush1.msra.mxu0 0.0
    %1262 = vmatprep.subr.mxu0 0.0
    %1263 = vmatpush1.msra.mxu0 0.0
    %1264 = vmatprep.subr.mxu0 0.0
    %1265 = vmatpush1.msra.mxu0 0.0
    %1266 = vmatprep.subr.mxu0 0.0
    %1267 = vmatpush1.msra.mxu0 0.0
    %1268 = vmatprep.subr.mxu0 0.0
    %1269 = vmatpush1.msra.mxu0 0.0
    %1270 = vmatprep.subr.mxu0 0.0
    %1271 = vmatpush1.msra.mxu0 0.0
    %1272 = vmatprep.subr.mxu0 0.0
    %1273 = vmatpush1.msra.mxu0 0.0
    %1274 = vmatprep.subr.mxu0 0.0
    %1275 = vmatpush1.msra.mxu0 0.0
    %1276 = vmatprep.subr.mxu0 0.0
    %1277 = vmatpush1.msra.mxu0 0.0
    %1278 = vmatprep.subr.mxu0 0.0
    %1279 = vmatpush1.msra.mxu0 0.0
    %1280 = vmatprep.subr.mxu0 0.0
    %1281 = vmatpush1.msra.mxu0 0.0
    %1282 = vmatprep.subr.mxu0 0.0
    %1283 = vmatpush1.msra.mxu0 0.0
    %1284 = vmatprep.subr.mxu0 0.0
    %1285 = vmatpush1.msra.mxu0 0.0
    %1286 = vmatprep.mubr.f32.mxu0 0.0
    %1287 = vmatmul.mubr.f32.gmra.mrb[0].mxu0 %v1217
    %v1288 = vpop.f32.mrb[0].mxu0
    %v1289 = vadd.f32 %v1214, %v1288
    %v1290 = vpop.f32.mrb[0].mxu0
    %1291 = vmatprep.mubr.f32.mxu0 0.0
    %1292 = vmatmul.mubr.f32.gmra.mrb[0].mxu0 %v1220
    %v1293 = vpop.f32.mrb[0].mxu0
    %v1294 = vadd.f32 %v1214, %v1293
    %v1295 = vpop.f32.mrb[0].mxu0
    %1296 = vdwg.mxu0
    %v1297 = vmul.f32 %v1289, %v1289
    %v1298 = vmul.f32 %v1294, %v1294
    %v1299 = vmul.f32 %v1289, %v1297
    %v1300 = vmul.f32 %v1294, %v1298
    %v1301 = vmul.f32 %v1299, 0.044715
    %v1302 = vmul.f32 %v1300, 0.044715
    %v1303 = vadd.f32 %v1289, %v1301
    %v1304 = vadd.f32 %v1294, %v1302
    %v1305 = vmul.f32 %v1303, 0.7978846
    %v1306 = vmul.f32 %v1304, 0.7978846
    %v1307 = vtanh.pop %v1305
    %v1308 = vtanh.pop %v1306
    %v1309 = vadd.f32 %v1307, 1.0
    %v1310 = vadd.f32 %v1308, 1.0
    %v1311 = vmul.f32 %v1309, 0.5
    %v1312 = vmul.f32 %v1310, 0.5
    %v1313 = vmul.f32 %v1289, %v1311
    %v1314 = vmul.f32 %v1294, %v1312
    %v1315 = vld [vmem:[%s12] sm:$0xff]
    %v1316 = vld [vmem:[%s12 + $0x8] sm:$0xff]
    %v1317 = vld [vmem:[%s12 + $0x10] sm:$0xff]
    %v1318 = vld [vmem:[%s12 + $0x18] sm:$0xff]
    %v1319 = vld [vmem:[%s12 + $0x20] sm:$0xff]
    %v1320 = vld [vmem:[%s12 + $0x28] sm:$0xff]
    %v1321 = vld [vmem:[%s12 + $0x30] sm:$0xff]
    %v1322 = vld [vmem:[%s12 + $0x38] sm:$0xff]
    %v1323 = vld [vmem:[#allocation18] sm:$0x1]
    %v1325 = vlaneseq
    %v1326 = vshrl.u32 %v1325, 7
    %v1327 = vsub.s32 0, %v1326
    %v1328 = vrot.slane %v1323, %v1327
    %vm1330 = vcmask 523264
    %v1332 = vsel %vm1330, %v1313, 0
    %v1335 = vsel %vm1330, %v1314, 0
    %1337 = vmatprep.subr.mxu0 0.0
    %1338 = vmatpush1.msra.mxu0 %v1315
    %1339 = vmatprep.subr.mxu0 0.0
    %1340 = vmatpush1.msra.mxu0 %v1316
    %1341 = vmatprep.subr.mxu0 0.0
    %1342 = vmatpush1.msra.mxu0 %v1317
    %1343 = vmatprep.subr.mxu0 0.0
    %1344 = vmatpush1.msra.mxu0 %v1318
    %1345 = vmatprep.subr.mxu0 0.0
    %1346 = vmatpush1.msra.mxu0 %v1319
    %1347 = vmatprep.subr.mxu0 0.0
    %1348 = vmatpush1.msra.mxu0 %v1320
    %1349 = vmatprep.subr.mxu0 0.0
    %1350 = vmatpush1.msra.mxu0 %v1321
    %1351 = vmatprep.subr.mxu0 0.0
    %1352 = vmatpush1.msra.mxu0 %v1322
    %1353 = vmatprep.subr.mxu0 0.0
    %1354 = vmatpush1.msra.mxu0 0.0
    %1355 = vmatprep.subr.mxu0 0.0
    %1356 = vmatpush1.msra.mxu0 0.0
    %1357 = vmatprep.subr.mxu0 0.0
    %1358 = vmatpush1.msra.mxu0 0.0
    %1359 = vmatprep.subr.mxu0 0.0
    %1360 = vmatpush1.msra.mxu0 0.0
    %1361 = vmatprep.subr.mxu0 0.0
    %1362 = vmatpush1.msra.mxu0 0.0
    %1363 = vmatprep.subr.mxu0 0.0
    %1364 = vmatpush1.msra.mxu0 0.0
    %1365 = vmatprep.subr.mxu0 0.0
    %1366 = vmatpush1.msra.mxu0 0.0
    %1367 = vmatprep.subr.mxu0 0.0
    %1368 = vmatpush1.msra.mxu0 0.0
    %1369 = vmatprep.subr.mxu0 0.0
    %1370 = vmatpush1.msra.mxu0 0.0
    %1371 = vmatprep.subr.mxu0 0.0
    %1372 = vmatpush1.msra.mxu0 0.0
    %1373 = vmatprep.subr.mxu0 0.0
    %1374 = vmatpush1.msra.mxu0 0.0
    %1375 = vmatprep.subr.mxu0 0.0
    %1376 = vmatpush1.msra.mxu0 0.0
    %1377 = vmatprep.subr.mxu0 0.0
    %1378 = vmatpush1.msra.mxu0 0.0
    %1379 = vmatprep.subr.mxu0 0.0
    %1380 = vmatpush1.msra.mxu0 0.0
    %1381 = vmatprep.subr.mxu0 0.0
    %1382 = vmatpush1.msra.mxu0 0.0
    %1383 = vmatprep.subr.mxu0 0.0
    %1384 = vmatpush1.msra.mxu0 0.0
    %1385 = vmatprep.subr.mxu0 0.0
    %1386 = vmatpush1.msra.mxu0 0.0
    %1387 = vmatprep.subr.mxu0 0.0
    %1388 = vmatpush1.msra.mxu0 0.0
    %1389 = vmatprep.subr.mxu0 0.0
    %1390 = vmatpush1.msra.mxu0 0.0
    %1391 = vmatprep.subr.mxu0 0.0
    %1392 = vmatpush1.msra.mxu0 0.0
    %1393 = vmatprep.subr.mxu0 0.0
    %1394 = vmatpush1.msra.mxu0 0.0
    %1395 = vmatprep.subr.mxu0 0.0
    %1396 = vmatpush1.msra.mxu0 0.0
    %1397 = vmatprep.subr.mxu0 0.0
    %1398 = vmatpush1.msra.mxu0 0.0
    %1399 = vmatprep.subr.mxu0 0.0
    %1400 = vmatpush1.msra.mxu0 0.0
    %1401 = vmatprep.mubr.f32.mxu0 0.0
    %1402 = vmatmul.mubr.f32.gmra.mrb[0].mxu0 %v1332
    %v1403 = vpop.f32.mrb[0].mxu0
    %v1404 = vadd.f32 %v1328, %v1403
    %v1405 = vpop.f32.mrb[0].mxu0
    %1406 = vmatprep.mubr.f32.mxu0 0.0
    %1407 = vmatmul.mubr.f32.gmra.mrb[0].mxu0 %v1335
    %v1408 = vpop.f32.mrb[0].mxu0
    %v1409 = vadd.f32 %v1328, %v1408
    %v1410 = vpop.f32.mrb[0].mxu0
    %1411 = vdwg.mxu0
    %v1412 = vadd.f32 %v1203, %v1404
    %v1413 = vadd.f32 %v1204, %v1409
    %v1414 = vld [vmem:[#allocation20] sm:$0x1]
    %v1415 = vld [vmem:[#allocation21] sm:$0x1]
    %v1416 = vsel %vm246, %v1412, 0.0
    %1417 = vadd.xlane.f32.xlu0 %v1416
    %v1418 = vpop.xlane.xlu0 %1417
    %v1419 = vsel %vm246, %v1413, 0.0
    %1420 = vadd.xlane.f32.xlu0 %v1419
    %v1421 = vpop.xlane.xlu0 %1420
    %v1422 = vmul.f32 %v1418, %v253
    %v1423 = vmul.f32 %v1421, %v253
    %v1424 = vsub.f32 %v1412, %v1422
    %v1425 = vsub.f32 %v1413, %v1423
    %v1426 = vmul.f32 %v1424, %v1424
    %v1427 = vmul.f32 %v1425, %v1425
    %v1428 = vsel %vm246, %v1426, 0.0
    %1429 = vadd.xlane.f32.xlu0 %v1428
    %v1430 = vpop.xlane.xlu0 %1429
    %v1431 = vsel %vm246, %v1427, 0.0
    %1432 = vadd.xlane.f32.xlu0 %v1431
    %v1433 = vpop.xlane.xlu0 %1432
    %v1434 = vmul.f32 %v1430, %v253
    %v1435 = vmul.f32 %v1433, %v253
    %v1436 = vadd.f32 %v1434, 1e-12
    %v1437 = vadd.f32 %v1435, 1e-12
    %v1438 = vrsqrt.pop %v1436
    %v1439 = vrsqrt.pop %v1437
    %v1440 = vmul.f32 %v1424, %v1438
    %v1441 = vmul.f32 %v1425, %v1439
    %v1443 = vlaneseq
    %v1444 = vshrl.u32 %v1443, 7
    %v1445 = vsub.s32 0, %v1444
    %v1446 = vrot.slane %v1414, %v1445
    %v1448 = vmul.f32 %v1440, %v1446
    %v1449 = vmul.f32 %v1441, %v1446
    %v1451 = vlaneseq
    %v1452 = vshrl.u32 %v1451, 7
    %v1453 = vsub.s32 0, %v1452
    %v1454 = vrot.slane %v1415, %v1453
    %v1456 = vadd.f32 %v1448, %v1454
    %v1457 = vadd.f32 %v1449, %v1454
    %v1458 = vld [vmem:[%s16] sm:$0xff]
    %v1459 = vld [vmem:[%s16 + $0x8] sm:$0xff]
    %v1460 = vld [vmem:[%s16 + $0x10] sm:$0xff]
    %v1461 = vld [vmem:[%s16 + $0x18] sm:$0xff]
    %v1462 = vld [vmem:[#allocation23] sm:$0x1]
    %v1464 = vlaneseq
    %v1465 = vshrl.u32 %v1464, 7
    %v1466 = vsub.s32 0, %v1465
    %v1467 = vrot.slane %v1462, %v1466
    %v1470 = vsel %vm246, %v1456, 0
    %v1473 = vsel %vm246, %v1457, 0
    %1475 = vmatprep.subr.mxu0 0.0
    %1476 = vmatpush1.msra.mxu0 %v1458
    %1477 = vmatprep.subr.mxu0 0.0
    %1478 = vmatpush1.msra.mxu0 %v1459
    %1479 = vmatprep.subr.mxu0 0.0
    %1480 = vmatpush1.msra.mxu0 %v1460
    %1481 = vmatprep.subr.mxu0 0.0
    %1482 = vmatpush1.msra.mxu0 %v1461
    %1483 = vmatprep.subr.mxu0 0.0
    %1484 = vmatpush1.msra.mxu0 0.0
    %1485 = vmatprep.subr.mxu0 0.0
    %1486 = vmatpush1.msra.mxu0 0.0
    %1487 = vmatprep.subr.mxu0 0.0
    %1488 = vmatpush1.msra.mxu0 0.0
    %1489 = vmatprep.subr.mxu0 0.0
    %1490 = vmatpush1.msra.mxu0 0.0
    %1491 = vmatprep.subr.mxu0 0.0
    %1492 = vmatpush1.msra.mxu0 0.0
    %1493 = vmatprep.subr.mxu0 0.0
    %1494 = vmatpush1.msra.mxu0 0.0
    %1495 = vmatprep.subr.mxu0 0.0
    %1496 = vmatpush1.msra.mxu0 0.0
    %1497 = vmatprep.subr.mxu0 0.0
    %1498 = vmatpush1.msra.mxu0 0.0
    %1499 = vmatprep.subr.mxu0 0.0
    %1500 = vmatpush1.msra.mxu0 0.0
    %1501 = vmatprep.subr.mxu0 0.0
    %1502 = vmatpush1.msra.mxu0 0.0
    %1503 = vmatprep.subr.mxu0 0.0
    %1504 = vmatpush1.msra.mxu0 0.0
    %1505 = vmatprep.subr.mxu0 0.0
    %1506 = vmatpush1.msra.mxu0 0.0
    %1507 = vmatprep.subr.mxu0 0.0
    %1508 = vmatpush1.msra.mxu0 0.0
    %1509 = vmatprep.subr.mxu0 0.0
    %1510 = vmatpush1.msra.mxu0 0.0
    %1511 = vmatprep.subr.mxu0 0.0
    %1512 = vmatpush1.msra.mxu0 0.0
    %1513 = vmatprep.subr.mxu0 0.0
    %1514 = vmatpush1.msra.mxu0 0.0
    %1515 = vmatprep.subr.mxu0 0.0
    %1516 = vmatpush1.msra.mxu0 0.0
    %1517 = vmatprep.subr.mxu0 0.0
    %1518 = vmatpush1.msra.mxu0 0.0
    %1519 = vmatprep.subr.mxu0 0.0
    %1520 = vmatpush1.msra.mxu0 0.0
    %1521 = vmatprep.subr.mxu0 0.0
    %1522 = vmatpush1.msra.mxu0 0.0
    %1523 = vmatprep.subr.mxu0 0.0
    %1524 = vmatpush1.msra.mxu0 0.0
    %1525 = vmatprep.subr.mxu0 0.0
    %1526 = vmatpush1.msra.mxu0 0.0
    %1527 = vmatprep.subr.mxu0 0.0
    %1528 = vmatpush1.msra.mxu0 0.0
    %1529 = vmatprep.subr.mxu0 0.0
    %1530 = vmatpush1.msra.mxu0 0.0
    %1531 = vmatprep.subr.mxu0 0.0
    %1532 = vmatpush1.msra.mxu0 0.0
    %1533 = vmatprep.subr.mxu0 0.0
    %1534 = vmatpush1.msra.mxu0 0.0
    %1535 = vmatprep.subr.mxu0 0.0
    %1536 = vmatpush1.msra.mxu0 0.0
    %1537 = vmatprep.subr.mxu0 0.0
    %1538 = vmatpush1.msra.mxu0 0.0
    %1539 = vmatprep.mubr.f32.mxu0 0.0
    %1540 = vmatmul.mubr.f32.gmra.mrb[0].mxu0 %v1470
    %v1541 = vpop.f32.mrb[0].mxu0
    %v1542 = vadd.f32 %v1467, %v1541
    %v1543 = vpop.f32.mrb[0].mxu0
    %1544 = vmatprep.mubr.f32.mxu0 0.0
    %1545 = vmatmul.mubr.f32.gmra.mrb[0].mxu0 %v1473
    %v1546 = vpop.f32.mrb[0].mxu0
    %v1547 = vadd.f32 %v1467, %v1546
    %v1548 = vpop.f32.mrb[0].mxu0
    %1549 = vdwg.mxu0
    %v1550 = vld [vmem:[#allocation6] sm:$0x1]
    %v1551 = vlaneseq
    %v1552 = vshrl.u32 %v1551, 7
    %v1553 = vsub.s32 0, %v1552
    %v1554 = vrot.slane %v1550, %v1553
    %1556 = vrot.lane.b32.xlu0 %v1542, 96
    %v1557 = vpop.permute.xlu0 %1556
    %v1558 = vsel %vm390, %v1542, 0
    %v1560 = vsel %vm390, %v1557, 0
    %1562 = vmatprep.subr.mxu0 0.0
    %1563 = vmatpush1.xpose.msra.mxu0 %v1560
    %1564 = vmatprep.subr.mxu0 0.0
    %1565 = vmatpush1.xpose.msra.mxu0 0.0
    %1566 = vmatprep.subr.mxu0 0.0
    %1567 = vmatpush1.xpose.msra.mxu0 0.0
    %1568 = vmatprep.subr.mxu0 0.0
    %1569 = vmatpush1.xpose.msra.mxu0 0.0
    %1570 = vmatprep.subr.mxu0 0.0
    %1571 = vmatpush1.xpose.msra.mxu0 0.0
    %1572 = vmatprep.subr.mxu0 0.0
    %1573 = vmatpush1.xpose.msra.mxu0 0.0
    %1574 = vmatprep.subr.mxu0 0.0
    %1575 = vmatpush1.xpose.msra.mxu0 0.0
    %1576 = vmatprep.subr.mxu0 0.0
    %1577 = vmatpush1.xpose.msra.mxu0 0.0
    %1578 = vmatprep.subr.mxu0 0.0
    %1579 = vmatpush1.xpose.msra.mxu0 0.0
    %1580 = vmatprep.subr.mxu0 0.0
    %1581 = vmatpush1.xpose.msra.mxu0 0.0
    %1582 = vmatprep.subr.mxu0 0.0
    %1583 = vmatpush1.xpose.msra.mxu0 0.0
    %1584 = vmatprep.subr.mxu0 0.0
    %1585 = vmatpush1.xpose.msra.mxu0 0.0
    %1586 = vmatprep.subr.mxu0 0.0
    %1587 = vmatpush1.xpose.msra.mxu0 0.0
    %1588 = vmatprep.subr.mxu0 0.0
    %1589 = vmatpush1.xpose.msra.mxu0 0.0
    %1590 = vmatprep.subr.mxu0 0.0
    %1591 = vmatpush1.xpose.msra.mxu0 0.0
    %1592 = vmatprep.subr.mxu0 0.0
    %1593 = vmatpush1.xpose.msra.mxu0 0.0
    %1594 = vmatprep.subr.mxu0 0.0
    %1595 = vmatpush1.xpose.msra.mxu0 0.0
    %1596 = vmatprep.subr.mxu0 0.0
    %1597 = vmatpush1.xpose.msra.mxu0 0.0
    %1598 = vmatprep.subr.mxu0 0.0
    %1599 = vmatpush1.xpose.msra.mxu0 0.0
    %1600 = vmatprep.subr.mxu0 0.0
    %1601 = vmatpush1.xpose.msra.mxu0 0.0
    %1602 = vmatprep.subr.mxu0 0.0
    %1603 = vmatpush1.xpose.msra.mxu0 0.0
    %1604 = vmatprep.subr.mxu0 0.0
    %1605 = vmatpush1.xpose.msra.mxu0 0.0
    %1606 = vmatprep.subr.mxu0 0.0
    %1607 = vmatpush1.xpose.msra.mxu0 0.0
    %1608 = vmatprep.subr.mxu0 0.0
    %1609 = vmatpush1.xpose.msra.mxu0 0.0
    %1610 = vmatprep.subr.mxu0 0.0
    %1611 = vmatpush1.xpose.msra.mxu0 0.0
    %1612 = vmatprep.subr.mxu0 0.0
    %1613 = vmatpush1.xpose.msra.mxu0 0.0
    %1614 = vmatprep.subr.mxu0 0.0
    %1615 = vmatpush1.xpose.msra.mxu0 0.0
    %1616 = vmatprep.subr.mxu0 0.0
    %1617 = vmatpush1.xpose.msra.mxu0 0.0
    %1618 = vmatprep.subr.mxu0 0.0
    %1619 = vmatpush1.xpose.msra.mxu0 0.0
    %1620 = vmatprep.subr.mxu0 0.0
    %1621 = vmatpush1.xpose.msra.mxu0 0.0
    %1622 = vmatprep.subr.mxu0 0.0
    %1623 = vmatpush1.xpose.msra.mxu0 0.0
    %1624 = vmatprep.subr.mxu0 0.0
    %1625 = vmatpush1.xpose.msra.mxu0 0.0
    %1626 = vmatprep.mubr.f32.mxu0 0.0
    %1627 = vmatmul.mubr.f32.gmra.mrb[0].mxu0 %v1558
    %v1628 = vpop.f32.mrb[0].mxu0
    %v1629 = vadd.f32 %v1554, %v1628
    %v1630 = vpop.f32.mrb[0].mxu0
    %1631 = vdwg.mxu0
    %v1632 = vsel %vm465, %v1629, -inf
    %1633 = vmax.xlane.f32.xlu0 %v1632
    %v1634 = vpop.xlane.xlu0 %1633
    %v1635 = vsub.f32 %v1629, %v1634
    %v1636 = vmul.f32 %v1635, 1.442695
    %v1637 = vpow.pop %v1636
    %v1638 = vsel %vm465, %v1637, 0.0
    %1639 = vadd.xlane.f32.xlu0 %v1638
    %v1640 = vpop.xlane.xlu0 %1639
    %v1641 = vrcp.pop %v1640
    %v1642 = vmul.f32 %v1637, %v1641
    %1643 = vrot.lane.b32.xlu0 %v1542, 64
    %v1644 = vpop.permute.xlu0 %1643
    %v1647 = vsel %vm465, %v1642, 0
    %1649 = vmatprep.subr.mxu0 0.0
    %1650 = vmatpush1.msra.mxu0 %v1644
    %1651 = vmatprep.subr.mxu0 0.0
    %1652 = vmatpush1.msra.mxu0 0.0
    %1653 = vmatprep.subr.mxu0 0.0
    %1654 = vmatpush1.msra.mxu0 0.0
    %1655 = vmatprep.subr.mxu0 0.0
    %1656 = vmatpush1.msra.mxu0 0.0
    %1657 = vmatprep.subr.mxu0 0.0
    %1658 = vmatpush1.msra.mxu0 0.0
    %1659 = vmatprep.subr.mxu0 0.0
    %1660 = vmatpush1.msra.mxu0 0.0
    %1661 = vmatprep.subr.mxu0 0.0
    %1662 = vmatpush1.msra.mxu0 0.0
    %1663 = vmatprep.subr.mxu0 0.0
    %1664 = vmatpush1.msra.mxu0 0.0
    %1665 = vmatprep.subr.mxu0 0.0
    %1666 = vmatpush1.msra.mxu0 0.0
    %1667 = vmatprep.subr.mxu0 0.0
    %1668 = vmatpush1.msra.mxu0 0.0
    %1669 = vmatprep.subr.mxu0 0.0
    %1670 = vmatpush1.msra.mxu0 0.0
    %1671 = vmatprep.subr.mxu0 0.0
    %1672 = vmatpush1.msra.mxu0 0.0
    %1673 = vmatprep.subr.mxu0 0.0
    %1674 = vmatpush1.msra.mxu0 0.0
    %1675 = vmatprep.subr.mxu0 0.0
    %1676 = vmatpush1.msra.mxu0 0.0
    %1677 = vmatprep.subr.mxu0 0.0
    %1678 = vmatpush1.msra.mxu0 0.0
    %1679 = vmatprep.subr.mxu0 0.0
    %1680 = vmatpush1.msra.mxu0 0.0
    %1681 = vmatprep.subr.mxu0 0.0
    %1682 = vmatpush1.msra.mxu0 0.0
    %1683 = vmatprep.subr.mxu0 0.0
    %1684 = vmatpush1.msra.mxu0 0.0
    %1685 = vmatprep.subr.mxu0 0.0
    %1686 = vmatpush1.msra.mxu0 0.0
    %1687 = vmatprep.subr.mxu0 0.0
    %1688 = vmatpush1.msra.mxu0 0.0
    %1689 = vmatprep.subr.mxu0 0.0
    %1690 = vmatpush1.msra.mxu0 0.0
    %1691 = vmatprep.subr.mxu0 0.0
    %1692 = vmatpush1.msra.mxu0 0.0
    %1693 = vmatprep.subr.mxu0 0.0
    %1694 = vmatpush1.msra.mxu0 0.0
    %1695 = vmatprep.subr.mxu0 0.0
    %1696 = vmatpush1.msra.mxu0 0.0
    %1697 = vmatprep.subr.mxu0 0.0
    %1698 = vmatpush1.msra.mxu0 0.0
    %1699 = vmatprep.subr.mxu0 0.0
    %1700 = vmatpush1.msra.mxu0 0.0
    %1701 = vmatprep.subr.mxu0 0.0
    %1702 = vmatpush1.msra.mxu0 0.0
    %1703 = vmatprep.subr.mxu0 0.0
    %1704 = vmatpush1.msra.mxu0 0.0
    %1705 = vmatprep.subr.mxu0 0.0
    %1706 = vmatpush1.msra.mxu0 0.0
    %1707 = vmatprep.subr.mxu0 0.0
    %1708 = vmatpush1.msra.mxu0 0.0
    %1709 = vmatprep.subr.mxu0 0.0
    %1710 = vmatpush1.msra.mxu0 0.0
    %1711 = vmatprep.subr.mxu0 0.0
    %1712 = vmatpush1.msra.mxu0 0.0
    %1713 = vmatprep.mubr.f32.mxu0 0.0
    %1714 = vmatmul.mubr.f32.gmra.mrb[0].mxu0 %v1647
    %v1715 = vpop.f32.mrb[0].mxu0
    %v1716 = vadd.f32 0.0, %v1715
    %v1717 = vpop.f32.mrb[0].mxu0
    %1718 = vdwg.mxu0
    %1719 = vst.msk [vmem:[#allocation2] sm:$0xff] %vm390, %v1716
    %1720 = vrot.lane.b32.xlu0 %v1542, 112
    %v1721 = vpop.permute.xlu0 %1720
    %1722 = vrot.lane.b32.xlu0 %v1542, 80
    %v1723 = vpop.permute.xlu0 %1722
    %v1724 = vsel %vm390, %v1721, 0
    %v1726 = vsel %vm390, %v1723, 0
    %1728 = vmatprep.subr.mxu0 0.0
    %1729 = vmatpush1.xpose.msra.mxu0 %v1726
    %1730 = vmatprep.subr.mxu0 0.0
    %1731 = vmatpush1.xpose.msra.mxu0 0.0
    %1732 = vmatprep.subr.mxu0 0.0
    %1733 = vmatpush1.xpose.msra.mxu0 0.0
    %1734 = vmatprep.subr.mxu0 0.0
    %1735 = vmatpush1.xpose.msra.mxu0 0.0
    %1736 = vmatprep.subr.mxu0 0.0
    %1737 = vmatpush1.xpose.msra.mxu0 0.0
    %1738 = vmatprep.subr.mxu0 0.0
    %1739 = vmatpush1.xpose.msra.mxu0 0.0
    %1740 = vmatprep.subr.mxu0 0.0
    %1741 = vmatpush1.xpose.msra.mxu0 0.0
    %1742 = vmatprep.subr.mxu0 0.0
    %1743 = vmatpush1.xpose.msra.mxu0 0.0
    %1744 = vmatprep.subr.mxu0 0.0
    %1745 = vmatpush1.xpose.msra.mxu0 0.0
    %1746 = vmatprep.subr.mxu0 0.0
    %1747 = vmatpush1.xpose.msra.mxu0 0.0
    %1748 = vmatprep.subr.mxu0 0.0
    %1749 = vmatpush1.xpose.msra.mxu0 0.0
    %1750 = vmatprep.subr.mxu0 0.0
    %1751 = vmatpush1.xpose.msra.mxu0 0.0
    %1752 = vmatprep.subr.mxu0 0.0
    %1753 = vmatpush1.xpose.msra.mxu0 0.0
    %1754 = vmatprep.subr.mxu0 0.0
    %1755 = vmatpush1.xpose.msra.mxu0 0.0
    %1756 = vmatprep.subr.mxu0 0.0
    %1757 = vmatpush1.xpose.msra.mxu0 0.0
    %1758 = vmatprep.subr.mxu0 0.0
    %1759 = vmatpush1.xpose.msra.mxu0 0.0
    %1760 = vmatprep.subr.mxu0 0.0
    %1761 = vmatpush1.xpose.msra.mxu0 0.0
    %1762 = vmatprep.subr.mxu0 0.0
    %1763 = vmatpush1.xpose.msra.mxu0 0.0
    %1764 = vmatprep.subr.mxu0 0.0
    %1765 = vmatpush1.xpose.msra.mxu0 0.0
    %1766 = vmatprep.subr.mxu0 0.0
    %1767 = vmatpush1.xpose.msra.mxu0 0.0
    %1768 = vmatprep.subr.mxu0 0.0
    %1769 = vmatpush1.xpose.msra.mxu0 0.0
    %1770 = vmatprep.subr.mxu0 0.0
    %1771 = vmatpush1.xpose.msra.mxu0 0.0
    %1772 = vmatprep.subr.mxu0 0.0
    %1773 = vmatpush1.xpose.msra.mxu0 0.0
    %1774 = vmatprep.subr.mxu0 0.0
    %1775 = vmatpush1.xpose.msra.mxu0 0.0
    %1776 = vmatprep.subr.mxu0 0.0
    %1777 = vmatpush1.xpose.msra.mxu0 0.0
    %1778 = vmatprep.subr.mxu0 0.0
    %1779 = vmatpush1.xpose.msra.mxu0 0.0
    %1780 = vmatprep.subr.mxu0 0.0
    %1781 = vmatpush1.xpose.msra.mxu0 0.0
    %1782 = vmatprep.subr.mxu0 0.0
    %1783 = vmatpush1.xpose.msra.mxu0 0.0
    %1784 = vmatprep.subr.mxu0 0.0
    %1785 = vmatpush1.xpose.msra.mxu0 0.0
    %1786 = vmatprep.subr.mxu0 0.0
    %1787 = vmatpush1.xpose.msra.mxu0 0.0
    %1788 = vmatprep.subr.mxu0 0.0
    %1789 = vmatpush1.xpose.msra.mxu0 0.0
    %1790 = vmatprep.subr.mxu0 0.0
    %1791 = vmatpush1.xpose.msra.mxu0 0.0
    %1792 = vmatprep.mubr.f32.mxu0 0.0
    %1793 = vmatmul.mubr.f32.gmra.mrb[0].mxu0 %v1724
    %v1794 = vpop.f32.mrb[0].mxu0
    %v1795 = vadd.f32 %v1554, %v1794
    %v1796 = vpop.f32.mrb[0].mxu0
    %1797 = vdwg.mxu0
    %v1798 = vsel %vm465, %v1795, -inf
    %1799 = vmax.xlane.f32.xlu0 %v1798
    %v1800 = vpop.xlane.xlu0 %1799
    %v1801 = vsub.f32 %v1795, %v1800
    %v1802 = vmul.f32 %v1801, 1.442695
    %v1803 = vpow.pop %v1802
    %v1804 = vsel %vm465, %v1803, 0.0
    %1805 = vadd.xlane.f32.xlu0 %v1804
    %v1806 = vpop.xlane.xlu0 %1805
    %v1807 = vrcp.pop %v1806
    %v1808 = vmul.f32 %v1803, %v1807
    %1809 = vrot.lane.b32.xlu0 %v1542, 48
    %v1810 = vpop.permute.xlu0 %1809
    %v1813 = vsel %vm465, %v1808, 0
    %1815 = vmatprep.subr.mxu0 0.0
    %1816 = vmatpush1.msra.mxu0 %v1810
    %1817 = vmatprep.subr.mxu0 0.0
    %1818 = vmatpush1.msra.mxu0 0.0
    %1819 = vmatprep.subr.mxu0 0.0
    %1820 = vmatpush1.msra.mxu0 0.0
    %1821 = vmatprep.subr.mxu0 0.0
    %1822 = vmatpush1.msra.mxu0 0.0
    %1823 = vmatprep.subr.mxu0 0.0
    %1824 = vmatpush1.msra.mxu0 0.0
    %1825 = vmatprep.subr.mxu0 0.0
    %1826 = vmatpush1.msra.mxu0 0.0
    %1827 = vmatprep.subr.mxu0 0.0
    %1828 = vmatpush1.msra.mxu0 0.0
    %1829 = vmatprep.subr.mxu0 0.0
    %1830 = vmatpush1.msra.mxu0 0.0
    %1831 = vmatprep.subr.mxu0 0.0
    %1832 = vmatpush1.msra.mxu0 0.0
    %1833 = vmatprep.subr.mxu0 0.0
    %1834 = vmatpush1.msra.mxu0 0.0
    %1835 = vmatprep.subr.mxu0 0.0
    %1836 = vmatpush1.msra.mxu0 0.0
    %1837 = vmatprep.subr.mxu0 0.0
    %1838 = vmatpush1.msra.mxu0 0.0
    %1839 = vmatprep.subr.mxu0 0.0
    %1840 = vmatpush1.msra.mxu0 0.0
    %1841 = vmatprep.subr.mxu0 0.0
    %1842 = vmatpush1.msra.mxu0 0.0
    %1843 = vmatprep.subr.mxu0 0.0
    %1844 = vmatpush1.msra.mxu0 0.0
    %1845 = vmatprep.subr.mxu0 0.0
    %1846 = vmatpush1.msra.mxu0 0.0
    %1847 = vmatprep.subr.mxu0 0.0
    %1848 = vmatpush1.msra.mxu0 0.0
    %1849 = vmatprep.subr.mxu0 0.0
    %1850 = vmatpush1.msra.mxu0 0.0
    %1851 = vmatprep.subr.mxu0 0.0
    %1852 = vmatpush1.msra.mxu0 0.0
    %1853 = vmatprep.subr.mxu0 0.0
    %1854 = vmatpush1.msra.mxu0 0.0
    %1855 = vmatprep.subr.mxu0 0.0
    %1856 = vmatpush1.msra.mxu0 0.0
    %1857 = vmatprep.subr.mxu0 0.0
    %1858 = vmatpush1.msra.mxu0 0.0
    %1859 = vmatprep.subr.mxu0 0.0
    %1860 = vmatpush1.msra.mxu0 0.0
    %1861 = vmatprep.subr.mxu0 0.0
    %1862 = vmatpush1.msra.mxu0 0.0
    %1863 = vmatprep.subr.mxu0 0.0
    %1864 = vmatpush1.msra.mxu0 0.0
    %1865 = vmatprep.subr.mxu0 0.0
    %1866 = vmatpush1.msra.mxu0 0.0
    %1867 = vmatprep.subr.mxu0 0.0
    %1868 = vmatpush1.msra.mxu0 0.0
    %1869 = vmatprep.subr.mxu0 0.0
    %1870 = vmatpush1.msra.mxu0 0.0
    %1871 = vmatprep.subr.mxu0 0.0
    %1872 = vmatpush1.msra.mxu0 0.0
    %1873 = vmatprep.subr.mxu0 0.0
    %1874 = vmatpush1.msra.mxu0 0.0
    %1875 = vmatprep.subr.mxu0 0.0
    %1876 = vmatpush1.msra.mxu0 0.0
    %1877 = vmatprep.subr.mxu0 0.0
    %1878 = vmatpush1.msra.mxu0 0.0
    %1879 = vmatprep.mubr.f32.mxu0 0.0
    %1880 = vmatmul.mubr.f32.gmra.mrb[0].mxu0 %v1813
    %v1881 = vpop.f32.mrb[0].mxu0
    %v1882 = vadd.f32 0.0, %v1881
    %v1883 = vpop.f32.mrb[0].mxu0
    %1884 = vdwg.mxu0
    %1886 = vrot.lane.b32.xlu0 %v1882, 16
    %v1887 = vpop.permute.xlu0 %1886
    %1889 = vst.msk [vmem:[#allocation2] sm:$0xff] %vm723, %v1887
    %v1890 = vld [vmem:[#allocation6 + $0x1] sm:$0x1]
    %v1891 = vlaneseq
    %v1892 = vshrl.u32 %v1891, 7
    %v1893 = vsub.s32 0, %v1892
    %v1894 = vrot.slane %v1890, %v1893
    %1896 = vrot.lane.b32.xlu0 %v1547, 96
    %v1897 = vpop.permute.xlu0 %1896
    %v1898 = vsel %vm390, %v1547, 0
    %v1900 = vsel %vm390, %v1897, 0
    %1902 = vmatprep.subr.mxu0 0.0
    %1903 = vmatpush1.xpose.msra.mxu0 %v1900
    %1904 = vmatprep.subr.mxu0 0.0
    %1905 = vmatpush1.xpose.msra.mxu0 0.0
    %1906 = vmatprep.subr.mxu0 0.0
    %1907 = vmatpush1.xpose.msra.mxu0 0.0
    %1908 = vmatprep.subr.mxu0 0.0
    %1909 = vmatpush1.xpose.msra.mxu0 0.0
    %1910 = vmatprep.subr.mxu0 0.0
    %1911 = vmatpush1.xpose.msra.mxu0 0.0
    %1912 = vmatprep.subr.mxu0 0.0
    %1913 = vmatpush1.xpose.msra.mxu0 0.0
    %1914 = vmatprep.subr.mxu0 0.0
    %1915 = vmatpush1.xpose.msra.mxu0 0.0
    %1916 = vmatprep.subr.mxu0 0.0
    %1917 = vmatpush1.xpose.msra.mxu0 0.0
    %1918 = vmatprep.subr.mxu0 0.0
    %1919 = vmatpush1.xpose.msra.mxu0 0.0
    %1920 = vmatprep.subr.mxu0 0.0
    %1921 = vmatpush1.xpose.msra.mxu0 0.0
    %1922 = vmatprep.subr.mxu0 0.0
    %1923 = vmatpush1.xpose.msra.mxu0 0.0
    %1924 = vmatprep.subr.mxu0 0.0
    %1925 = vmatpush1.xpose.msra.mxu0 0.0
    %1926 = vmatprep.subr.mxu0 0.0
    %1927 = vmatpush1.xpose.msra.mxu0 0.0
    %1928 = vmatprep.subr.mxu0 0.0
    %1929 = vmatpush1.xpose.msra.mxu0 0.0
    %1930 = vmatprep.subr.mxu0 0.0
    %1931 = vmatpush1.xpose.msra.mxu0 0.0
    %1932 = vmatprep.subr.mxu0 0.0
    %1933 = vmatpush1.xpose.msra.mxu0 0.0
    %1934 = vmatprep.subr.mxu0 0.0
    %1935 = vmatpush1.xpose.msra.mxu0 0.0
    %1936 = vmatprep.subr.mxu0 0.0
    %1937 = vmatpush1.xpose.msra.mxu0 0.0
    %1938 = vmatprep.subr.mxu0 0.0
    %1939 = vmatpush1.xpose.msra.mxu0 0.0
    %1940 = vmatprep.subr.mxu0 0.0
    %1941 = vmatpush1.xpose.msra.mxu0 0.0
    %1942 = vmatprep.subr.mxu0 0.0
    %1943 = vmatpush1.xpose.msra.mxu0 0.0
    %1944 = vmatprep.subr.mxu0 0.0
    %1945 = vmatpush1.xpose.msra.mxu0 0.0
    %1946 = vmatprep.subr.mxu0 0.0
    %1947 = vmatpush1.xpose.msra.mxu0 0.0
    %1948 = vmatprep.subr.mxu0 0.0
    %1949 = vmatpush1.xpose.msra.mxu0 0.0
    %1950 = vmatprep.subr.mxu0 0.0
    %1951 = vmatpush1.xpose.msra.mxu0 0.0
    %1952 = vmatprep.subr.mxu0 0.0
    %1953 = vmatpush1.xpose.msra.mxu0 0.0
    %1954 = vmatprep.subr.mxu0 0.0
    %1955 = vmatpush1.xpose.msra.mxu0 0.0
    %1956 = vmatprep.subr.mxu0 0.0
    %1957 = vmatpush1.xpose.msra.mxu0 0.0
    %1958 = vmatprep.subr.mxu0 0.0
    %1959 = vmatpush1.xpose.msra.mxu0 0.0
    %1960 = vmatprep.subr.mxu0 0.0
    %1961 = vmatpush1.xpose.msra.mxu0 0.0
    %1962 = vmatprep.subr.mxu0 0.0
    %1963 = vmatpush1.xpose.msra.mxu0 0.0
    %1964 = vmatprep.subr.mxu0 0.0
    %1965 = vmatpush1.xpose.msra.mxu0 0.0
    %1966 = vmatprep.mubr.f32.mxu0 0.0
    %1967 = vmatmul.mubr.f32.gmra.mrb[0].mxu0 %v1898
    %v1968 = vpop.f32.mrb[0].mxu0
    %v1969 = vadd.f32 %v1894, %v1968
    %v1970 = vpop.f32.mrb[0].mxu0
    %1971 = vdwg.mxu0
    %v1972 = vsel %vm465, %v1969, -inf
    %1973 = vmax.xlane.f32.xlu0 %v1972
    %v1974 = vpop.xlane.xlu0 %1973
    %v1975 = vsub.f32 %v1969, %v1974
    %v1976 = vmul.f32 %v1975, 1.442695
    %v1977 = vpow.pop %v1976
    %v1978 = vsel %vm465, %v1977, 0.0
    %1979 = vadd.xlane.f32.xlu0 %v1978
    %v1980 = vpop.xlane.xlu0 %1979
    %v1981 = vrcp.pop %v1980
    %v1982 = vmul.f32 %v1977, %v1981
    %1983 = vrot.lane.b32.xlu0 %v1547, 64
    %v1984 = vpop.permute.xlu0 %1983
    %v1987 = vsel %vm465, %v1982, 0
    %1989 = vmatprep.subr.mxu0 0.0
    %1990 = vmatpush1.msra.mxu0 %v1984
    %1991 = vmatprep.subr.mxu0 0.0
    %1992 = vmatpush1.msra.mxu0 0.0
    %1993 = vmatprep.subr.mxu0 0.0
    %1994 = vmatpush1.msra.mxu0 0.0
    %1995 = vmatprep.subr.mxu0 0.0
    %1996 = vmatpush1.msra.mxu0 0.0
    %1997 = vmatprep.subr.mxu0 0.0
    %1998 = vmatpush1.msra.mxu0 0.0
    %1999 = vmatprep.subr.mxu0 0.0
    %2000 = vmatpush1.msra.mxu0 0.0
    %2001 = vmatprep.subr.mxu0 0.0
    %2002 = vmatpush1.msra.mxu0 0.0
    %2003 = vmatprep.subr.mxu0 0.0
    %2004 = vmatpush1.msra.mxu0 0.0
    %2005 = vmatprep.subr.mxu0 0.0
    %2006 = vmatpush1.msra.mxu0 0.0
    %2007 = vmatprep.subr.mxu0 0.0
    %2008 = vmatpush1.msra.mxu0 0.0
    %2009 = vmatprep.subr.mxu0 0.0
    %2010 = vmatpush1.msra.mxu0 0.0
    %2011 = vmatprep.subr.mxu0 0.0
    %2012 = vmatpush1.msra.mxu0 0.0
    %2013 = vmatprep.subr.mxu0 0.0
    %2014 = vmatpush1.msra.mxu0 0.0
    %2015 = vmatprep.subr.mxu0 0.0
    %2016 = vmatpush1.msra.mxu0 0.0
    %2017 = vmatprep.subr.mxu0 0.0
    %2018 = vmatpush1.msra.mxu0 0.0
    %2019 = vmatprep.subr.mxu0 0.0
    %2020 = vmatpush1.msra.mxu0 0.0
    %2021 = vmatprep.subr.mxu0 0.0
    %2022 = vmatpush1.msra.mxu0 0.0
    %2023 = vmatprep.subr.mxu0 0.0
    %2024 = vmatpush1.msra.mxu0 0.0
    %2025 = vmatprep.subr.mxu0 0.0
    %2026 = vmatpush1.msra.mxu0 0.0
    %2027 = vmatprep.subr.mxu0 0.0
    %2028 = vmatpush1.msra.mxu0 0.0
    %2029 = vmatprep.subr.mxu0 0.0
    %2030 = vmatpush1.msra.mxu0 0.0
    %2031 = vmatprep.subr.mxu0 0.0
    %2032 = vmatpush1.msra.mxu0 0.0
    %2033 = vmatprep.subr.mxu0 0.0
    %2034 = vmatpush1.msra.mxu0 0.0
    %2035 = vmatprep.subr.mxu0 0.0
    %2036 = vmatpush1.msra.mxu0 0.0
    %2037 = vmatprep.subr.mxu0 0.0
    %2038 = vmatpush1.msra.mxu0 0.0
    %2039 = vmatprep.subr.mxu0 0.0
    %2040 = vmatpush1.msra.mxu0 0.0
    %2041 = vmatprep.subr.mxu0 0.0
    %2042 = vmatpush1.msra.mxu0 0.0
    %2043 = vmatprep.subr.mxu0 0.0
    %2044 = vmatpush1.msra.mxu0 0.0
    %2045 = vmatprep.subr.mxu0 0.0
    %2046 = vmatpush1.msra.mxu0 0.0
    %2047 = vmatprep.subr.mxu0 0.0
    %2048 = vmatpush1.msra.mxu0 0.0
    %2049 = vmatprep.subr.mxu0 0.0
    %2050 = vmatpush1.msra.mxu0 0.0
    %2051 = vmatprep.subr.mxu0 0.0
    %2052 = vmatpush1.msra.mxu0 0.0
    %2053 = vmatprep.mubr.f32.mxu0 0.0
    %2054 = vmatmul.mubr.f32.gmra.mrb[0].mxu0 %v1987
    %v2055 = vpop.f32.mrb[0].mxu0
    %v2056 = vadd.f32 0.0, %v2055
    %v2057 = vpop.f32.mrb[0].mxu0
    %2058 = vdwg.mxu0
    %2059 = vst.msk [vmem:[#allocation2 + $0x8] sm:$0xff] %vm390, %v2056
    %2060 = vrot.lane.b32.xlu0 %v1547, 112
    %v2061 = vpop.permute.xlu0 %2060
    %2062 = vrot.lane.b32.xlu0 %v1547, 80
    %v2063 = vpop.permute.xlu0 %2062
    %v2064 = vsel %vm390, %v2061, 0
    %v2066 = vsel %vm390, %v2063, 0
    %2068 = vmatprep.subr.mxu0 0.0
    %2069 = vmatpush1.xpose.msra.mxu0 %v2066
    %2070 = vmatprep.subr.mxu0 0.0
    %2071 = vmatpush1.xpose.msra.mxu0 0.0
    %2072 = vmatprep.subr.mxu0 0.0
    %2073 = vmatpush1.xpose.msra.mxu0 0.0
    %2074 = vmatprep.subr.mxu0 0.0
    %2075 = vmatpush1.xpose.msra.mxu0 0.0
    %2076 = vmatprep.subr.mxu0 0.0
    %2077 = vmatpush1.xpose.msra.mxu0 0.0
    %2078 = vmatprep.subr.mxu0 0.0
    %2079 = vmatpush1.xpose.msra.mxu0 0.0
    %2080 = vmatprep.subr.mxu0 0.0
    %2081 = vmatpush1.xpose.msra.mxu0 0.0
    %2082 = vmatprep.subr.mxu0 0.0
    %2083 = vmatpush1.xpose.msra.mxu0 0.0
    %2084 = vmatprep.subr.mxu0 0.0
    %2085 = vmatpush1.xpose.msra.mxu0 0.0
    %2086 = vmatprep.subr.mxu0 0.0
    %2087 = vmatpush1.xpose.msra.mxu0 0.0
    %2088 = vmatprep.subr.mxu0 0.0
    %2089 = vmatpush1.xpose.msra.mxu0 0.0
    %2090 = vmatprep.subr.mxu0 0.0
    %2091 = vmatpush1.xpose.msra.mxu0 0.0
    %2092 = vmatprep.subr.mxu0 0.0
    %2093 = vmatpush1.xpose.msra.mxu0 0.0
    %2094 = vmatprep.subr.mxu0 0.0
    %2095 = vmatpush1.xpose.msra.mxu0 0.0
    %2096 = vmatprep.subr.mxu0 0.0
    %2097 = vmatpush1.xpose.msra.mxu0 0.0
    %2098 = vmatprep.subr.mxu0 0.0
    %2099 = vmatpush1.xpose.msra.mxu0 0.0
    %2100 = vmatprep.subr.mxu0 0.0
    %2101 = vmatpush1.xpose.msra.mxu0 0.0
    %2102 = vmatprep.subr.mxu0 0.0
    %2103 = vmatpush1.xpose.msra.mxu0 0.0
    %2104 = vmatprep.subr.mxu0 0.0
    %2105 = vmatpush1.xpose.msra.mxu0 0.0
    %2106 = vmatprep.subr.mxu0 0.0
    %2107 = vmatpush1.xpose.msra.mxu0 0.0
    %2108 = vmatprep.subr.mxu0 0.0
    %2109 = vmatpush1.xpose.msra.mxu0 0.0
    %2110 = vmatprep.subr.mxu0 0.0
    %2111 = vmatpush1.xpose.msra.mxu0 0.0
    %2112 = vmatprep.subr.mxu0 0.0
    %2113 = vmatpush1.xpose.msra.mxu0 0.0
    %2114 = vmatprep.subr.mxu0 0.0
    %2115 = vmatpush1.xpose.msra.mxu0 0.0
    %2116 = vmatprep.subr.mxu0 0.0
    %2117 = vmatpush1.xpose.msra.mxu0 0.0
    %2118 = vmatprep.subr.mxu0 0.0
    %2119 = vmatpush1.xpose.msra.mxu0 0.0
    %2120 = vmatprep.subr.mxu0 0.0
    %2121 = vmatpush1.xpose.msra.mxu0 0.0
    %2122 = vmatprep.subr.mxu0 0.0
    %2123 = vmatpush1.xpose.msra.mxu0 0.0
    %2124 = vmatprep.subr.mxu0 0.0
    %2125 = vmatpush1.xpose.msra.mxu0 0.0
    %2126 = vmatprep.subr.mxu0 0.0
    %2127 = vmatpush1.xpose.msra.mxu0 0.0
    %2128 = vmatprep.subr.mxu0 0.0
    %2129 = vmatpush1.xpose.msra.mxu0 0.0
    %2130 = vmatprep.subr.mxu0 0.0
    %2131 = vmatpush1.xpose.msra.mxu0 0.0
    %2132 = vmatprep.mubr.f32.mxu0 0.0
    %2133 = vmatmul.mubr.f32.gmra.mrb[0].mxu0 %v2064
    %v2134 = vpop.f32.mrb[0].mxu0
    %v2135 = vadd.f32 %v1894, %v2134
    %v2136 = vpop.f32.mrb[0].mxu0
    %2137 = vdwg.mxu0
    %v2138 = vsel %vm465, %v2135, -inf
    %2139 = vmax.xlane.f32.xlu0 %v2138
    %v2140 = vpop.xlane.xlu0 %2139
    %v2141 = vsub.f32 %v2135, %v2140
    %v2142 = vmul.f32 %v2141, 1.442695
    %v2143 = vpow.pop %v2142
    %v2144 = vsel %vm465, %v2143, 0.0
    %2145 = vadd.xlane.f32.xlu0 %v2144
    %v2146 = vpop.xlane.xlu0 %2145
    %v2147 = vrcp.pop %v2146
    %v2148 = vmul.f32 %v2143, %v2147
    %2149 = vrot.lane.b32.xlu0 %v1547, 48
    %v2150 = vpop.permute.xlu0 %2149
    %v2153 = vsel %vm465, %v2148, 0
    %2155 = vmatprep.subr.mxu0 0.0
    %2156 = vmatpush1.msra.mxu0 %v2150
    %2157 = vmatprep.subr.mxu0 0.0
    %2158 = vmatpush1.msra.mxu0 0.0
    %2159 = vmatprep.subr.mxu0 0.0
    %2160 = vmatpush1.msra.mxu0 0.0
    %2161 = vmatprep.subr.mxu0 0.0
    %2162 = vmatpush1.msra.mxu0 0.0
    %2163 = vmatprep.subr.mxu0 0.0
    %2164 = vmatpush1.msra.mxu0 0.0
    %2165 = vmatprep.subr.mxu0 0.0
    %2166 = vmatpush1.msra.mxu0 0.0
    %2167 = vmatprep.subr.mxu0 0.0
    %2168 = vmatpush1.msra.mxu0 0.0
    %2169 = vmatprep.subr.mxu0 0.0
    %2170 = vmatpush1.msra.mxu0 0.0
    %2171 = vmatprep.subr.mxu0 0.0
    %2172 = vmatpush1.msra.mxu0 0.0
    %2173 = vmatprep.subr.mxu0 0.0
    %2174 = vmatpush1.msra.mxu0 0.0
    %2175 = vmatprep.subr.mxu0 0.0
    %2176 = vmatpush1.msra.mxu0 0.0
    %2177 = vmatprep.subr.mxu0 0.0
    %2178 = vmatpush1.msra.mxu0 0.0
    %2179 = vmatprep.subr.mxu0 0.0
    %2180 = vmatpush1.msra.mxu0 0.0
    %2181 = vmatprep.subr.mxu0 0.0
    %2182 = vmatpush1.msra.mxu0 0.0
    %2183 = vmatprep.subr.mxu0 0.0
    %2184 = vmatpush1.msra.mxu0 0.0
    %2185 = vmatprep.subr.mxu0 0.0
    %2186 = vmatpush1.msra.mxu0 0.0
    %2187 = vmatprep.subr.mxu0 0.0
    %2188 = vmatpush1.msra.mxu0 0.0
    %2189 = vmatprep.subr.mxu0 0.0
    %2190 = vmatpush1.msra.mxu0 0.0
    %2191 = vmatprep.subr.mxu0 0.0
    %2192 = vmatpush1.msra.mxu0 0.0
    %2193 = vmatprep.subr.mxu0 0.0
    %2194 = vmatpush1.msra.mxu0 0.0
    %2195 = vmatprep.subr.mxu0 0.0
    %2196 = vmatpush1.msra.mxu0 0.0
    %2197 = vmatprep.subr.mxu0 0.0
    %2198 = vmatpush1.msra.mxu0 0.0
    %2199 = vmatprep.subr.mxu0 0.0
    %2200 = vmatpush1.msra.mxu0 0.0
    %2201 = vmatprep.subr.mxu0 0.0
    %2202 = vmatpush1.msra.mxu0 0.0
    %2203 = vmatprep.subr.mxu0 0.0
    %2204 = vmatpush1.msra.mxu0 0.0
    %2205 = vmatprep.subr.mxu0 0.0
    %2206 = vmatpush1.msra.mxu0 0.0
    %2207 = vmatprep.subr.mxu0 0.0
    %2208 = vmatpush1.msra.mxu0 0.0
    %2209 = vmatprep.subr.mxu0 0.0
    %2210 = vmatpush1.msra.mxu0 0.0
    %2211 = vmatprep.subr.mxu0 0.0
    %2212 = vmatpush1.msra.mxu0 0.0
    %2213 = vmatprep.subr.mxu0 0.0
    %2214 = vmatpush1.msra.mxu0 0.0
    %2215 = vmatprep.subr.mxu0 0.0
    %2216 = vmatpush1.msra.mxu0 0.0
    %2217 = vmatprep.subr.mxu0 0.0
    %2218 = vmatpush1.msra.mxu0 0.0
    %2219 = vmatprep.mubr.f32.mxu0 0.0
    %2220 = vmatmul.mubr.f32.gmra.mrb[0].mxu0 %v2153
    %v2221 = vpop.f32.mrb[0].mxu0
    %v2222 = vadd.f32 0.0, %v2221
    %v2223 = vpop.f32.mrb[0].mxu0
    %2224 = vdwg.mxu0
    %2226 = vrot.lane.b32.xlu0 %v2222, 16
    %v2227 = vpop.permute.xlu0 %2226
    %2229 = vst.msk [vmem:[#allocation2 + $0x8] sm:$0xff] %vm723, %v2227
    %v2230 = vld [vmem:[#allocation2] sm:$0xff]
    %v2231 = vld [vmem:[#allocation2 + $0x8] sm:$0xff]
    %v2232 = vld [vmem:[%s18] sm:$0xff]
    %v2233 = vld [vmem:[%s18 + $0x8] sm:$0xff]
    %v2234 = vld [vmem:[%s18 + $0x10] sm:$0xff]
    %v2235 = vld [vmem:[%s18 + $0x18] sm:$0xff]
    %v2236 = vld [vmem:[%s19] sm:$0x1]
    %v2238 = vlaneseq
    %v2239 = vshrl.u32 %v2238, 7
    %v2240 = vsub.s32 0, %v2239
    %v2241 = vrot.slane %v2236, %v2240
    %v2244 = vsel %vm246, %v2230, 0
    %v2247 = vsel %vm246, %v2231, 0
    %2249 = vmatprep.subr.mxu0 0.0
    %2250 = vmatpush1.msra.mxu0 %v2232
    %2251 = vmatprep.subr.mxu0 0.0
    %2252 = vmatpush1.msra.mxu0 %v2233
    %2253 = vmatprep.subr.mxu0 0.0
    %2254 = vmatpush1.msra.mxu0 %v2234
    %2255 = vmatprep.subr.mxu0 0.0
    %2256 = vmatpush1.msra.mxu0 %v2235
    %2257 = vmatprep.subr.mxu0 0.0
    %2258 = vmatpush1.msra.mxu0 0.0
    %2259 = vmatprep.subr.mxu0 0.0
    %2260 = vmatpush1.msra.mxu0 0.0
    %2261 = vmatprep.subr.mxu0 0.0
    %2262 = vmatpush1.msra.mxu0 0.0
    %2263 = vmatprep.subr.mxu0 0.0
    %2264 = vmatpush1.msra.mxu0 0.0
    %2265 = vmatprep.subr.mxu0 0.0
    %2266 = vmatpush1.msra.mxu0 0.0
    %2267 = vmatprep.subr.mxu0 0.0
    %2268 = vmatpush1.msra.mxu0 0.0
    %2269 = vmatprep.subr.mxu0 0.0
    %2270 = vmatpush1.msra.mxu0 0.0
    %2271 = vmatprep.subr.mxu0 0.0
    %2272 = vmatpush1.msra.mxu0 0.0
    %2273 = vmatprep.subr.mxu0 0.0
    %2274 = vmatpush1.msra.mxu0 0.0
    %2275 = vmatprep.subr.mxu0 0.0
    %2276 = vmatpush1.msra.mxu0 0.0
    %2277 = vmatprep.subr.mxu0 0.0
    %2278 = vmatpush1.msra.mxu0 0.0
    %2279 = vmatprep.subr.mxu0 0.0
    %2280 = vmatpush1.msra.mxu0 0.0
    %2281 = vmatprep.subr.mxu0 0.0
    %2282 = vmatpush1.msra.mxu0 0.0
    %2283 = vmatprep.subr.mxu0 0.0
    %2284 = vmatpush1.msra.mxu0 0.0
    %2285 = vmatprep.subr.mxu0 0.0
    %2286 = vmatpush1.msra.mxu0 0.0
    %2287 = vmatprep.subr.mxu0 0.0
    %2288 = vmatpush1.msra.mxu0 0.0
    %2289 = vmatprep.subr.mxu0 0.0
    %2290 = vmatpush1.msra.mxu0 0.0
    %2291 = vmatprep.subr.mxu0 0.0
    %2292 = vmatpush1.msra.mxu0 0.0
    %2293 = vmatprep.subr.mxu0 0.0
    %2294 = vmatpush1.msra.mxu0 0.0
    %2295 = vmatprep.subr.mxu0 0.0
    %2296 = vmatpush1.msra.mxu0 0.0
    %2297 = vmatprep.subr.mxu0 0.0
    %2298 = vmatpush1.msra.mxu0 0.0
    %2299 = vmatprep.subr.mxu0 0.0
    %2300 = vmatpush1.msra.mxu0 0.0
    %2301 = vmatprep.subr.mxu0 0.0
    %2302 = vmatpush1.msra.mxu0 0.0
    %2303 = vmatprep.subr.mxu0 0.0
    %2304 = vmatpush1.msra.mxu0 0.0
    %2305 = vmatprep.subr.mxu0 0.0
    %2306 = vmatpush1.msra.mxu0 0.0
    %2307 = vmatprep.subr.mxu0 0.0
    %2308 = vmatpush1.msra.mxu0 0.0
    %2309 = vmatprep.subr.mxu0 0.0
    %2310 = vmatpush1.msra.mxu0 0.0
    %2311 = vmatprep.subr.mxu0 0.0
    %2312 = vmatpush1.msra.mxu0 0.0
    %2313 = vmatprep.mubr.f32.mxu0 0.0
    %2314 = vmatmul.mubr.f32.gmra.mrb[0].mxu0 %v2244
    %v2315 = vpop.f32.mrb[0].mxu0
    %v2316 = vadd.f32 %v2241, %v2315
    %v2317 = vpop.f32.mrb[0].mxu0
    %2318 = vmatprep.mubr.f32.mxu0 0.0
    %2319 = vmatmul.mubr.f32.gmra.mrb[0].mxu0 %v2247
    %v2320 = vpop.f32.mrb[0].mxu0
    %v2321 = vadd.f32 %v2241, %v2320
    %v2322 = vpop.f32.mrb[0].mxu0
    %2323 = vdwg.mxu0
    %v2324 = vadd.f32 %v1456, %v2316
    %v2325 = vadd.f32 %v1457, %v2321
    %v2326 = vld [vmem:[%s20] sm:$0x1]
    %v2327 = vld [vmem:[%s21] sm:$0x1]
    %v2328 = vsel %vm246, %v2324, 0.0
    %2329 = vadd.xlane.f32.xlu0 %v2328
    %v2330 = vpop.xlane.xlu0 %2329
    %v2331 = vsel %vm246, %v2325, 0.0
    %2332 = vadd.xlane.f32.xlu0 %v2331
    %v2333 = vpop.xlane.xlu0 %2332
    %v2334 = vmul.f32 %v2330, %v253
    %v2335 = vmul.f32 %v2333, %v253
    %v2336 = vsub.f32 %v2324, %v2334
    %v2337 = vsub.f32 %v2325, %v2335
    %v2338 = vmul.f32 %v2336, %v2336
    %v2339 = vmul.f32 %v2337, %v2337
    %v2340 = vsel %vm246, %v2338, 0.0
    %2341 = vadd.xlane.f32.xlu0 %v2340
    %v2342 = vpop.xlane.xlu0 %2341
    %v2343 = vsel %vm246, %v2339, 0.0
    %2344 = vadd.xlane.f32.xlu0 %v2343
    %v2345 = vpop.xlane.xlu0 %2344
    %v2346 = vmul.f32 %v2342, %v253
    %v2347 = vmul.f32 %v2345, %v253
    %v2348 = vadd.f32 %v2346, 1e-12
    %v2349 = vadd.f32 %v2347, 1e-12
    %v2350 = vrsqrt.pop %v2348
    %v2351 = vrsqrt.pop %v2349
    %v2352 = vmul.f32 %v2336, %v2350
    %v2353 = vmul.f32 %v2337, %v2351
    %v2355 = vlaneseq
    %v2356 = vshrl.u32 %v2355, 7
    %v2357 = vsub.s32 0, %v2356
    %v2358 = vrot.slane %v2326, %v2357
    %v2360 = vmul.f32 %v2352, %v2358
    %v2361 = vmul.f32 %v2353, %v2358
    %v2363 = vlaneseq
    %v2364 = vshrl.u32 %v2363, 7
    %v2365 = vsub.s32 0, %v2364
    %v2366 = vrot.slane %v2327, %v2365
    %v2368 = vadd.f32 %v2360, %v2366
    %v2369 = vadd.f32 %v2361, %v2366
    %v2370 = vld [vmem:[%s22] sm:$0xff]
    %v2371 = vld [vmem:[%s22 + $0x8] sm:$0xff]
    %v2372 = vld [vmem:[%s22 + $0x10] sm:$0xff]
    %v2373 = vld [vmem:[%s22 + $0x18] sm:$0xff]
    %v2374 = vld [vmem:[%s23] sm:$0x1]
    %v2376 = vlaneseq
    %v2377 = vshrl.u32 %v2376, 7
    %v2378 = vsub.s32 0, %v2377
    %v2379 = vrot.slane %v2374, %v2378
    %v2382 = vsel %vm246, %v2368, 0
    %v2385 = vsel %vm246, %v2369, 0
    %2387 = vmatprep.subr.mxu0 0.0
    %2388 = vmatpush1.msra.mxu0 %v2370
    %2389 = vmatprep.subr.mxu0 0.0
    %2390 = vmatpush1.msra.mxu0 %v2371
    %2391 = vmatprep.subr.mxu0 0.0
    %2392 = vmatpush1.msra.mxu0 %v2372
    %2393 = vmatprep.subr.mxu0 0.0
    %2394 = vmatpush1.msra.mxu0 %v2373
    %2395 = vmatprep.subr.mxu0 0.0
    %2396 = vmatpush1.msra.mxu0 0.0
    %2397 = vmatprep.subr.mxu0 0.0
    %2398 = vmatpush1.msra.mxu0 0.0
    %2399 = vmatprep.subr.mxu0 0.0
    %2400 = vmatpush1.msra.mxu0 0.0
    %2401 = vmatprep.subr.mxu0 0.0
    %2402 = vmatpush1.msra.mxu0 0.0
    %2403 = vmatprep.subr.mxu0 0.0
    %2404 = vmatpush1.msra.mxu0 0.0
    %2405 = vmatprep.subr.mxu0 0.0
    %2406 = vmatpush1.msra.mxu0 0.0
    %2407 = vmatprep.subr.mxu0 0.0
    %2408 = vmatpush1.msra.mxu0 0.0
    %2409 = vmatprep.subr.mxu0 0.0
    %2410 = vmatpush1.msra.mxu0 0.0
    %2411 = vmatprep.subr.mxu0 0.0
    %2412 = vmatpush1.msra.mxu0 0.0
    %2413 = vmatprep.subr.mxu0 0.0
    %2414 = vmatpush1.msra.mxu0 0.0
    %2415 = vmatprep.subr.mxu0 0.0
    %2416 = vmatpush1.msra.mxu0 0.0
    %2417 = vmatprep.subr.mxu0 0.0
    %2418 = vmatpush1.msra.mxu0 0.0
    %2419 = vmatprep.subr.mxu0 0.0
    %2420 = vmatpush1.msra.mxu0 0.0
    %2421 = vmatprep.subr.mxu0 0.0
    %2422 = vmatpush1.msra.mxu0 0.0
    %2423 = vmatprep.subr.mxu0 0.0
    %2424 = vmatpush1.msra.mxu0 0.0
    %2425 = vmatprep.subr.mxu0 0.0
    %2426 = vmatpush1.msra.mxu0 0.0
    %2427 = vmatprep.subr.mxu0 0.0
    %2428 = vmatpush1.msra.mxu0 0.0
    %2429 = vmatprep.subr.mxu0 0.0
    %2430 = vmatpush1.msra.mxu0 0.0
    %2431 = vmatprep.subr.mxu0 0.0
    %2432 = vmatpush1.msra.mxu0 0.0
    %2433 = vmatprep.subr.mxu0 0.0
    %2434 = vmatpush1.msra.mxu0 0.0
    %2435 = vmatprep.subr.mxu0 0.0
    %2436 = vmatpush1.msra.mxu0 0.0
    %2437 = vmatprep.subr.mxu0 0.0
    %2438 = vmatpush1.msra.mxu0 0.0
    %2439 = vmatprep.subr.mxu0 0.0
    %2440 = vmatpush1.msra.mxu0 0.0
    %2441 = vmatprep.subr.mxu0 0.0
    %2442 = vmatpush1.msra.mxu0 0.0
    %2443 = vmatprep.subr.mxu0 0.0
    %2444 = vmatpush1.msra.mxu0 0.0
    %2445 = vmatprep.subr.mxu0 0.0
    %2446 = vmatpush1.msra.mxu0 0.0
    %2447 = vmatprep.subr.mxu0 0.0
    %2448 = vmatpush1.msra.mxu0 0.0
    %2449 = vmatprep.subr.mxu0 0.0
    %2450 = vmatpush1.msra.mxu0 0.0
    %2451 = vmatprep.mubr.f32.mxu0 0.0
    %2452 = vmatmul.mubr.f32.gmra.mrb[0].mxu0 %v2382
    %v2453 = vpop.f32.mrb[0].mxu0
    %v2454 = vadd.f32 %v2379, %v2453
    %v2455 = vpop.f32.mrb[0].mxu0
    %2456 = vmatprep.mubr.f32.mxu0 0.0
    %2457 = vmatmul.mubr.f32.gmra.mrb[0].mxu0 %v2385
    %v2458 = vpop.f32.mrb[0].mxu0
    %v2459 = vadd.f32 %v2379, %v2458
    %v2460 = vpop.f32.mrb[0].mxu0
    %2461 = vdwg.mxu0
    %v2462 = vmul.f32 %v2454, %v2454
    %v2463 = vmul.f32 %v2459, %v2459
    %v2464 = vmul.f32 %v2454, %v2462
    %v2465 = vmul.f32 %v2459, %v2463
    %v2466 = vmul.f32 %v2464, 0.044715
    %v2467 = vmul.f32 %v2465, 0.044715
    %v2468 = vadd.f32 %v2454, %v2466
    %v2469 = vadd.f32 %v2459, %v2467
    %v2470 = vmul.f32 %v2468, 0.7978846
    %v2471 = vmul.f32 %v2469, 0.7978846
    %v2472 = vtanh.pop %v2470
    %v2473 = vtanh.pop %v2471
    %v2474 = vadd.f32 %v2472, 1.0
    %v2475 = vadd.f32 %v2473, 1.0
    %v2476 = vmul.f32 %v2474, 0.5
    %v2477 = vmul.f32 %v2475, 0.5
    %v2478 = vmul.f32 %v2454, %v2476
    %v2479 = vmul.f32 %v2459, %v2477
    %v2480 = vld [vmem:[%s24] sm:$0xff]
    %v2481 = vld [vmem:[%s24 + $0x8] sm:$0xff]
    %v2482 = vld [vmem:[%s24 + $0x10] sm:$0xff]
    %v2483 = vld [vmem:[%s24 + $0x18] sm:$0xff]
    %v2484 = vld [vmem:[%s24 + $0x20] sm:$0xff]
    %v2485 = vld [vmem:[%s24 + $0x28] sm:$0xff]
    %v2486 = vld [vmem:[%s24 + $0x30] sm:$0xff]
    %v2487 = vld [vmem:[%s24 + $0x38] sm:$0xff]
    %v2488 = vld [vmem:[%s25] sm:$0x1]
    %v2490 = vlaneseq
    %v2491 = vshrl.u32 %v2490, 7
    %v2492 = vsub.s32 0, %v2491
    %v2493 = vrot.slane %v2488, %v2492
    %v2496 = vsel %vm1330, %v2478, 0
    %v2499 = vsel %vm1330, %v2479, 0
    %2501 = vmatprep.subr.mxu0 0.0
    %2502 = vmatpush1.msra.mxu0 %v2480
    %2503 = vmatprep.subr.mxu0 0.0
    %2504 = vmatpush1.msra.mxu0 %v2481
    %2505 = vmatprep.subr.mxu0 0.0
    %2506 = vmatpush1.msra.mxu0 %v2482
    %2507 = vmatprep.subr.mxu0 0.0
    %2508 = vmatpush1.msra.mxu0 %v2483
    %2509 = vmatprep.subr.mxu0 0.0
    %2510 = vmatpush1.msra.mxu0 %v2484
    %2511 = vmatprep.subr.mxu0 0.0
    %2512 = vmatpush1.msra.mxu0 %v2485
    %2513 = vmatprep.subr.mxu0 0.0
    %2514 = vmatpush1.msra.mxu0 %v2486
    %2515 = vmatprep.subr.mxu0 0.0
    %2516 = vmatpush1.msra.mxu0 %v2487
    %2517 = vmatprep.subr.mxu0 0.0
    %2518 = vmatpush1.msra.mxu0 0.0
    %2519 = vmatprep.subr.mxu0 0.0
    %2520 = vmatpush1.msra.mxu0 0.0
    %2521 = vmatprep.subr.mxu0 0.0
    %2522 = vmatpush1.msra.mxu0 0.0
    %2523 = vmatprep.subr.mxu0 0.0
    %2524 = vmatpush1.msra.mxu0 0.0
    %2525 = vmatprep.subr.mxu0 0.0
    %2526 = vmatpush1.msra.mxu0 0.0
    %2527 = vmatprep.subr.mxu0 0.0
    %2528 = vmatpush1.msra.mxu0 0.0
    %2529 = vmatprep.subr.mxu0 0.0
    %2530 = vmatpush1.msra.mxu0 0.0
    %2531 = vmatprep.subr.mxu0 0.0
    %2532 = vmatpush1.msra.mxu0 0.0
    %2533 = vmatprep.subr.mxu0 0.0
    %2534 = vmatpush1.msra.mxu0 0.0
    %2535 = vmatprep.subr.mxu0 0.0
    %2536 = vmatpush1.msra.mxu0 0.0
    %2537 = vmatprep.subr.mxu0 0.0
    %2538 = vmatpush1.msra.mxu0 0.0
    %2539 = vmatprep.subr.mxu0 0.0
    %2540 = vmatpush1.msra.mxu0 0.0
    %2541 = vmatprep.subr.mxu0 0.0
    %2542 = vmatpush1.msra.mxu0 0.0
    %2543 = vmatprep.subr.mxu0 0.0
    %2544 = vmatpush1.msra.mxu0 0.0
    %2545 = vmatprep.subr.mxu0 0.0
    %2546 = vmatpush1.msra.mxu0 0.0
    %2547 = vmatprep.subr.mxu0 0.0
    %2548 = vmatpush1.msra.mxu0 0.0
    %2549 = vmatprep.subr.mxu0 0.0
    %2550 = vmatpush1.msra.mxu0 0.0
    %2551 = vmatprep.subr.mxu0 0.0
    %2552 = vmatpush1.msra.mxu0 0.0
    %2553 = vmatprep.subr.mxu0 0.0
    %2554 = vmatpush1.msra.mxu0 0.0
    %2555 = vmatprep.subr.mxu0 0.0
    %2556 = vmatpush1.msra.mxu0 0.0
    %2557 = vmatprep.subr.mxu0 0.0
    %2558 = vmatpush1.msra.mxu0 0.0
    %2559 = vmatprep.subr.mxu0 0.0
    %2560 = vmatpush1.msra.mxu0 0.0
    %2561 = vmatprep.subr.mxu0 0.0
    %2562 = vmatpush1.msra.mxu0 0.0
    %2563 = vmatprep.subr.mxu0 0.0
    %2564 = vmatpush1.msra.mxu0 0.0
    %2565 = vmatprep.mubr.f32.mxu0 0.0
    %2566 = vmatmul.mubr.f32.gmra.mrb[0].mxu0 %v2496
    %v2567 = vpop.f32.mrb[0].mxu0
    %v2568 = vadd.f32 %v2493, %v2567
    %v2569 = vpop.f32.mrb[0].mxu0
    %2570 = vmatprep.mubr.f32.mxu0 0.0
    %2571 = vmatmul.mubr.f32.gmra.mrb[0].mxu0 %v2499
    %v2572 = vpop.f32.mrb[0].mxu0
    %v2573 = vadd.f32 %v2493, %v2572
    %v2574 = vpop.f32.mrb[0].mxu0
    %2575 = vdwg.mxu0
    %v2576 = vadd.f32 %v2368, %v2568
    %v2577 = vadd.f32 %v2369, %v2573
    %v2578 = vld [vmem:[%s26] sm:$0x1]
    %v2579 = vld [vmem:[%s27] sm:$0x1]
    %v2580 = vsel %vm246, %v2576, 0.0
    %2581 = vadd.xlane.f32.xlu0 %v2580
    %v2582 = vpop.xlane.xlu0 %2581
    %v2583 = vsel %vm246, %v2577, 0.0
    %2584 = vadd.xlane.f32.xlu0 %v2583
    %v2585 = vpop.xlane.xlu0 %2584
    %v2586 = vmul.f32 %v2582, %v253
    %v2587 = vmul.f32 %v2585, %v253
    %v2588 = vsub.f32 %v2576, %v2586
    %v2589 = vsub.f32 %v2577, %v2587
    %v2590 = vmul.f32 %v2588, %v2588
    %v2591 = vmul.f32 %v2589, %v2589
    %v2592 = vsel %vm246, %v2590, 0.0
    %2593 = vadd.xlane.f32.xlu0 %v2592
    %v2594 = vpop.xlane.xlu0 %2593
    %v2595 = vsel %vm246, %v2591, 0.0
    %2596 = vadd.xlane.f32.xlu0 %v2595
    %v2597 = vpop.xlane.xlu0 %2596
    %v2598 = vmul.f32 %v2594, %v253
    %v2599 = vmul.f32 %v2597, %v253
    %v2600 = vadd.f32 %v2598, 1e-12
    %v2601 = vadd.f32 %v2599, 1e-12
    %v2602 = vrsqrt.pop %v2600
    %v2603 = vrsqrt.pop %v2601
    %v2604 = vmul.f32 %v2588, %v2602
    %v2605 = vmul.f32 %v2589, %v2603
    %v2607 = vlaneseq
    %v2608 = vshrl.u32 %v2607, 7
    %v2609 = vsub.s32 0, %v2608
    %v2610 = vrot.slane %v2578, %v2609
    %v2612 = vmul.f32 %v2604, %v2610
    %v2613 = vmul.f32 %v2605, %v2610
    %v2615 = vlaneseq
    %v2616 = vshrl.u32 %v2615, 7
    %v2617 = vsub.s32 0, %v2616
    %v2618 = vrot.slane %v2579, %v2617
    %v2620 = vadd.f32 %v2612, %v2618
    %v2621 = vadd.f32 %v2613, %v2618
    %vm2622 = vcmask 253952
    %2623 = vst.msk [vmem:[#allocation24] sm:$0x1] %vm2622, %v2620
    %2624 = vst.msk [vmem:[#allocation24 + $0x1] sm:$0x1] %vm2622, %v2621
    // Predicated region
    $region166: #{tpu_custom_call.1} parent=1 // pred_check
      _
    $region167: #{tpu_custom_call.1} parent=1 // pred_check_branch
      %2626 = sbr.rel (0) target = $region169
    $region168: #{tpu_custom_call.1} parent=1 // pred_region
      %s2628 = ssub.s32 32, 32
      %2629 = vsyncadd [#allocation5], %s2628
      %s2631 = sshll.u32 [#allocation24], 4
      %s2632 = int_to_ptr.vmem [resolvable:$true] %s2631
      %2634 = dma.vmem_to_hbm [thread:$0]  %s2632, 32, %s28, [#allocation5]
    $region169: #{tpu_custom_call.1} parent=1 // pred_fallthru
      _
    // Predicated region
    $region170: #{tpu_custom_call.1} parent=1 // pred_check
      _
    $region171: #{tpu_custom_call.1} parent=1 // pred_check_branch
      %2636 = sbr.rel (0) target = $region173
    $region172: #{tpu_custom_call.1} parent=1 // pred_region
      %2637 = dma.done [#allocation5], 32
    $region173: #{tpu_custom_call.1} parent=1 // pred_fallthru
      _
    %2638 = vsyncpa [#allocation4], 1
    %2639 = vsyncpa [#allocation7], 1
    %2640 = vsyncpa [#allocation10], 1
    %2641 = vsyncpa [#allocation13], 1
    %2642 = vsyncpa [#allocation16], 1
    %2643 = vsyncpa [#allocation19], 1
    %2644 = vsyncpa [#allocation22], 1
    %2645 = vsyncpa [#allocation5], 1

</llo_original>
